<compile_context>
chip_gen: v5e
topology: v5e:2x2
jax: 0.10.0
libtpu: 0.0.40
codegen_flags: <defaults>
</compile_context>

<pallas_src>
import functools

import jax
import jax.numpy as jnp
from jax import lax
from jax.experimental import pallas as pl
from jax.experimental.pallas import tpu as pltpu

# ---- small BERT-like config (synthetic) ----
VOCAB = 100
HIDDEN = 256                  # lane-aligned
N_LAYERS = 2
N_HEADS = 2
HEAD_DIM = HIDDEN // N_HEADS  # 128 -> lane-aligned head slices
INTERMEDIATE = 512
MAX_POS = 32
NUM_LABELS = 5
HEADS_PAD = 128               # fused task-head output width (lane-dense)
LN_EPS = 1e-12


def _layernorm(x, g, b):
    mu = jnp.mean(x, axis=-1, keepdims=True)
    var = jnp.mean((x - mu) ** 2, axis=-1, keepdims=True)
    return (x - mu) * lax.rsqrt(var + LN_EPS) * g + b


# ---------------------------------------------------------------------------
# Fused kernel: embeddings + LayerNorm + all encoder layers + pooler + task heads
# grid = (N_LAYERS,) "arbitrary"; residual state kept in VMEM scratch across layers.
#   heads slab columns: [0:5]=sentiment logits, 5=paraphrase, 6=similarity, 7=polar
# ---------------------------------------------------------------------------
def fused_model_kernel(we_ref, pe_ref, te_ref, eg_ref, eb_ref, bias_ref,
                       wp_ref, bp_ref, wh_ref, bh_ref,
                       wqkv_ref, bqkv_ref, wo_ref, bo_ref,
                       ln1g_ref, ln1b_ref, wi_ref, bi_ref, wf_ref, bf_ref,
                       ln2g_ref, ln2b_ref,
                       hid_ref, pooled_ref, heads_ref, sentprob_ref,
                       x_state,
                       *, batch, seq, n_heads, head_dim):
    layer = pl.program_id(0)
    n_layers = pl.num_programs(0)
    hidden = n_heads * head_dim

    # --- layer 0: embedding sum (word + position + token-type-0) + LayerNorm ---
    @pl.when(layer == 0)
    def _init():
        we = we_ref[...].astype(jnp.float32)                       # (B*S, H)
        pe = pe_ref[...].astype(jnp.float32)                       # (S, H)
        emb = we + jnp.tile(pe, (batch, 1)) + te_ref[...].astype(jnp.float32)
        x_state[...] = _layernorm(emb, eg_ref[...], eb_ref[...])

    x = x_state[...]                                               # (B*S, H) f32 residual
    xb = x.astype(jnp.bfloat16)

    # Fused QKV projection: one (BS, H) x (H, 3H) bf16 matmul, f32 accumulation.
    qkv = jnp.dot(xb, wqkv_ref[0],
                  preferred_element_type=jnp.float32) + bqkv_ref[0]   # (BS, 3H) f32
    qkv = qkv.astype(jnp.bfloat16)                                 # cast once, stays bf16

    bias = bias_ref[...]                                           # (BS, BS) additive bias
    scale = 1.0 / (head_dim ** 0.5)

    # Block-diagonal (segment-masked) attention over the flattened batch.
    ctx_heads = []
    for h in range(n_heads):                                       # tiny static loop
        q_h = qkv[:, h * head_dim:(h + 1) * head_dim]
        k_h = qkv[:, hidden + h * head_dim:hidden + (h + 1) * head_dim]
        v_h = qkv[:, 2 * hidden + h * head_dim:2 * hidden + (h + 1) * head_dim]
        # Q @ K^T without materializing a transpose: contract head_dim directly.
        s = lax.dot_general(q_h, k_h, (((1,), (1,)), ((), ())),
                            preferred_element_type=jnp.float32) * scale + bias
        s = s - jnp.max(s, axis=-1, keepdims=True)
        p = jnp.exp(s)
        p = p * pl.reciprocal(jnp.sum(p, axis=-1, keepdims=True), approx=True)
        ctx_h = jnp.dot(p.astype(jnp.bfloat16), v_h,
                        preferred_element_type=jnp.float32)        # (BS, head_dim)
        ctx_heads.append(ctx_h.astype(jnp.bfloat16))
    # 128-lane-aligned head slices -> layout-free concatenate, then ONE Wo matmul.
    ctx = jnp.concatenate(ctx_heads, axis=-1)                      # (BS, H) bf16
    attn_out = jnp.dot(ctx, wo_ref[0],
                       preferred_element_type=jnp.float32) + bo_ref[0]

    h1 = _layernorm(x + attn_out, ln1g_ref[0], ln1b_ref[0])

    inter = jnp.dot(h1.astype(jnp.bfloat16), wi_ref[0],
                    preferred_element_type=jnp.float32) + bi_ref[0]
    # TODO(synk): BERT uses exact erf-GELU; tanh-approx GELU used for robust lowering.
    inter = jax.nn.gelu(inter, approximate=True)
    ffn = jnp.dot(inter.astype(jnp.bfloat16), wf_ref[0],
                  preferred_element_type=jnp.float32) + bf_ref[0]

    new_x = _layernorm(h1 + ffn, ln2g_ref[0], ln2b_ref[0])
    x_state[...] = new_x

    # --- last layer: write hidden state + pooler + fused task heads (lane-dense) ---
    @pl.when(layer == n_layers - 1)
    def _finish():
        hid_ref[...] = new_x.astype(hid_ref.dtype)

        xnb = new_x.astype(jnp.bfloat16)                           # (BS, H)
        pooled = jnp.tanh(jnp.dot(xnb, wp_ref[...],
                                  preferred_element_type=jnp.float32) + bp_ref[...])
        pooled_ref[...] = pooled.astype(pooled_ref.dtype)

        heads = jnp.dot(pooled.astype(jnp.bfloat16), wh_ref[...],
                        preferred_element_type=jnp.float32) + bh_ref[...]  # (BS, 128)
        heads_ref[...] = heads.astype(heads_ref.dtype)

        # Sentiment softmax over the first NUM_LABELS lanes of the padded slab.
        lane = lax.broadcasted_iota(jnp.int32, heads.shape, 1)
        sm = jnp.where(lane < NUM_LABELS, heads, -1e30)
        sm = sm - jnp.max(sm, axis=-1, keepdims=True)
        e = jnp.exp(sm)
        probs = e * pl.reciprocal(jnp.sum(e, axis=-1, keepdims=True), approx=True)
        sentprob_ref[...] = probs.astype(sentprob_ref.dtype)


# ---------------------------------------------------------------------------
# pallas_call wrapper
# ---------------------------------------------------------------------------
def fused_model(we_flat, pos_emb, bias_full, params, B, S):
    BS = B * S
    stk = params['stacked']

    def const_spec(shape):
        nd = len(shape)
        return pl.BlockSpec(shape, lambda l, _nd=nd: (0,) * _nd)

    def layer_spec(shape):
        nd = len(shape)
        return pl.BlockSpec((1,) + shape, lambda l, _nd=nd: (l,) + (0,) * _nd)

    kern = functools.partial(fused_model_kernel, batch=B, seq=S,
                             n_heads=N_HEADS, head_dim=HEAD_DIM)

    in_specs = [
        const_spec((BS, HIDDEN)),                        # word embeddings (flattened)
        const_spec((S, HIDDEN)),                         # position embeddings
        const_spec((1, HIDDEN)),                         # token-type-0 embedding
        const_spec((1, HIDDEN)), const_spec((1, HIDDEN)),            # embedding LN g, b
        const_spec((BS, BS)),                            # combined additive attn bias
        const_spec((HIDDEN, HIDDEN)), const_spec((1, HIDDEN)),       # pooler W, b
        const_spec((HIDDEN, HEADS_PAD)), const_spec((1, HEADS_PAD)), # fused heads W, b
        layer_spec((HIDDEN, 3 * HIDDEN)), layer_spec((1, 3 * HIDDEN)),  # Wqkv, bqkv
        layer_spec((HIDDEN, HIDDEN)), layer_spec((1, HIDDEN)),          # Wo, bo
        layer_spec((1, HIDDEN)), layer_spec((1, HIDDEN)),               # LN1 g, b
        layer_spec((HIDDEN, INTERMEDIATE)), layer_spec((1, INTERMEDIATE)),  # Wi, bi
        layer_spec((INTERMEDIATE, HIDDEN)), layer_spec((1, HIDDEN)),        # Wf, bf
        layer_spec((1, HIDDEN)), layer_spec((1, HIDDEN)),               # LN2 g, b
    ]

    out_specs = [
        pl.BlockSpec((BS, HIDDEN), lambda l: (0, 0)),      # last hidden (flattened)
        pl.BlockSpec((BS, HIDDEN), lambda l: (0, 0)),      # pooler output (all rows)
        pl.BlockSpec((BS, HEADS_PAD), lambda l: (0, 0)),   # fused head logits (all rows)
        pl.BlockSpec((BS, HEADS_PAD), lambda l: (0, 0)),   # sentiment probs (all rows)
    ]
    out_shape = [
        jax.ShapeDtypeStruct((BS, HIDDEN), jnp.float32),
        jax.ShapeDtypeStruct((BS, HIDDEN), jnp.float32),
        jax.ShapeDtypeStruct((BS, HEADS_PAD), jnp.float32),
        jax.ShapeDtypeStruct((BS, HEADS_PAD), jnp.float32),
    ]

    return pl.pallas_call(
        kern,
        grid=(N_LAYERS,),
        in_specs=in_specs,
        out_specs=out_specs,
        out_shape=out_shape,
        scratch_shapes=[pltpu.VMEM((BS, HIDDEN), jnp.float32)],   # residual state
        compiler_params=pltpu.CompilerParams(
            dimension_semantics=("arbitrary",),                   # layer axis is sequential
            vmem_limit_bytes=32 * 1024 * 1024),
    )(we_flat, pos_emb, params['tok_emb'], params['emb_ln_g'], params['emb_ln_b'],
      bias_full,
      params['pooler_w'], params['pooler_b'], params['heads_w'], params['heads_b'],
      stk['wqkv'], stk['bqkv'], stk['wo'], stk['bo'],
      stk['ln1g'], stk['ln1b'], stk['wi'], stk['bi'], stk['wf'], stk['bf'],
      stk['ln2g'], stk['ln2b'])


# ---------------------------------------------------------------------------
# deterministic synthetic parameters (shapes mirror MultitaskBERT.__init__)
# ---------------------------------------------------------------------------
def init_params(key):
    keys = iter(jax.random.split(key, 64))

    def nrm(shape):
        return jax.random.normal(next(keys), shape, jnp.float32) * 0.02

    p = {
        'word_emb': nrm((VOCAB, HIDDEN)),
        'pos_emb': nrm((MAX_POS, HIDDEN)),
        'tok_emb': nrm((1, HIDDEN)),                     # token-type-0 embedding row
        'emb_ln_g': jnp.ones((1, HIDDEN), jnp.float32),
        'emb_ln_b': jnp.zeros((1, HIDDEN), jnp.float32),
        'pooler_w': nrm((HIDDEN, HIDDEN)).astype(jnp.bfloat16),
        'pooler_b': jnp.zeros((1, HIDDEN), jnp.float32),
    }

    # Task heads fused into one lane-padded (H, 128) matrix:
    #   cols 0:5 sentiment_layer, 5 paraphrase_layer, 6 similarity_layer, 7 polar_sentiment_layer
    sent_w = nrm((HIDDEN, NUM_LABELS))
    para_w = nrm((HIDDEN, 1))
    sim_w = nrm((HIDDEN, 1))
    polar_w = nrm((HIDDEN, 1))
    heads_w = jnp.zeros((HIDDEN, HEADS_PAD), jnp.float32)
    heads_w = heads_w.at[:, 0:NUM_LABELS].set(sent_w)
    heads_w = heads_w.at[:, NUM_LABELS:NUM_LABELS + 1].set(para_w)
    heads_w = heads_w.at[:, NUM_LABELS + 1:NUM_LABELS + 2].set(sim_w)
    heads_w = heads_w.at[:, NUM_LABELS + 2:NUM_LABELS + 3].set(polar_w)
    p['heads_w'] = heads_w.astype(jnp.bfloat16)
    p['heads_b'] = jnp.zeros((1, HEADS_PAD), jnp.float32)

    def stack_nrm(shape, dtype):
        return jnp.stack([nrm(shape) for _ in range(N_LAYERS)], 0).astype(dtype)

    def stack_ones(shape):
        return jnp.ones((N_LAYERS,) + shape, jnp.float32)

    def stack_zeros(shape):
        return jnp.zeros((N_LAYERS,) + shape, jnp.float32)

    p['stacked'] = dict(
        wqkv=stack_nrm((HIDDEN, 3 * HIDDEN), jnp.bfloat16),          # fused Wq|Wk|Wv
        bqkv=stack_zeros((1, 3 * HIDDEN)),
        wo=stack_nrm((HIDDEN, HIDDEN), jnp.bfloat16), bo=stack_zeros((1, HIDDEN)),
        ln1g=stack_ones((1, HIDDEN)), ln1b=stack_zeros((1, HIDDEN)),
        wi=stack_nrm((HIDDEN, INTERMEDIATE), jnp.bfloat16),
        bi=stack_zeros((1, INTERMEDIATE)),
        wf=stack_nrm((INTERMEDIATE, HIDDEN), jnp.bfloat16),
        bf=stack_zeros((1, HIDDEN)),
        ln2g=stack_ones((1, HIDDEN)), ln2b=stack_zeros((1, HIDDEN)),
    )
    return p


# ---------------------------------------------------------------------------
# MultitaskBERT forward (+ eval-mode task heads)
# ---------------------------------------------------------------------------
def multitask_bert_forward(params, input_ids, attention_mask):
    """Returns (pooler_output, last_hidden_state, sentiment_probs,
    paraphrase_logit, similarity_logit, polar_sentiment_logit)."""
    B, S = input_ids.shape
    BS = B * S
    # glue: data-dependent embedding gather + tiny bias construction stay in plain JAX
    we_flat = params['word_emb'][input_ids].reshape(BS, HIDDEN)
    pos_emb = params['pos_emb'][:S]                                      # (S, H)

    # Combined additive attention bias for block-diagonal attention over the
    # flattened batch: per-key padding (-10000) within an example, -1e9 across examples.
    key_bias = ((1.0 - attention_mask.astype(jnp.float32)) * -10000.0).reshape(BS)
    seg = jnp.repeat(jnp.arange(B), S)
    same = seg[:, None] == seg[None, :]
    bias_full = jnp.where(same, key_bias[None, :], jnp.float32(-1e9))    # (BS, BS)

    hid, pooled_all, heads_all, sent_all = fused_model(
        we_flat, pos_emb, bias_full, params, B, S)

    last_hidden_state = hid.reshape(B, S, HIDDEN)
    # CLS-row selection (glue) — kernel computed pooler/heads for all rows (one MXU tile).
    pooled = pooled_all.reshape(B, S, HIDDEN)[:, 0, :]
    heads_cls = heads_all.reshape(B, S, HEADS_PAD)[:, 0, :]
    sent_cls = sent_all.reshape(B, S, HEADS_PAD)[:, 0, :]

    sent = sent_cls[:, :NUM_LABELS]                       # softmax'd sentiment probs
    para = heads_cls[:, NUM_LABELS:NUM_LABELS + 1]        # paraphrase logit
    sim = heads_cls[:, NUM_LABELS + 1:NUM_LABELS + 2]     # similarity logit
    polar = heads_cls[:, NUM_LABELS + 2:NUM_LABELS + 3]   # polar sentiment logit
    return pooled, last_hidden_state, sent, para, sim, polar


if __name__ == "__main__":
    key = jax.random.PRNGKey(0)
    pkey, ikey = jax.random.split(key)
    params = init_params(pkey)

    B, S = 2, 16
    input_ids = jax.random.randint(ikey, (B, S), 0, VOCAB)
    attention_mask = jnp.ones((B, S), jnp.float32).at[1, 12:].set(0.0)  # pad tail of ex 1

    fwd = jax.jit(multitask_bert_forward)
    outs = jax.block_until_ready(fwd(params, input_ids, attention_mask))
    pooled, last_hidden, sent, para, sim, polar = outs

    assert pooled.shape == (B, HIDDEN)
    assert last_hidden.shape == (B, S, HIDDEN)
    assert sent.shape == (B, NUM_LABELS)
    assert para.shape == (B, 1) and sim.shape == (B, 1) and polar.shape == (B, 1)
    assert bool(jnp.all(jnp.isfinite(pooled))) and bool(jnp.all(jnp.isfinite(sent)))
    assert bool(jnp.all(jnp.isfinite(last_hidden)))
    print("KERNEL_OK")
</pallas_src>

<mosaic_0001>
module attributes {stable_mosaic.version = 11 : i64} {
  func.func @fused_model_kernel(%arg0: i32, %arg1: memref<32x256xf32, #tpu.memory_space<vmem>>, %arg2: memref<16x256xf32, #tpu.memory_space<vmem>>, %arg3: memref<1x256xf32, #tpu.memory_space<vmem>>, %arg4: memref<1x256xf32, #tpu.memory_space<vmem>>, %arg5: memref<1x256xf32, #tpu.memory_space<vmem>>, %arg6: memref<32x32xf32, #tpu.memory_space<vmem>>, %arg7: memref<256x256xbf16, #tpu.memory_space<vmem>>, %arg8: memref<1x256xf32, #tpu.memory_space<vmem>>, %arg9: memref<256x128xbf16, #tpu.memory_space<vmem>>, %arg10: memref<1x128xf32, #tpu.memory_space<vmem>>, %arg11: memref<1x256x768xbf16, #tpu.memory_space<vmem>>, %arg12: memref<1x1x768xf32, #tpu.memory_space<vmem>>, %arg13: memref<1x256x256xbf16, #tpu.memory_space<vmem>>, %arg14: memref<1x1x256xf32, #tpu.memory_space<vmem>>, %arg15: memref<1x1x256xf32, #tpu.memory_space<vmem>>, %arg16: memref<1x1x256xf32, #tpu.memory_space<vmem>>, %arg17: memref<1x256x512xbf16, #tpu.memory_space<vmem>>, %arg18: memref<1x1x512xf32, #tpu.memory_space<vmem>>, %arg19: memref<1x512x256xbf16, #tpu.memory_space<vmem>>, %arg20: memref<1x1x256xf32, #tpu.memory_space<vmem>>, %arg21: memref<1x1x256xf32, #tpu.memory_space<vmem>>, %arg22: memref<1x1x256xf32, #tpu.memory_space<vmem>>, %arg23: memref<32x256xf32, #tpu.memory_space<vmem>>, %arg24: memref<32x256xf32, #tpu.memory_space<vmem>>, %arg25: memref<32x128xf32, #tpu.memory_space<vmem>>, %arg26: memref<32x128xf32, #tpu.memory_space<vmem>>, %arg27: memref<32x256xf32, #tpu.memory_space<vmem>>) attributes {dimension_semantics = [#tpu.dimension_semantics<arbitrary>], iteration_bounds = array<i64: 2>, scalar_prefetch = 0 : i64, scratch_operands = 1 : i64, tpu.core_type = #tpu.core_type<tc>, window_params = [{pipeline_mode = #tpu.pipeline_mode<synchronous>, transform_indices = @transform_0, window_bounds = array<i64: 32, 256>}, {pipeline_mode = #tpu.pipeline_mode<synchronous>, transform_indices = @transform_1, window_bounds = array<i64: 16, 256>}, {pipeline_mode = #tpu.pipeline_mode<synchronous>, transform_indices = @transform_2, window_bounds = array<i64: 1, 256>}, {pipeline_mode = #tpu.pipeline_mode<synchronous>, transform_indices = @transform_3, window_bounds = array<i64: 1, 256>}, {pipeline_mode = #tpu.pipeline_mode<synchronous>, transform_indices = @transform_4, window_bounds = array<i64: 1, 256>}, {pipeline_mode = #tpu.pipeline_mode<synchronous>, transform_indices = @transform_5, window_bounds = array<i64: 32, 32>}, {pipeline_mode = #tpu.pipeline_mode<synchronous>, transform_indices = @transform_6, window_bounds = array<i64: 256, 256>}, {pipeline_mode = #tpu.pipeline_mode<synchronous>, transform_indices = @transform_7, window_bounds = array<i64: 1, 256>}, {pipeline_mode = #tpu.pipeline_mode<synchronous>, transform_indices = @transform_8, window_bounds = array<i64: 256, 128>}, {pipeline_mode = #tpu.pipeline_mode<synchronous>, transform_indices = @transform_9, window_bounds = array<i64: 1, 128>}, {transform_indices = @transform_10, window_bounds = array<i64: 1, 256, 768>}, {transform_indices = @transform_11, window_bounds = array<i64: 1, 1, 768>}, {transform_indices = @transform_12, window_bounds = array<i64: 1, 256, 256>}, {transform_indices = @transform_13, window_bounds = array<i64: 1, 1, 256>}, {transform_indices = @transform_14, window_bounds = array<i64: 1, 1, 256>}, {transform_indices = @transform_15, window_bounds = array<i64: 1, 1, 256>}, {transform_indices = @transform_16, window_bounds = array<i64: 1, 256, 512>}, {transform_indices = @transform_17, window_bounds = array<i64: 1, 1, 512>}, {transform_indices = @transform_18, window_bounds = array<i64: 1, 512, 256>}, {transform_indices = @transform_19, window_bounds = array<i64: 1, 1, 256>}, {transform_indices = @transform_20, window_bounds = array<i64: 1, 1, 256>}, {transform_indices = @transform_21, window_bounds = array<i64: 1, 1, 256>}, {pipeline_mode = #tpu.pipeline_mode<synchronous>, transform_indices = @transform_22, window_bounds = array<i64: 32, 256>}, {pipeline_mode = #tpu.pipeline_mode<synchronous>, transform_indices = @transform_23, window_bounds = array<i64: 32, 256>}, {pipeline_mode = #tpu.pipeline_mode<synchronous>, transform_indices = @transform_24, window_bounds = array<i64: 32, 128>}, {pipeline_mode = #tpu.pipeline_mode<synchronous>, transform_indices = @transform_25, window_bounds = array<i64: 32, 128>}]} {
    %c0_i32 = arith.constant 0 : i32
    %0 = arith.cmpi eq, %arg0, %c0_i32 : i32
    %1 = arith.extui %0 : i1 to i32
    %c0_i32_0 = arith.constant 0 : i32
    %2 = arith.cmpi ne, %1, %c0_i32_0 : i32
    scf.if %2 {
      %c0_70 = arith.constant 0 : index
      %c0_71 = arith.constant 0 : index
      %149 = vector.load %arg1[%c0_70, %c0_71] : memref<32x256xf32, #tpu.memory_space<vmem>>, vector<32x256xf32>
      %c0_72 = arith.constant 0 : index
      %c0_73 = arith.constant 0 : index
      %150 = vector.load %arg2[%c0_72, %c0_73] : memref<16x256xf32, #tpu.memory_space<vmem>>, vector<16x256xf32>
      %151 = tpu.concatenate %150, %150 in 0 : vector<16x256xf32>, vector<16x256xf32> -> vector<32x256xf32>
      %152 = arith.addf %149, %151 : vector<32x256xf32>
      %c0_74 = arith.constant 0 : index
      %c0_75 = arith.constant 0 : index
      %153 = vector.load %arg3[%c0_74, %c0_75] : memref<1x256xf32, #tpu.memory_space<vmem>>, vector<1x256xf32>
      %154 = vector.broadcast %153 : vector<1x256xf32> to vector<32x256xf32>
      %155 = arith.addf %152, %154 : vector<32x256xf32>
      %c0_76 = arith.constant 0 : index
      %c0_77 = arith.constant 0 : index
      %156 = vector.load %arg4[%c0_76, %c0_77] : memref<1x256xf32, #tpu.memory_space<vmem>>, vector<1x256xf32>
      %c0_78 = arith.constant 0 : index
      %c0_79 = arith.constant 0 : index
      %157 = vector.load %arg5[%c0_78, %c0_79] : memref<1x256xf32, #tpu.memory_space<vmem>>, vector<1x256xf32>
      %cst_80 = arith.constant dense<0.000000e+00> : vector<32xf32>
      %158 = vector.multi_reduction <add>, %155, %cst_80 [1] : vector<32x256xf32> to vector<32xf32>
      %159 = vector.shape_cast %158 : vector<32xf32> to vector<32x1xf32>
      %cst_81 = arith.constant 2.560000e+02 : f32
      %160 = vector.broadcast %cst_81 : f32 to vector<32x1xf32>
      %161 = arith.divf %159, %160 : vector<32x1xf32>
      %162 = vector.broadcast %161 : vector<32x1xf32> to vector<32x256xf32>
      %163 = arith.subf %155, %162 : vector<32x256xf32>
      %164 = arith.mulf %163, %163 : vector<32x256xf32>
      %cst_82 = arith.constant dense<0.000000e+00> : vector<32xf32>
      %165 = vector.multi_reduction <add>, %164, %cst_82 [1] : vector<32x256xf32> to vector<32xf32>
      %166 = vector.shape_cast %165 : vector<32xf32> to vector<32x1xf32>
      %cst_83 = arith.constant 2.560000e+02 : f32
      %167 = vector.broadcast %cst_83 : f32 to vector<32x1xf32>
      %168 = arith.divf %166, %167 : vector<32x1xf32>
      %169 = vector.broadcast %161 : vector<32x1xf32> to vector<32x256xf32>
      %170 = arith.subf %155, %169 : vector<32x256xf32>
      %cst_84 = arith.constant 9.99999996E-13 : f32
      %171 = vector.broadcast %cst_84 : f32 to vector<32x1xf32>
      %172 = arith.addf %168, %171 : vector<32x1xf32>
      %173 = math.rsqrt %172 : vector<32x1xf32>
      %174 = vector.broadcast %173 : vector<32x1xf32> to vector<32x256xf32>
      %175 = arith.mulf %170, %174 : vector<32x256xf32>
      %176 = vector.broadcast %156 : vector<1x256xf32> to vector<32x256xf32>
      %177 = arith.mulf %175, %176 : vector<32x256xf32>
      %178 = vector.broadcast %157 : vector<1x256xf32> to vector<32x256xf32>
      %179 = arith.addf %177, %178 : vector<32x256xf32>
      %c0_85 = arith.constant 0 : index
      %c0_86 = arith.constant 0 : index
      %180 = vector.load %arg27[%c0_85, %c0_86] : memref<32x256xf32, #tpu.memory_space<vmem>>, vector<32x256xf32>
      tpu.vector_store %arg27[%c0_85, %c0_86], %179 {strides = array<i32>} : memref<32x256xf32, #tpu.memory_space<vmem>>, vector<32x256xf32>,
    } else {
    }
    %c0 = arith.constant 0 : index
    %c0_1 = arith.constant 0 : index
    %3 = vector.load %arg27[%c0, %c0_1] : memref<32x256xf32, #tpu.memory_space<vmem>>, vector<32x256xf32>
    %4 = arith.truncf %3 : vector<32x256xf32> to vector<32x256xbf16>
    %c0_2 = arith.constant 0 : index
    %c0_3 = arith.constant 0 : index
    %c0_4 = arith.constant 0 : index
    %5 = vector.load %arg11[%c0_2, %c0_3, %c0_4] : memref<1x256x768xbf16, #tpu.memory_space<vmem>>, vector<1x256x768xbf16>
    %6 = vector.shape_cast %5 : vector<1x256x768xbf16> to vector<256x768xbf16>
    %cst = arith.constant dense<0.000000e+00> : vector<32x768xf32>
    %7 = tpu.matmul %4, %6, %cst {dimension_numbers = #tpu.dot_dimension_numbers<[1], [0], [0], [1], [0, 0, 1, 1], [], []>} : vector<32x256xbf16>, vector<256x768xbf16>, vector<32x768xf32> -> vector<32x768xf32>
    %c0_5 = arith.constant 0 : index
    %c0_6 = arith.constant 0 : index
    %c0_7 = arith.constant 0 : index
    %8 = vector.load %arg12[%c0_5, %c0_6, %c0_7] : memref<1x1x768xf32, #tpu.memory_space<vmem>>, vector<1x1x768xf32>
    %9 = vector.shape_cast %8 : vector<1x1x768xf32> to vector<1x768xf32>
    %10 = vector.broadcast %9 : vector<1x768xf32> to vector<32x768xf32>
    %11 = arith.addf %7, %10 : vector<32x768xf32>
    %12 = arith.truncf %11 : vector<32x768xf32> to vector<32x768xbf16>
    %c0_8 = arith.constant 0 : index
    %c0_9 = arith.constant 0 : index
    %13 = vector.load %arg6[%c0_8, %c0_9] : memref<32x32xf32, #tpu.memory_space<vmem>>, vector<32x32xf32>
    %14 = vector.extract_strided_slice %12 {offsets = [0, 0], sizes = [32, 128], strides = [1, 1]} : vector<32x768xbf16> to vector<32x128xbf16>
    %15 = vector.extract_strided_slice %12 {offsets = [0, 256], sizes = [32, 128], strides = [1, 1]} : vector<32x768xbf16> to vector<32x128xbf16>
    %16 = vector.extract_strided_slice %12 {offsets = [0, 512], sizes = [32, 128], strides = [1, 1]} : vector<32x768xbf16> to vector<32x128xbf16>
    %cst_10 = arith.constant dense<0.000000e+00> : vector<32x32xf32>
    %17 = tpu.matmul %14, %15, %cst_10 {dimension_numbers = #tpu.dot_dimension_numbers<[1], [1], [0], [0], [0, 0, 1, 0], [], []>} : vector<32x128xbf16>, vector<32x128xbf16>, vector<32x32xf32> -> vector<32x32xf32>
    %cst_11 = arith.constant 0.0883883461 : f32
    %18 = vector.broadcast %cst_11 : f32 to vector<32x32xf32>
    %19 = arith.mulf %17, %18 : vector<32x32xf32>
    %20 = arith.addf %19, %13 : vector<32x32xf32>
    %cst_12 = arith.constant dense<0xFF800000> : vector<32xf32>
    %21 = vector.multi_reduction <maximumf>, %20, %cst_12 [1] : vector<32x32xf32> to vector<32xf32>
    %22 = vector.shape_cast %21 : vector<32xf32> to vector<32x1xf32>
    %23 = vector.broadcast %22 : vector<32x1xf32> to vector<32x32xf32>
    %24 = arith.subf %20, %23 : vector<32x32xf32>
    %25 = math.exp %24 : vector<32x32xf32>
    %cst_13 = arith.constant dense<0.000000e+00> : vector<32xf32>
    %26 = vector.multi_reduction <add>, %25, %cst_13 [1] : vector<32x32xf32> to vector<32xf32>
    %27 = vector.shape_cast %26 : vector<32xf32> to vector<32x1xf32>
    %28 = tpu.reciprocal %27 {approx = true} : vector<32x1xf32> -> vector<32x1xf32>
    %29 = vector.broadcast %28 : vector<32x1xf32> to vector<32x32xf32>
    %30 = arith.mulf %25, %29 : vector<32x32xf32>
    %31 = arith.truncf %30 : vector<32x32xf32> to vector<32x32xbf16>
    %cst_14 = arith.constant dense<0.000000e+00> : vector<32x128xf32>
    %32 = tpu.matmul %31, %16, %cst_14 {dimension_numbers = #tpu.dot_dimension_numbers<[1], [0], [0], [1], [0, 0, 1, 1], [], []>} : vector<32x32xbf16>, vector<32x128xbf16>, vector<32x128xf32> -> vector<32x128xf32>
    %33 = arith.truncf %32 : vector<32x128xf32> to vector<32x128xbf16>
    %34 = vector.extract_strided_slice %12 {offsets = [0, 128], sizes = [32, 128], strides = [1, 1]} : vector<32x768xbf16> to vector<32x128xbf16>
    %35 = vector.extract_strided_slice %12 {offsets = [0, 384], sizes = [32, 128], strides = [1, 1]} : vector<32x768xbf16> to vector<32x128xbf16>
    %36 = vector.extract_strided_slice %12 {offsets = [0, 640], sizes = [32, 128], strides = [1, 1]} : vector<32x768xbf16> to vector<32x128xbf16>
    %cst_15 = arith.constant dense<0.000000e+00> : vector<32x32xf32>
    %37 = tpu.matmul %34, %35, %cst_15 {dimension_numbers = #tpu.dot_dimension_numbers<[1], [1], [0], [0], [0, 0, 1, 0], [], []>} : vector<32x128xbf16>, vector<32x128xbf16>, vector<32x32xf32> -> vector<32x32xf32>
    %cst_16 = arith.constant 0.0883883461 : f32
    %38 = vector.broadcast %cst_16 : f32 to vector<32x32xf32>
    %39 = arith.mulf %37, %38 : vector<32x32xf32>
    %40 = arith.addf %39, %13 : vector<32x32xf32>
    %cst_17 = arith.constant dense<0xFF800000> : vector<32xf32>
    %41 = vector.multi_reduction <maximumf>, %40, %cst_17 [1] : vector<32x32xf32> to vector<32xf32>
    %42 = vector.shape_cast %41 : vector<32xf32> to vector<32x1xf32>
    %43 = vector.broadcast %42 : vector<32x1xf32> to vector<32x32xf32>
    %44 = arith.subf %40, %43 : vector<32x32xf32>
    %45 = math.exp %44 : vector<32x32xf32>
    %cst_18 = arith.constant dense<0.000000e+00> : vector<32xf32>
    %46 = vector.multi_reduction <add>, %45, %cst_18 [1] : vector<32x32xf32> to vector<32xf32>
    %47 = vector.shape_cast %46 : vector<32xf32> to vector<32x1xf32>
    %48 = tpu.reciprocal %47 {approx = true} : vector<32x1xf32> -> vector<32x1xf32>
    %49 = vector.broadcast %48 : vector<32x1xf32> to vector<32x32xf32>
    %50 = arith.mulf %45, %49 : vector<32x32xf32>
    %51 = arith.truncf %50 : vector<32x32xf32> to vector<32x32xbf16>
    %cst_19 = arith.constant dense<0.000000e+00> : vector<32x128xf32>
    %52 = tpu.matmul %51, %36, %cst_19 {dimension_numbers = #tpu.dot_dimension_numbers<[1], [0], [0], [1], [0, 0, 1, 1], [], []>} : vector<32x32xbf16>, vector<32x128xbf16>, vector<32x128xf32> -> vector<32x128xf32>
    %53 = arith.truncf %52 : vector<32x128xf32> to vector<32x128xbf16>
    %54 = tpu.concatenate %33, %53 in 1 : vector<32x128xbf16>, vector<32x128xbf16> -> vector<32x256xbf16>
    %c0_20 = arith.constant 0 : index
    %c0_21 = arith.constant 0 : index
    %c0_22 = arith.constant 0 : index
    %55 = vector.load %arg13[%c0_20, %c0_21, %c0_22] : memref<1x256x256xbf16, #tpu.memory_space<vmem>>, vector<1x256x256xbf16>
    %56 = vector.shape_cast %55 : vector<1x256x256xbf16> to vector<256x256xbf16>
    %cst_23 = arith.constant dense<0.000000e+00> : vector<32x256xf32>
    %57 = tpu.matmul %54, %56, %cst_23 {dimension_numbers = #tpu.dot_dimension_numbers<[1], [0], [0], [1], [0, 0, 1, 1], [], []>} : vector<32x256xbf16>, vector<256x256xbf16>, vector<32x256xf32> -> vector<32x256xf32>
    %c0_24 = arith.constant 0 : index
    %c0_25 = arith.constant 0 : index
    %c0_26 = arith.constant 0 : index
    %58 = vector.load %arg14[%c0_24, %c0_25, %c0_26] : memref<1x1x256xf32, #tpu.memory_space<vmem>>, vector<1x1x256xf32>
    %59 = vector.shape_cast %58 : vector<1x1x256xf32> to vector<1x256xf32>
    %60 = vector.broadcast %59 : vector<1x256xf32> to vector<32x256xf32>
    %61 = arith.addf %57, %60 : vector<32x256xf32>
    %62 = arith.addf %3, %61 : vector<32x256xf32>
    %c0_27 = arith.constant 0 : index
    %c0_28 = arith.constant 0 : index
    %c0_29 = arith.constant 0 : index
    %63 = vector.load %arg15[%c0_27, %c0_28, %c0_29] : memref<1x1x256xf32, #tpu.memory_space<vmem>>, vector<1x1x256xf32>
    %64 = vector.shape_cast %63 : vector<1x1x256xf32> to vector<1x256xf32>
    %c0_30 = arith.constant 0 : index
    %c0_31 = arith.constant 0 : index
    %c0_32 = arith.constant 0 : index
    %65 = vector.load %arg16[%c0_30, %c0_31, %c0_32] : memref<1x1x256xf32, #tpu.memory_space<vmem>>, vector<1x1x256xf32>
    %66 = vector.shape_cast %65 : vector<1x1x256xf32> to vector<1x256xf32>
    %cst_33 = arith.constant dense<0.000000e+00> : vector<32xf32>
    %67 = vector.multi_reduction <add>, %62, %cst_33 [1] : vector<32x256xf32> to vector<32xf32>
    %68 = vector.shape_cast %67 : vector<32xf32> to vector<32x1xf32>
    %cst_34 = arith.constant 2.560000e+02 : f32
    %69 = vector.broadcast %cst_34 : f32 to vector<32x1xf32>
    %70 = arith.divf %68, %69 : vector<32x1xf32>
    %71 = vector.broadcast %70 : vector<32x1xf32> to vector<32x256xf32>
    %72 = arith.subf %62, %71 : vector<32x256xf32>
    %73 = arith.mulf %72, %72 : vector<32x256xf32>
    %cst_35 = arith.constant dense<0.000000e+00> : vector<32xf32>
    %74 = vector.multi_reduction <add>, %73, %cst_35 [1] : vector<32x256xf32> to vector<32xf32>
    %75 = vector.shape_cast %74 : vector<32xf32> to vector<32x1xf32>
    %cst_36 = arith.constant 2.560000e+02 : f32
    %76 = vector.broadcast %cst_36 : f32 to vector<32x1xf32>
    %77 = arith.divf %75, %76 : vector<32x1xf32>
    %78 = vector.broadcast %70 : vector<32x1xf32> to vector<32x256xf32>
    %79 = arith.subf %62, %78 : vector<32x256xf32>
    %cst_37 = arith.constant 9.99999996E-13 : f32
    %80 = vector.broadcast %cst_37 : f32 to vector<32x1xf32>
    %81 = arith.addf %77, %80 : vector<32x1xf32>
    %82 = math.rsqrt %81 : vector<32x1xf32>
    %83 = vector.broadcast %82 : vector<32x1xf32> to vector<32x256xf32>
    %84 = arith.mulf %79, %83 : vector<32x256xf32>
    %85 = vector.broadcast %64 : vector<1x256xf32> to vector<32x256xf32>
    %86 = arith.mulf %84, %85 : vector<32x256xf32>
    %87 = vector.broadcast %66 : vector<1x256xf32> to vector<32x256xf32>
    %88 = arith.addf %86, %87 : vector<32x256xf32>
    %89 = arith.truncf %88 : vector<32x256xf32> to vector<32x256xbf16>
    %c0_38 = arith.constant 0 : index
    %c0_39 = arith.constant 0 : index
    %c0_40 = arith.constant 0 : index
    %90 = vector.load %arg17[%c0_38, %c0_39, %c0_40] : memref<1x256x512xbf16, #tpu.memory_space<vmem>>, vector<1x256x512xbf16>
    %91 = vector.shape_cast %90 : vector<1x256x512xbf16> to vector<256x512xbf16>
    %cst_41 = arith.constant dense<0.000000e+00> : vector<32x512xf32>
    %92 = tpu.matmul %89, %91, %cst_41 {dimension_numbers = #tpu.dot_dimension_numbers<[1], [0], [0], [1], [0, 0, 1, 1], [], []>} : vector<32x256xbf16>, vector<256x512xbf16>, vector<32x512xf32> -> vector<32x512xf32>
    %c0_42 = arith.constant 0 : index
    %c0_43 = arith.constant 0 : index
    %c0_44 = arith.constant 0 : index
    %93 = vector.load %arg18[%c0_42, %c0_43, %c0_44] : memref<1x1x512xf32, #tpu.memory_space<vmem>>, vector<1x1x512xf32>
    %94 = vector.shape_cast %93 : vector<1x1x512xf32> to vector<1x512xf32>
    %95 = vector.broadcast %94 : vector<1x512xf32> to vector<32x512xf32>
    %96 = arith.addf %92, %95 : vector<32x512xf32>
    %97 = arith.mulf %96, %96 : vector<32x512xf32>
    %98 = arith.mulf %96, %97 : vector<32x512xf32>
    %cst_45 = arith.constant 4.471500e-02 : f32
    %99 = vector.broadcast %cst_45 : f32 to vector<32x512xf32>
    %100 = arith.mulf %99, %98 : vector<32x512xf32>
    %101 = arith.addf %96, %100 : vector<32x512xf32>
    %cst_46 = arith.constant 0.797884583 : f32
    %102 = vector.broadcast %cst_46 : f32 to vector<32x512xf32>
    %103 = arith.mulf %102, %101 : vector<32x512xf32>
    %104 = math.tanh %103 : vector<32x512xf32>
    %cst_47 = arith.constant 1.000000e+00 : f32
    %105 = vector.broadcast %cst_47 : f32 to vector<32x512xf32>
    %106 = arith.addf %105, %104 : vector<32x512xf32>
    %cst_48 = arith.constant 5.000000e-01 : f32
    %107 = vector.broadcast %cst_48 : f32 to vector<32x512xf32>
    %108 = arith.mulf %107, %106 : vector<32x512xf32>
    %109 = arith.mulf %96, %108 : vector<32x512xf32>
    %110 = arith.truncf %109 : vector<32x512xf32> to vector<32x512xbf16>
    %c0_49 = arith.constant 0 : index
    %c0_50 = arith.constant 0 : index
    %c0_51 = arith.constant 0 : index
    %111 = vector.load %arg19[%c0_49, %c0_50, %c0_51] : memref<1x512x256xbf16, #tpu.memory_space<vmem>>, vector<1x512x256xbf16>
    %112 = vector.shape_cast %111 : vector<1x512x256xbf16> to vector<512x256xbf16>
    %cst_52 = arith.constant dense<0.000000e+00> : vector<32x256xf32>
    %113 = tpu.matmul %110, %112, %cst_52 {dimension_numbers = #tpu.dot_dimension_numbers<[1], [0], [0], [1], [0, 0, 1, 1], [], []>} : vector<32x512xbf16>, vector<512x256xbf16>, vector<32x256xf32> -> vector<32x256xf32>
    %c0_53 = arith.constant 0 : index
    %c0_54 = arith.constant 0 : index
    %c0_55 = arith.constant 0 : index
    %114 = vector.load %arg20[%c0_53, %c0_54, %c0_55] : memref<1x1x256xf32, #tpu.memory_space<vmem>>, vector<1x1x256xf32>
    %115 = vector.shape_cast %114 : vector<1x1x256xf32> to vector<1x256xf32>
    %116 = vector.broadcast %115 : vector<1x256xf32> to vector<32x256xf32>
    %117 = arith.addf %113, %116 : vector<32x256xf32>
    %118 = arith.addf %88, %117 : vector<32x256xf32>
    %c0_56 = arith.constant 0 : index
    %c0_57 = arith.constant 0 : index
    %c0_58 = arith.constant 0 : index
    %119 = vector.load %arg21[%c0_56, %c0_57, %c0_58] : memref<1x1x256xf32, #tpu.memory_space<vmem>>, vector<1x1x256xf32>
    %120 = vector.shape_cast %119 : vector<1x1x256xf32> to vector<1x256xf32>
    %c0_59 = arith.constant 0 : index
    %c0_60 = arith.constant 0 : index
    %c0_61 = arith.constant 0 : index
    %121 = vector.load %arg22[%c0_59, %c0_60, %c0_61] : memref<1x1x256xf32, #tpu.memory_space<vmem>>, vector<1x1x256xf32>
    %122 = vector.shape_cast %121 : vector<1x1x256xf32> to vector<1x256xf32>
    %cst_62 = arith.constant dense<0.000000e+00> : vector<32xf32>
    %123 = vector.multi_reduction <add>, %118, %cst_62 [1] : vector<32x256xf32> to vector<32xf32>
    %124 = vector.shape_cast %123 : vector<32xf32> to vector<32x1xf32>
    %cst_63 = arith.constant 2.560000e+02 : f32
    %125 = vector.broadcast %cst_63 : f32 to vector<32x1xf32>
    %126 = arith.divf %124, %125 : vector<32x1xf32>
    %127 = vector.broadcast %126 : vector<32x1xf32> to vector<32x256xf32>
    %128 = arith.subf %118, %127 : vector<32x256xf32>
    %129 = arith.mulf %128, %128 : vector<32x256xf32>
    %cst_64 = arith.constant dense<0.000000e+00> : vector<32xf32>
    %130 = vector.multi_reduction <add>, %129, %cst_64 [1] : vector<32x256xf32> to vector<32xf32>
    %131 = vector.shape_cast %130 : vector<32xf32> to vector<32x1xf32>
    %cst_65 = arith.constant 2.560000e+02 : f32
    %132 = vector.broadcast %cst_65 : f32 to vector<32x1xf32>
    %133 = arith.divf %131, %132 : vector<32x1xf32>
    %134 = vector.broadcast %126 : vector<32x1xf32> to vector<32x256xf32>
    %135 = arith.subf %118, %134 : vector<32x256xf32>
    %cst_66 = arith.constant 9.99999996E-13 : f32
    %136 = vector.broadcast %cst_66 : f32 to vector<32x1xf32>
    %137 = arith.addf %133, %136 : vector<32x1xf32>
    %138 = math.rsqrt %137 : vector<32x1xf32>
    %139 = vector.broadcast %138 : vector<32x1xf32> to vector<32x256xf32>
    %140 = arith.mulf %135, %139 : vector<32x256xf32>
    %141 = vector.broadcast %120 : vector<1x256xf32> to vector<32x256xf32>
    %142 = arith.mulf %140, %141 : vector<32x256xf32>
    %143 = vector.broadcast %122 : vector<1x256xf32> to vector<32x256xf32>
    %144 = arith.addf %142, %143 : vector<32x256xf32>
    %c0_67 = arith.constant 0 : index
    %c0_68 = arith.constant 0 : index
    %145 = vector.load %arg27[%c0_67, %c0_68] : memref<32x256xf32, #tpu.memory_space<vmem>>, vector<32x256xf32>
    tpu.vector_store %arg27[%c0_67, %c0_68], %144 {strides = array<i32>} : memref<32x256xf32, #tpu.memory_space<vmem>>, vector<32x256xf32>,
    %c1_i32 = arith.constant 1 : i32
    %146 = arith.cmpi eq, %arg0, %c1_i32 : i32
    %147 = arith.extui %146 : i1 to i32
    %c0_i32_69 = arith.constant 0 : i32
    %148 = arith.cmpi ne, %147, %c0_i32_69 : i32
    scf.if %148 {
      %c0_70 = arith.constant 0 : index
      %c0_71 = arith.constant 0 : index
      %149 = vector.load %arg23[%c0_70, %c0_71] : memref<32x256xf32, #tpu.memory_space<vmem>>, vector<32x256xf32>
      tpu.vector_store %arg23[%c0_70, %c0_71], %144 {strides = array<i32>} : memref<32x256xf32, #tpu.memory_space<vmem>>, vector<32x256xf32>,
      %150 = arith.truncf %144 : vector<32x256xf32> to vector<32x256xbf16>
      %c0_72 = arith.constant 0 : index
      %c0_73 = arith.constant 0 : index
      %151 = vector.load %arg7[%c0_72, %c0_73] : memref<256x256xbf16, #tpu.memory_space<vmem>>, vector<256x256xbf16>
      %cst_74 = arith.constant dense<0.000000e+00> : vector<32x256xf32>
      %152 = tpu.matmul %150, %151, %cst_74 {dimension_numbers = #tpu.dot_dimension_numbers<[1], [0], [0], [1], [0, 0, 1, 1], [], []>} : vector<32x256xbf16>, vector<256x256xbf16>, vector<32x256xf32> -> vector<32x256xf32>
      %c0_75 = arith.constant 0 : index
      %c0_76 = arith.constant 0 : index
      %153 = vector.load %arg8[%c0_75, %c0_76] : memref<1x256xf32, #tpu.memory_space<vmem>>, vector<1x256xf32>
      %154 = vector.broadcast %153 : vector<1x256xf32> to vector<32x256xf32>
      %155 = arith.addf %152, %154 : vector<32x256xf32>
      %156 = math.tanh %155 : vector<32x256xf32>
      %c0_77 = arith.constant 0 : index
      %c0_78 = arith.constant 0 : index
      %157 = vector.load %arg24[%c0_77, %c0_78] : memref<32x256xf32, #tpu.memory_space<vmem>>, vector<32x256xf32>
      tpu.vector_store %arg24[%c0_77, %c0_78], %156 {strides = array<i32>} : memref<32x256xf32, #tpu.memory_space<vmem>>, vector<32x256xf32>,
      %158 = arith.truncf %156 : vector<32x256xf32> to vector<32x256xbf16>
      %c0_79 = arith.constant 0 : index
      %c0_80 = arith.constant 0 : index
      %159 = vector.load %arg9[%c0_79, %c0_80] : memref<256x128xbf16, #tpu.memory_space<vmem>>, vector<256x128xbf16>
      %cst_81 = arith.constant dense<0.000000e+00> : vector<32x128xf32>
      %160 = tpu.matmul %158, %159, %cst_81 {dimension_numbers = #tpu.dot_dimension_numbers<[1], [0], [0], [1], [0, 0, 1, 1], [], []>} : vector<32x256xbf16>, vector<256x128xbf16>, vector<32x128xf32> -> vector<32x128xf32>
      %c0_82 = arith.constant 0 : index
      %c0_83 = arith.constant 0 : index
      %161 = vector.load %arg10[%c0_82, %c0_83] : memref<1x128xf32, #tpu.memory_space<vmem>>, vector<1x128xf32>
      %162 = vector.broadcast %161 : vector<1x128xf32> to vector<32x128xf32>
      %163 = arith.addf %160, %162 : vector<32x128xf32>
      %c0_84 = arith.constant 0 : index
      %c0_85 = arith.constant 0 : index
      %164 = vector.load %arg25[%c0_84, %c0_85] : memref<32x128xf32, #tpu.memory_space<vmem>>, vector<32x128xf32>
      tpu.vector_store %arg25[%c0_84, %c0_85], %163 {strides = array<i32>} : memref<32x128xf32, #tpu.memory_space<vmem>>, vector<32x128xf32>,
      %165 = tpu.iota {dimensions = array<i32: 1>} : vector<32x128xi32>
      %c5_i32 = arith.constant 5 : i32
      %166 = vector.broadcast %c5_i32 : i32 to vector<32x128xi32>
      %167 = arith.cmpi slt, %165, %166 : vector<32x128xi32>
      %cst_86 = arith.constant -1.000000e+30 : f32
      %168 = vector.broadcast %cst_86 : f32 to vector<32x128xf32>
      %169 = arith.select %167, %163, %168 : vector<32x128xi1>, vector<32x128xf32>
      %cst_87 = arith.constant dense<0xFF800000> : vector<32xf32>
      %170 = vector.multi_reduction <maximumf>, %169, %cst_87 [1] : vector<32x128xf32> to vector<32xf32>
      %171 = vector.shape_cast %170 : vector<32xf32> to vector<32x1xf32>
      %172 = vector.broadcast %171 : vector<32x1xf32> to vector<32x128xf32>
      %173 = arith.subf %169, %172 : vector<32x128xf32>
      %174 = math.exp %173 : vector<32x128xf32>
      %cst_88 = arith.constant dense<0.000000e+00> : vector<32xf32>
      %175 = vector.multi_reduction <add>, %174, %cst_88 [1] : vector<32x128xf32> to vector<32xf32>
      %176 = vector.shape_cast %175 : vector<32xf32> to vector<32x1xf32>
      %177 = tpu.reciprocal %176 {approx = true} : vector<32x1xf32> -> vector<32x1xf32>
      %178 = vector.broadcast %177 : vector<32x1xf32> to vector<32x128xf32>
      %179 = arith.mulf %174, %178 : vector<32x128xf32>
      %c0_89 = arith.constant 0 : index
      %c0_90 = arith.constant 0 : index
      %180 = vector.load %arg26[%c0_89, %c0_90] : memref<32x128xf32, #tpu.memory_space<vmem>>, vector<32x128xf32>
      tpu.vector_store %arg26[%c0_89, %c0_90], %179 {strides = array<i32>} : memref<32x128xf32, #tpu.memory_space<vmem>>, vector<32x128xf32>,
    } else {
    }
    return
  }
  func.func @transform_0(%arg0: i32) -> (i32, i32) {
    %c0_i32 = arith.constant 0 : i32
    %c0_i32_0 = arith.constant 0 : i32
    %c0_i32_1 = arith.constant 0 : i32
    return %c0_i32, %c0_i32_0 : i32, i32
  }
  func.func @transform_1(%arg0: i32) -> (i32, i32) {
    %c0_i32 = arith.constant 0 : i32
    %c0_i32_0 = arith.constant 0 : i32
    %c0_i32_1 = arith.constant 0 : i32
    return %c0_i32, %c0_i32_0 : i32, i32
  }
  func.func @transform_2(%arg0: i32) -> (i32, i32) {
    %c0_i32 = arith.constant 0 : i32
    %c0_i32_0 = arith.constant 0 : i32
    %c0_i32_1 = arith.constant 0 : i32
    return %c0_i32, %c0_i32_0 : i32, i32
  }
  func.func @transform_3(%arg0: i32) -> (i32, i32) {
    %c0_i32 = arith.constant 0 : i32
    %c0_i32_0 = arith.constant 0 : i32
    %c0_i32_1 = arith.constant 0 : i32
    return %c0_i32, %c0_i32_0 : i32, i32
  }
  func.func @transform_4(%arg0: i32) -> (i32, i32) {
    %c0_i32 = arith.constant 0 : i32
    %c0_i32_0 = arith.constant 0 : i32
    %c0_i32_1 = arith.constant 0 : i32
    return %c0_i32, %c0_i32_0 : i32, i32
  }
  func.func @transform_5(%arg0: i32) -> (i32, i32) {
    %c0_i32 = arith.constant 0 : i32
    %c0_i32_0 = arith.constant 0 : i32
    %c0_i32_1 = arith.constant 0 : i32
    return %c0_i32, %c0_i32_0 : i32, i32
  }
  func.func @transform_6(%arg0: i32) -> (i32, i32) {
    %c0_i32 = arith.constant 0 : i32
    %c0_i32_0 = arith.constant 0 : i32
    %c0_i32_1 = arith.constant 0 : i32
    return %c0_i32, %c0_i32_0 : i32, i32
  }
  func.func @transform_7(%arg0: i32) -> (i32, i32) {
    %c0_i32 = arith.constant 0 : i32
    %c0_i32_0 = arith.constant 0 : i32
    %c0_i32_1 = arith.constant 0 : i32
    return %c0_i32, %c0_i32_0 : i32, i32
  }
  func.func @transform_8(%arg0: i32) -> (i32, i32) {
    %c0_i32 = arith.constant 0 : i32
    %c0_i32_0 = arith.constant 0 : i32
    %c0_i32_1 = arith.constant 0 : i32
    return %c0_i32, %c0_i32_0 : i32, i32
  }
  func.func @transform_9(%arg0: i32) -> (i32, i32) {
    %c0_i32 = arith.constant 0 : i32
    %c0_i32_0 = arith.constant 0 : i32
    %c0_i32_1 = arith.constant 0 : i32
    return %c0_i32, %c0_i32_0 : i32, i32
  }
  func.func @transform_10(%arg0: i32) -> (i32, i32, i32) {
    %c0_i32 = arith.constant 0 : i32
    %c0_i32_0 = arith.constant 0 : i32
    %c0_i32_1 = arith.constant 0 : i32
    return %arg0, %c0_i32, %c0_i32_0 : i32, i32, i32
  }
  func.func @transform_11(%arg0: i32) -> (i32, i32, i32) {
    %c0_i32 = arith.constant 0 : i32
    %c0_i32_0 = arith.constant 0 : i32
    %c0_i32_1 = arith.constant 0 : i32
    return %arg0, %c0_i32, %c0_i32_0 : i32, i32, i32
  }
  func.func @transform_12(%arg0: i32) -> (i32, i32, i32) {
    %c0_i32 = arith.constant 0 : i32
    %c0_i32_0 = arith.constant 0 : i32
    %c0_i32_1 = arith.constant 0 : i32
    return %arg0, %c0_i32, %c0_i32_0 : i32, i32, i32
  }
  func.func @transform_13(%arg0: i32) -> (i32, i32, i32) {
    %c0_i32 = arith.constant 0 : i32
    %c0_i32_0 = arith.constant 0 : i32
    %c0_i32_1 = arith.constant 0 : i32
    return %arg0, %c0_i32, %c0_i32_0 : i32, i32, i32
  }
  func.func @transform_14(%arg0: i32) -> (i32, i32, i32) {
    %c0_i32 = arith.constant 0 : i32
    %c0_i32_0 = arith.constant 0 : i32
    %c0_i32_1 = arith.constant 0 : i32
    return %arg0, %c0_i32, %c0_i32_0 : i32, i32, i32
  }
  func.func @transform_15(%arg0: i32) -> (i32, i32, i32) {
    %c0_i32 = arith.constant 0 : i32
    %c0_i32_0 = arith.constant 0 : i32
    %c0_i32_1 = arith.constant 0 : i32
    return %arg0, %c0_i32, %c0_i32_0 : i32, i32, i32
  }
  func.func @transform_16(%arg0: i32) -> (i32, i32, i32) {
    %c0_i32 = arith.constant 0 : i32
    %c0_i32_0 = arith.constant 0 : i32
    %c0_i32_1 = arith.constant 0 : i32
    return %arg0, %c0_i32, %c0_i32_0 : i32, i32, i32
  }
  func.func @transform_17(%arg0: i32) -> (i32, i32, i32) {
    %c0_i32 = arith.constant 0 : i32
    %c0_i32_0 = arith.constant 0 : i32
    %c0_i32_1 = arith.constant 0 : i32
    return %arg0, %c0_i32, %c0_i32_0 : i32, i32, i32
  }
  func.func @transform_18(%arg0: i32) -> (i32, i32, i32) {
    %c0_i32 = arith.constant 0 : i32
    %c0_i32_0 = arith.constant 0 : i32
    %c0_i32_1 = arith.constant 0 : i32
    return %arg0, %c0_i32, %c0_i32_0 : i32, i32, i32
  }
  func.func @transform_19(%arg0: i32) -> (i32, i32, i32) {
    %c0_i32 = arith.constant 0 : i32
    %c0_i32_0 = arith.constant 0 : i32
    %c0_i32_1 = arith.constant 0 : i32
    return %arg0, %c0_i32, %c0_i32_0 : i32, i32, i32
  }
  func.func @transform_20(%arg0: i32) -> (i32, i32, i32) {
    %c0_i32 = arith.constant 0 : i32
    %c0_i32_0 = arith.constant 0 : i32
    %c0_i32_1 = arith.constant 0 : i32
    return %arg0, %c0_i32, %c0_i32_0 : i32, i32, i32
  }
  func.func @transform_21(%arg0: i32) -> (i32, i32, i32) {
    %c0_i32 = arith.constant 0 : i32
    %c0_i32_0 = arith.constant 0 : i32
    %c0_i32_1 = arith.constant 0 : i32
    return %arg0, %c0_i32, %c0_i32_0 : i32, i32, i32
  }
  func.func @transform_22(%arg0: i32) -> (i32, i32) {
    %c0_i32 = arith.constant 0 : i32
    %c0_i32_0 = arith.constant 0 : i32
    %c0_i32_1 = arith.constant 0 : i32
    return %c0_i32, %c0_i32_0 : i32, i32
  }
  func.func @transform_23(%arg0: i32) -> (i32, i32) {
    %c0_i32 = arith.constant 0 : i32
    %c0_i32_0 = arith.constant 0 : i32
    %c0_i32_1 = arith.constant 0 : i32
    return %c0_i32, %c0_i32_0 : i32, i32
  }
  func.func @transform_24(%arg0: i32) -> (i32, i32) {
    %c0_i32 = arith.constant 0 : i32
    %c0_i32_0 = arith.constant 0 : i32
    %c0_i32_1 = arith.constant 0 : i32
    return %c0_i32, %c0_i32_0 : i32, i32
  }
  func.func @transform_25(%arg0: i32) -> (i32, i32) {
    %c0_i32 = arith.constant 0 : i32
    %c0_i32_0 = arith.constant 0 : i32
    %c0_i32_1 = arith.constant 0 : i32
    return %c0_i32, %c0_i32_0 : i32, i32
  }
}

</mosaic_0001>

<llo_original>
// kernel: multitask_bert_forward.1
$region0: #{multitask_bert_forward.1}
  #allocation0 [shape = 'u32[]', space=smem, size = 0x4, offset = 0x4, fixed_abs, tag = 'smem constant byte address 0x4 - core index']
  #allocation1 [shape = 'u32[72,128]{1,0:T(1,128)}', space=vmem, size = 0x9000, scoped, tag = 'internal scratch']
  #allocation2 [shape = 'f32[32,256]{1,0:T(8,128)}', space=vmem, size = 0x8000, scoped, tag = 'scratch operand']
  %s0 = inlined_call_operand.vmem [shape: f32[32,256], index: 0, kind: input, shape index: {}]
  %s1 = inlined_call_operand.vmem [shape: f32[16,256], index: 1, kind: input, shape index: {}]
  %s2 = inlined_call_operand.vmem [shape: f32[1,256], index: 2, kind: input, shape index: {}]
  %s3 = inlined_call_operand.hbm [shape: f32[1,256], index: 3, kind: input, shape index: {}]
  %s4 = inlined_call_operand.hbm [shape: f32[1,256], index: 4, kind: input, shape index: {}]
  %s5 = inlined_call_operand.vmem [shape: f32[32,32], index: 5, kind: input, shape index: {}]
  %s6 = inlined_call_operand.hbm [shape: bf16[256,256], index: 6, kind: input, shape index: {}]
  %s7 = inlined_call_operand.hbm [shape: f32[1,256], index: 7, kind: input, shape index: {}]
  %s8 = inlined_call_operand.vmem [shape: bf16[256,128], index: 8, kind: input, shape index: {}]
  %s9 = inlined_call_operand.vmem [shape: f32[1,128], index: 9, kind: input, shape index: {}]
  %s10 = inlined_call_operand.hbm [shape: bf16[2,256,768], index: 10, kind: input, shape index: {}]
  %s11 = inlined_call_operand.vmem [shape: f32[2,1,768], index: 11, kind: input, shape index: {}]
  %s12 = inlined_call_operand.vmem [shape: bf16[2,256,256], index: 12, kind: input, shape index: {}]
  %s13 = inlined_call_operand.vmem [shape: f32[2,1,256], index: 13, kind: input, shape index: {}]
  %s14 = inlined_call_operand.vmem [shape: f32[2,1,256], index: 14, kind: input, shape index: {}]
  %s15 = inlined_call_operand.vmem [shape: f32[2,1,256], index: 15, kind: input, shape index: {}]
  %s16 = inlined_call_operand.hbm [shape: bf16[2,256,512], index: 16, kind: input, shape index: {}]
  %s17 = inlined_call_operand.vmem [shape: f32[2,1,512], index: 17, kind: input, shape index: {}]
  %s18 = inlined_call_operand.hbm [shape: bf16[2,512,256], index: 18, kind: input, shape index: {}]
  %s19 = inlined_call_operand.hbm [shape: f32[2,1,256], index: 19, kind: input, shape index: {}]
  %s20 = inlined_call_operand.hbm [shape: f32[2,1,256], index: 20, kind: input, shape index: {}]
  %s21 = inlined_call_operand.hbm [shape: f32[2,1,256], index: 21, kind: input, shape index: {}]
  %s22 = inlined_call_operand.hbm [shape: f32[32,256], index: 22, kind: output, shape index: {0}]
  %s23 = inlined_call_operand.vmem [shape: f32[32,256], index: 23, kind: output, shape index: {1}]
  %s24 = inlined_call_operand.vmem [shape: f32[32,128], index: 24, kind: output, shape index: {2}]
  %s25 = inlined_call_operand.vmem [shape: f32[32,128], index: 25, kind: output, shape index: {3}]
  %26 = xla_tuple %s22, %s23, %s24, %s25
  %s27 = sld [smem:[#allocation0]]
  $region193: #{multitask_bert_forward.1} parent=0
    _
  %s29 = ssub.s32 1, %s27
  %s30 = scalar_select 0, %s29, %s27
  $region1: #{multitask_bert_forward.1} parent=0
    #allocation3 [shape = 'u8[1024]{0}', space=vmem, size = 0x400, scoped, tag = 'input window, operand 3, single buffered']
    #allocation4 [shape = 's32[2]{0}', space=sflag, size = 0x8, scoped, tag = 'scoped memory for multitask_bert_forward.1']
    #allocation5 [shape = 's32[2]{0}', space=sflag, size = 0x8, scoped, tag = 'scoped memory for multitask_bert_forward.1']
    #allocation6 [shape = 'u8[1024]{0}', space=vmem, size = 0x400, scoped, tag = 'input window, operand 4, single buffered']
    #allocation7 [shape = 's32[1]{0}', space=sflag, size = 0x4, scoped, tag = 'scoped memory for multitask_bert_forward.1']
    #allocation8 [shape = 'u8[131072]{0}', space=vmem, size = 0x20000, scoped, tag = 'input window, operand 6, single buffered']
    #allocation9 [shape = 'u8[1024]{0}', space=vmem, size = 0x400, scoped, tag = 'input window, operand 7, single buffered']
    #allocation10 [shape = 's32[1]{0}', space=sflag, size = 0x4, scoped, tag = 'scoped memory for multitask_bert_forward.1']
    #allocation11 [shape = 'u8[786432]{0}', space=vmem, size = 0xc0000, scoped, tag = 'input window, operand 10']
    #allocation12 [shape = 'u8[524288]{0}', space=vmem, size = 0x80000, scoped, tag = 'input window, operand 16']
    #allocation13 [shape = 'u8[524288]{0}', space=vmem, size = 0x80000, scoped, tag = 'input window, operand 18']
    #allocation14 [shape = 'u8[2048]{0}', space=vmem, size = 0x800, scoped, tag = 'input window, operand 19']
    #allocation15 [shape = 'u8[2048]{0}', space=vmem, size = 0x800, scoped, tag = 'input window, operand 20']
    #allocation16 [shape = 'u8[2048]{0}', space=vmem, size = 0x800, scoped, tag = 'input window, operand 21']
    #allocation17 [shape = 'u8[32768]{0}', space=vmem, size = 0x8000, scoped, tag = 'output window, operand 0, single buffered']
    %31 = vsyncpa [#allocation4], 0
    %32 = vsyncpa [#allocation7], 0
    %33 = vsyncpa [#allocation10], 0
    %34 = vsyncpa [#allocation5], 0
    loop: start=0, step=1, limit=4
    $region2: #{multitask_bert_forward.1} parent=1 // loop_pre_header
      _
    $region3: #{multitask_bert_forward.1} parent=1 // loop_header
      %s36 = sphi 0, %s40
      %p37 = scmp.ge.s32.totalorder %s36, 4
      %s44 = sphi 0, %s44
      %s46 = sphi 0, %s44
      %s47 = sphi 0, %s46
      %s61 = sphi 0, %s47
      %s65 = sphi 0, %s65
      %s67 = sphi 0, %s65
      %s68 = sphi 0, %s67
      %s82 = sphi 0, %s68
      %s86 = sphi 0, %s86
      %s88 = sphi 0, %s86
      %s89 = sphi 0, %s88
      %s103 = sphi 0, %s89
      %s107 = sphi 0, %s107
      %s109 = sphi 0, %s107
      %s110 = sphi 0, %s109
      %s124 = sphi 0, %s110
      %s128 = sphi 0, %s128
      %s130 = sphi 0, %s128
      %s131 = sphi 0, %s130
      %s145 = sphi 0, %s131
      %s149 = sphi 0, %s149
      %s151 = sphi 0, %s149
      %s152 = sphi 0, %s151
      %s166 = sphi 0, %s152
      %s170 = sphi 0, %s170
      %s172 = sphi 0, %s170
      %s173 = sphi 0, %s172
      %s187 = sphi 0, %s173
      %s191 = sphi 0, %s191
      %s193 = sphi 0, %s191
      %s194 = sphi 0, %s193
      %s208 = sphi 0, %s194
      %s212 = sphi 0, %s212
      %s214 = sphi 0, %s212
      %s215 = sphi 0, %s214
      %s229 = sphi 0, %s215
      %s233 = sphi 0, %s233
      %s235 = sphi 0, %s233
      %s236 = sphi 0, %s235
      %s250 = sphi 0, %s236
      %s256 = sphi 0, %s258
      %s259 = sphi 0, %s256
      %s260 = sphi 0, %s259
      %s276 = sphi 0, %s260
      %s282 = sphi 0, %s284
      %s285 = sphi 0, %s282
      %s286 = sphi 0, %s285
      %s302 = sphi 0, %s286
      %s308 = sphi 0, %s310
      %s311 = sphi 0, %s308
      %s312 = sphi 0, %s311
      %s328 = sphi 0, %s312
      %s334 = sphi 0, %s336
      %s337 = sphi 0, %s334
      %s338 = sphi 0, %s337
      %s354 = sphi 0, %s338
      %s360 = sphi 0, %s362
      %s363 = sphi 0, %s360
      %s364 = sphi 0, %s363
      %s380 = sphi 0, %s364
      %s386 = sphi 0, %s388
      %s389 = sphi 0, %s386
      %s390 = sphi 0, %s389
      %s406 = sphi 0, %s390
      %s412 = sphi 0, %s414
      %s415 = sphi 0, %s412
      %s416 = sphi 0, %s415
      %s432 = sphi 0, %s416
      %s438 = sphi 0, %s440
      %s441 = sphi 0, %s438
      %s442 = sphi 0, %s441
      %s458 = sphi 0, %s442
      %s464 = sphi 0, %s466
      %s467 = sphi 0, %s464
      %s468 = sphi 0, %s467
      %s484 = sphi 0, %s468
      %s490 = sphi 0, %s492
      %s493 = sphi 0, %s490
      %s494 = sphi 0, %s493
      %s510 = sphi 0, %s494
      %s516 = sphi 0, %s518
      %s519 = sphi 0, %s516
      %s520 = sphi 0, %s519
      %s536 = sphi 0, %s520
      %s542 = sphi 0, %s544
      %s545 = sphi 0, %s542
      %s546 = sphi 0, %s545
      %s562 = sphi 0, %s546
      %s566 = sphi 0, %s566
      %s568 = sphi 0, %s566
      %s569 = sphi 0, %s568
      %s583 = sphi 0, %s569
      %s587 = sphi 0, %s587
      %s589 = sphi 0, %s587
      %s590 = sphi 0, %s589
      %s604 = sphi 0, %s590
      %s608 = sphi 0, %s608
      %s610 = sphi 0, %s608
      %s611 = sphi 0, %s610
      %s625 = sphi 0, %s611
      %s629 = sphi 0, %s629
      %s631 = sphi 0, %s629
      %s632 = sphi 0, %s631
      %s646 = sphi 0, %s632
    $region4: #{multitask_bert_forward.1} parent=1 // loop_header_branch
      %39 = sbr.rel (%p37) target = $region8
    $region5: #{multitask_bert_forward.1} parent=1 // loop_body
      %s41 = ssub.s32 %s36, 1
      %s42 = ssub.s32 %s36, 2
      %s43 = sadd.s32 %s36, 1
      %s45 = sadd.s32 %s44, 1
      %p48 = scmp.eq.s32.totalorder %s36, 1
      %p49 = scmp.ne.s32.totalorder %s44, %s46
      %p50 = scmp.eq.s32.totalorder %s36, 0
      %p51 = por %p49, %p50
      %p52 = scmp.ne.s32.totalorder %s44, %s46
      %p53 = scmp.eq.s32.totalorder %s41, 1
      %p54 = por %p52, %p53
      %p55 = scmp.ne.s32.totalorder %s46, %s47
      %p56 = scmp.eq.s32.totalorder %s41, 0
      %p57 = por %p55, %p56
      %p58 = scmp.ne.s32.totalorder %s46, %s47
      %p59 = scmp.eq.s32.totalorder %s42, 1
      %p60 = por %p58, %p59
      %p62 = scmp.ne.s32.totalorder %s47, %s61
      %p63 = scmp.eq.s32.totalorder %s42, 0
      %p64 = por %p62, %p63
      %s66 = sadd.s32 %s65, 1
      %p69 = scmp.eq.s32.totalorder %s36, 1
      %p70 = scmp.ne.s32.totalorder %s65, %s67
      %p71 = scmp.eq.s32.totalorder %s36, 0
      %p72 = por %p70, %p71
      %p73 = scmp.ne.s32.totalorder %s65, %s67
      %p74 = scmp.eq.s32.totalorder %s41, 1
      %p75 = por %p73, %p74
      %p76 = scmp.ne.s32.totalorder %s67, %s68
      %p77 = scmp.eq.s32.totalorder %s41, 0
      %p78 = por %p76, %p77
      %p79 = scmp.ne.s32.totalorder %s67, %s68
      %p80 = scmp.eq.s32.totalorder %s42, 1
      %p81 = por %p79, %p80
      %p83 = scmp.ne.s32.totalorder %s68, %s82
      %p84 = scmp.eq.s32.totalorder %s42, 0
      %p85 = por %p83, %p84
      %s87 = sadd.s32 %s86, 1
      %p90 = scmp.eq.s32.totalorder %s36, 1
      %p91 = scmp.ne.s32.totalorder %s86, %s88
      %p92 = scmp.eq.s32.totalorder %s36, 0
      %p93 = por %p91, %p92
      %p94 = scmp.ne.s32.totalorder %s86, %s88
      %p95 = scmp.eq.s32.totalorder %s41, 1
      %p96 = por %p94, %p95
      %p97 = scmp.ne.s32.totalorder %s88, %s89
      %p98 = scmp.eq.s32.totalorder %s41, 0
      %p99 = por %p97, %p98
      %p100 = scmp.ne.s32.totalorder %s88, %s89
      %p101 = scmp.eq.s32.totalorder %s42, 1
      %p102 = por %p100, %p101
      %p104 = scmp.ne.s32.totalorder %s89, %s103
      %p105 = scmp.eq.s32.totalorder %s42, 0
      %p106 = por %p104, %p105
      %s108 = sadd.s32 %s107, 1
      %p111 = scmp.eq.s32.totalorder %s36, 1
      %p112 = scmp.ne.s32.totalorder %s107, %s109
      %p113 = scmp.eq.s32.totalorder %s36, 0
      %p114 = por %p112, %p113
      %p115 = scmp.ne.s32.totalorder %s107, %s109
      %p116 = scmp.eq.s32.totalorder %s41, 1
      %p117 = por %p115, %p116
      %p118 = scmp.ne.s32.totalorder %s109, %s110
      %p119 = scmp.eq.s32.totalorder %s41, 0
      %p120 = por %p118, %p119
      %p121 = scmp.ne.s32.totalorder %s109, %s110
      %p122 = scmp.eq.s32.totalorder %s42, 1
      %p123 = por %p121, %p122
      %p125 = scmp.ne.s32.totalorder %s110, %s124
      %p126 = scmp.eq.s32.totalorder %s42, 0
      %p127 = por %p125, %p126
      %s129 = sadd.s32 %s128, 1
      %p132 = scmp.eq.s32.totalorder %s36, 1
      %p133 = scmp.ne.s32.totalorder %s128, %s130
      %p134 = scmp.eq.s32.totalorder %s36, 0
      %p135 = por %p133, %p134
      %p136 = scmp.ne.s32.totalorder %s128, %s130
      %p137 = scmp.eq.s32.totalorder %s41, 1
      %p138 = por %p136, %p137
      %p139 = scmp.ne.s32.totalorder %s130, %s131
      %p140 = scmp.eq.s32.totalorder %s41, 0
      %p141 = por %p139, %p140
      %p142 = scmp.ne.s32.totalorder %s130, %s131
      %p143 = scmp.eq.s32.totalorder %s42, 1
      %p144 = por %p142, %p143
      %p146 = scmp.ne.s32.totalorder %s131, %s145
      %p147 = scmp.eq.s32.totalorder %s42, 0
      %p148 = por %p146, %p147
      %s150 = sadd.s32 %s149, 1
      %p153 = scmp.eq.s32.totalorder %s36, 1
      %p154 = scmp.ne.s32.totalorder %s149, %s151
      %p155 = scmp.eq.s32.totalorder %s36, 0
      %p156 = por %p154, %p155
      %p157 = scmp.ne.s32.totalorder %s149, %s151
      %p158 = scmp.eq.s32.totalorder %s41, 1
      %p159 = por %p157, %p158
      %p160 = scmp.ne.s32.totalorder %s151, %s152
      %p161 = scmp.eq.s32.totalorder %s41, 0
      %p162 = por %p160, %p161
      %p163 = scmp.ne.s32.totalorder %s151, %s152
      %p164 = scmp.eq.s32.totalorder %s42, 1
      %p165 = por %p163, %p164
      %p167 = scmp.ne.s32.totalorder %s152, %s166
      %p168 = scmp.eq.s32.totalorder %s42, 0
      %p169 = por %p167, %p168
      %s171 = sadd.s32 %s170, 1
      %p174 = scmp.eq.s32.totalorder %s36, 1
      %p175 = scmp.ne.s32.totalorder %s170, %s172
      %p176 = scmp.eq.s32.totalorder %s36, 0
      %p177 = por %p175, %p176
      %p178 = scmp.ne.s32.totalorder %s170, %s172
      %p179 = scmp.eq.s32.totalorder %s41, 1
      %p180 = por %p178, %p179
      %p181 = scmp.ne.s32.totalorder %s172, %s173
      %p182 = scmp.eq.s32.totalorder %s41, 0
      %p183 = por %p181, %p182
      %p184 = scmp.ne.s32.totalorder %s172, %s173
      %p185 = scmp.eq.s32.totalorder %s42, 1
      %p186 = por %p184, %p185
      %p188 = scmp.ne.s32.totalorder %s173, %s187
      %p189 = scmp.eq.s32.totalorder %s42, 0
      %p190 = por %p188, %p189
      %s192 = sadd.s32 %s191, 1
      %p195 = scmp.eq.s32.totalorder %s36, 1
      %p196 = scmp.ne.s32.totalorder %s191, %s193
      %p197 = scmp.eq.s32.totalorder %s36, 0
      %p198 = por %p196, %p197
      %p199 = scmp.ne.s32.totalorder %s191, %s193
      %p200 = scmp.eq.s32.totalorder %s41, 1
      %p201 = por %p199, %p200
      %p202 = scmp.ne.s32.totalorder %s193, %s194
      %p203 = scmp.eq.s32.totalorder %s41, 0
      %p204 = por %p202, %p203
      %p205 = scmp.ne.s32.totalorder %s193, %s194
      %p206 = scmp.eq.s32.totalorder %s42, 1
      %p207 = por %p205, %p206
      %p209 = scmp.ne.s32.totalorder %s194, %s208
      %p210 = scmp.eq.s32.totalorder %s42, 0
      %p211 = por %p209, %p210
      %s213 = sadd.s32 %s212, 1
      %p216 = scmp.eq.s32.totalorder %s36, 1
      %p217 = scmp.ne.s32.totalorder %s212, %s214
      %p218 = scmp.eq.s32.totalorder %s36, 0
      %p219 = por %p217, %p218
      %p220 = scmp.ne.s32.totalorder %s212, %s214
      %p221 = scmp.eq.s32.totalorder %s41, 1
      %p222 = por %p220, %p221
      %p223 = scmp.ne.s32.totalorder %s214, %s215
      %p224 = scmp.eq.s32.totalorder %s41, 0
      %p225 = por %p223, %p224
      %p226 = scmp.ne.s32.totalorder %s214, %s215
      %p227 = scmp.eq.s32.totalorder %s42, 1
      %p228 = por %p226, %p227
      %p230 = scmp.ne.s32.totalorder %s215, %s229
      %p231 = scmp.eq.s32.totalorder %s42, 0
      %p232 = por %p230, %p231
      %s234 = sadd.s32 %s233, 1
      %p237 = scmp.eq.s32.totalorder %s36, 1
      %p238 = scmp.ne.s32.totalorder %s233, %s235
      %p239 = scmp.eq.s32.totalorder %s36, 0
      %p240 = por %p238, %p239
      %p241 = scmp.ne.s32.totalorder %s233, %s235
      %p242 = scmp.eq.s32.totalorder %s41, 1
      %p243 = por %p241, %p242
      %p244 = scmp.ne.s32.totalorder %s235, %s236
      %p245 = scmp.eq.s32.totalorder %s41, 0
      %p246 = por %p244, %p245
      %p247 = scmp.ne.s32.totalorder %s235, %s236
      %p248 = scmp.eq.s32.totalorder %s42, 1
      %p249 = por %p247, %p248
      %p251 = scmp.ne.s32.totalorder %s236, %s250
      %p252 = scmp.eq.s32.totalorder %s42, 0
      %p253 = por %p251, %p252
      %s254 = ssub.s32 %s36, %s43
      %p255 = scmp.eq.s32.totalorder %s254, 0
      %s257 = sadd.s32 %s256, 1
      %s258 = scalar_select %p255, %s256, %s257
      %p261 = pneg %p255
      %p262 = scmp.eq.s32.totalorder %s36, 1
      %p263 = por %p261, %p262
      %p264 = scmp.ne.s32.totalorder %s256, %s259
      %p265 = scmp.eq.s32.totalorder %s36, 0
      %p266 = por %p264, %p265
      %p267 = scmp.ne.s32.totalorder %s256, %s259
      %p268 = scmp.eq.s32.totalorder %s41, 1
      %p269 = por %p267, %p268
      %p270 = scmp.ne.s32.totalorder %s259, %s260
      %p271 = scmp.eq.s32.totalorder %s41, 0
      %p272 = por %p270, %p271
      %p273 = scmp.ne.s32.totalorder %s259, %s260
      %p274 = scmp.eq.s32.totalorder %s42, 1
      %p275 = por %p273, %p274
      %p277 = scmp.ne.s32.totalorder %s260, %s276
      %p278 = scmp.eq.s32.totalorder %s42, 0
      %p279 = por %p277, %p278
      %s280 = ssub.s32 %s36, %s43
      %p281 = scmp.eq.s32.totalorder %s280, 0
      %s283 = sadd.s32 %s282, 1
      %s284 = scalar_select %p281, %s282, %s283
      %p287 = pneg %p281
      %p288 = scmp.eq.s32.totalorder %s36, 1
      %p289 = por %p287, %p288
      %p290 = scmp.ne.s32.totalorder %s282, %s285
      %p291 = scmp.eq.s32.totalorder %s36, 0
      %p292 = por %p290, %p291
      %p293 = scmp.ne.s32.totalorder %s282, %s285
      %p294 = scmp.eq.s32.totalorder %s41, 1
      %p295 = por %p293, %p294
      %p296 = scmp.ne.s32.totalorder %s285, %s286
      %p297 = scmp.eq.s32.totalorder %s41, 0
      %p298 = por %p296, %p297
      %p299 = scmp.ne.s32.totalorder %s285, %s286
      %p300 = scmp.eq.s32.totalorder %s42, 1
      %p301 = por %p299, %p300
      %p303 = scmp.ne.s32.totalorder %s286, %s302
      %p304 = scmp.eq.s32.totalorder %s42, 0
      %p305 = por %p303, %p304
      %s306 = ssub.s32 %s36, %s43
      %p307 = scmp.eq.s32.totalorder %s306, 0
      %s309 = sadd.s32 %s308, 1
      %s310 = scalar_select %p307, %s308, %s309
      %p313 = pneg %p307
      %p314 = scmp.eq.s32.totalorder %s36, 1
      %p315 = por %p313, %p314
      %p316 = scmp.ne.s32.totalorder %s308, %s311
      %p317 = scmp.eq.s32.totalorder %s36, 0
      %p318 = por %p316, %p317
      %p319 = scmp.ne.s32.totalorder %s308, %s311
      %p320 = scmp.eq.s32.totalorder %s41, 1
      %p321 = por %p319, %p320
      %p322 = scmp.ne.s32.totalorder %s311, %s312
      %p323 = scmp.eq.s32.totalorder %s41, 0
      %p324 = por %p322, %p323
      %p325 = scmp.ne.s32.totalorder %s311, %s312
      %p326 = scmp.eq.s32.totalorder %s42, 1
      %p327 = por %p325, %p326
      %p329 = scmp.ne.s32.totalorder %s312, %s328
      %p330 = scmp.eq.s32.totalorder %s42, 0
      %p331 = por %p329, %p330
      %s332 = ssub.s32 %s36, %s43
      %p333 = scmp.eq.s32.totalorder %s332, 0
      %s335 = sadd.s32 %s334, 1
      %s336 = scalar_select %p333, %s334, %s335
      %p339 = pneg %p333
      %p340 = scmp.eq.s32.totalorder %s36, 1
      %p341 = por %p339, %p340
      %p342 = scmp.ne.s32.totalorder %s334, %s337
      %p343 = scmp.eq.s32.totalorder %s36, 0
      %p344 = por %p342, %p343
      %p345 = scmp.ne.s32.totalorder %s334, %s337
      %p346 = scmp.eq.s32.totalorder %s41, 1
      %p347 = por %p345, %p346
      %p348 = scmp.ne.s32.totalorder %s337, %s338
      %p349 = scmp.eq.s32.totalorder %s41, 0
      %p350 = por %p348, %p349
      %p351 = scmp.ne.s32.totalorder %s337, %s338
      %p352 = scmp.eq.s32.totalorder %s42, 1
      %p353 = por %p351, %p352
      %p355 = scmp.ne.s32.totalorder %s338, %s354
      %p356 = scmp.eq.s32.totalorder %s42, 0
      %p357 = por %p355, %p356
      %s358 = ssub.s32 %s36, %s43
      %p359 = scmp.eq.s32.totalorder %s358, 0
      %s361 = sadd.s32 %s360, 1
      %s362 = scalar_select %p359, %s360, %s361
      %p365 = pneg %p359
      %p366 = scmp.eq.s32.totalorder %s36, 1
      %p367 = por %p365, %p366
      %p368 = scmp.ne.s32.totalorder %s360, %s363
      %p369 = scmp.eq.s32.totalorder %s36, 0
      %p370 = por %p368, %p369
      %p371 = scmp.ne.s32.totalorder %s360, %s363
      %p372 = scmp.eq.s32.totalorder %s41, 1
      %p373 = por %p371, %p372
      %p374 = scmp.ne.s32.totalorder %s363, %s364
      %p375 = scmp.eq.s32.totalorder %s41, 0
      %p376 = por %p374, %p375
      %p377 = scmp.ne.s32.totalorder %s363, %s364
      %p378 = scmp.eq.s32.totalorder %s42, 1
      %p379 = por %p377, %p378
      %p381 = scmp.ne.s32.totalorder %s364, %s380
      %p382 = scmp.eq.s32.totalorder %s42, 0
      %p383 = por %p381, %p382
      %s384 = ssub.s32 %s36, %s43
      %p385 = scmp.eq.s32.totalorder %s384, 0
      %s387 = sadd.s32 %s386, 1
      %s388 = scalar_select %p385, %s386, %s387
      %p391 = pneg %p385
      %p392 = scmp.eq.s32.totalorder %s36, 1
      %p393 = por %p391, %p392
      %p394 = scmp.ne.s32.totalorder %s386, %s389
      %p395 = scmp.eq.s32.totalorder %s36, 0
      %p396 = por %p394, %p395
      %p397 = scmp.ne.s32.totalorder %s386, %s389
      %p398 = scmp.eq.s32.totalorder %s41, 1
      %p399 = por %p397, %p398
      %p400 = scmp.ne.s32.totalorder %s389, %s390
      %p401 = scmp.eq.s32.totalorder %s41, 0
      %p402 = por %p400, %p401
      %p403 = scmp.ne.s32.totalorder %s389, %s390
      %p404 = scmp.eq.s32.totalorder %s42, 1
      %p405 = por %p403, %p404
      %p407 = scmp.ne.s32.totalorder %s390, %s406
      %p408 = scmp.eq.s32.totalorder %s42, 0
      %p409 = por %p407, %p408
      %s410 = ssub.s32 %s36, %s43
      %p411 = scmp.eq.s32.totalorder %s410, 0
      %s413 = sadd.s32 %s412, 1
      %s414 = scalar_select %p411, %s412, %s413
      %p417 = pneg %p411
      %p418 = scmp.eq.s32.totalorder %s36, 1
      %p419 = por %p417, %p418
      %p420 = scmp.ne.s32.totalorder %s412, %s415
      %p421 = scmp.eq.s32.totalorder %s36, 0
      %p422 = por %p420, %p421
      %p423 = scmp.ne.s32.totalorder %s412, %s415
      %p424 = scmp.eq.s32.totalorder %s41, 1
      %p425 = por %p423, %p424
      %p426 = scmp.ne.s32.totalorder %s415, %s416
      %p427 = scmp.eq.s32.totalorder %s41, 0
      %p428 = por %p426, %p427
      %p429 = scmp.ne.s32.totalorder %s415, %s416
      %p430 = scmp.eq.s32.totalorder %s42, 1
      %p431 = por %p429, %p430
      %p433 = scmp.ne.s32.totalorder %s416, %s432
      %p434 = scmp.eq.s32.totalorder %s42, 0
      %p435 = por %p433, %p434
      %s436 = ssub.s32 %s36, %s43
      %p437 = scmp.eq.s32.totalorder %s436, 0
      %s439 = sadd.s32 %s438, 1
      %s440 = scalar_select %p437, %s438, %s439
      %p443 = pneg %p437
      %p444 = scmp.eq.s32.totalorder %s36, 1
      %p445 = por %p443, %p444
      %p446 = scmp.ne.s32.totalorder %s438, %s441
      %p447 = scmp.eq.s32.totalorder %s36, 0
      %p448 = por %p446, %p447
      %p449 = scmp.ne.s32.totalorder %s438, %s441
      %p450 = scmp.eq.s32.totalorder %s41, 1
      %p451 = por %p449, %p450
      %p452 = scmp.ne.s32.totalorder %s441, %s442
      %p453 = scmp.eq.s32.totalorder %s41, 0
      %p454 = por %p452, %p453
      %p455 = scmp.ne.s32.totalorder %s441, %s442
      %p456 = scmp.eq.s32.totalorder %s42, 1
      %p457 = por %p455, %p456
      %p459 = scmp.ne.s32.totalorder %s442, %s458
      %p460 = scmp.eq.s32.totalorder %s42, 0
      %p461 = por %p459, %p460
      %s462 = ssub.s32 %s36, %s43
      %p463 = scmp.eq.s32.totalorder %s462, 0
      %s465 = sadd.s32 %s464, 1
      %s466 = scalar_select %p463, %s464, %s465
      %p469 = pneg %p463
      %p470 = scmp.eq.s32.totalorder %s36, 1
      %p471 = por %p469, %p470
      %p472 = scmp.ne.s32.totalorder %s464, %s467
      %p473 = scmp.eq.s32.totalorder %s36, 0
      %p474 = por %p472, %p473
      %p475 = scmp.ne.s32.totalorder %s464, %s467
      %p476 = scmp.eq.s32.totalorder %s41, 1
      %p477 = por %p475, %p476
      %p478 = scmp.ne.s32.totalorder %s467, %s468
      %p479 = scmp.eq.s32.totalorder %s41, 0
      %p480 = por %p478, %p479
      %p481 = scmp.ne.s32.totalorder %s467, %s468
      %p482 = scmp.eq.s32.totalorder %s42, 1
      %p483 = por %p481, %p482
      %p485 = scmp.ne.s32.totalorder %s468, %s484
      %p486 = scmp.eq.s32.totalorder %s42, 0
      %p487 = por %p485, %p486
      %s488 = ssub.s32 %s36, %s43
      %p489 = scmp.eq.s32.totalorder %s488, 0
      %s491 = sadd.s32 %s490, 1
      %s492 = scalar_select %p489, %s490, %s491
      %p495 = pneg %p489
      %p496 = scmp.eq.s32.totalorder %s36, 1
      %p497 = por %p495, %p496
      %p498 = scmp.ne.s32.totalorder %s490, %s493
      %p499 = scmp.eq.s32.totalorder %s36, 0
      %p500 = por %p498, %p499
      %p501 = scmp.ne.s32.totalorder %s490, %s493
      %p502 = scmp.eq.s32.totalorder %s41, 1
      %p503 = por %p501, %p502
      %p504 = scmp.ne.s32.totalorder %s493, %s494
      %p505 = scmp.eq.s32.totalorder %s41, 0
      %p506 = por %p504, %p505
      %p507 = scmp.ne.s32.totalorder %s493, %s494
      %p508 = scmp.eq.s32.totalorder %s42, 1
      %p509 = por %p507, %p508
      %p511 = scmp.ne.s32.totalorder %s494, %s510
      %p512 = scmp.eq.s32.totalorder %s42, 0
      %p513 = por %p511, %p512
      %s514 = ssub.s32 %s36, %s43
      %p515 = scmp.eq.s32.totalorder %s514, 0
      %s517 = sadd.s32 %s516, 1
      %s518 = scalar_select %p515, %s516, %s517
      %p521 = pneg %p515
      %p522 = scmp.eq.s32.totalorder %s36, 1
      %p523 = por %p521, %p522
      %p524 = scmp.ne.s32.totalorder %s516, %s519
      %p525 = scmp.eq.s32.totalorder %s36, 0
      %p526 = por %p524, %p525
      %p527 = scmp.ne.s32.totalorder %s516, %s519
      %p528 = scmp.eq.s32.totalorder %s41, 1
      %p529 = por %p527, %p528
      %p530 = scmp.ne.s32.totalorder %s519, %s520
      %p531 = scmp.eq.s32.totalorder %s41, 0
      %p532 = por %p530, %p531
      %p533 = scmp.ne.s32.totalorder %s519, %s520
      %p534 = scmp.eq.s32.totalorder %s42, 1
      %p535 = por %p533, %p534
      %p537 = scmp.ne.s32.totalorder %s520, %s536
      %p538 = scmp.eq.s32.totalorder %s42, 0
      %p539 = por %p537, %p538
      %s540 = ssub.s32 %s36, %s43
      %p541 = scmp.eq.s32.totalorder %s540, 0
      %s543 = sadd.s32 %s542, 1
      %s544 = scalar_select %p541, %s542, %s543
      %p547 = pneg %p541
      %p548 = scmp.eq.s32.totalorder %s36, 1
      %p549 = por %p547, %p548
      %p550 = scmp.ne.s32.totalorder %s542, %s545
      %p551 = scmp.eq.s32.totalorder %s36, 0
      %p552 = por %p550, %p551
      %p553 = scmp.ne.s32.totalorder %s542, %s545
      %p554 = scmp.eq.s32.totalorder %s41, 1
      %p555 = por %p553, %p554
      %p556 = scmp.ne.s32.totalorder %s545, %s546
      %p557 = scmp.eq.s32.totalorder %s41, 0
      %p558 = por %p556, %p557
      %p559 = scmp.ne.s32.totalorder %s545, %s546
      %p560 = scmp.eq.s32.totalorder %s42, 1
      %p561 = por %p559, %p560
      %p563 = scmp.ne.s32.totalorder %s546, %s562
      %p564 = scmp.eq.s32.totalorder %s42, 0
      %p565 = por %p563, %p564
      %s567 = sadd.s32 %s566, 1
      %p570 = scmp.eq.s32.totalorder %s36, 1
      %p571 = scmp.ne.s32.totalorder %s566, %s568
      %p572 = scmp.eq.s32.totalorder %s36, 0
      %p573 = por %p571, %p572
      %p574 = scmp.ne.s32.totalorder %s566, %s568
      %p575 = scmp.eq.s32.totalorder %s41, 1
      %p576 = por %p574, %p575
      %p577 = scmp.ne.s32.totalorder %s568, %s569
      %p578 = scmp.eq.s32.totalorder %s41, 0
      %p579 = por %p577, %p578
      %p580 = scmp.ne.s32.totalorder %s568, %s569
      %p581 = scmp.eq.s32.totalorder %s42, 1
      %p582 = por %p580, %p581
      %p584 = scmp.ne.s32.totalorder %s569, %s583
      %p585 = scmp.eq.s32.totalorder %s42, 0
      %p586 = por %p584, %p585
      %s588 = sadd.s32 %s587, 1
      %p591 = scmp.eq.s32.totalorder %s36, 1
      %p592 = scmp.ne.s32.totalorder %s587, %s589
      %p593 = scmp.eq.s32.totalorder %s36, 0
      %p594 = por %p592, %p593
      %p595 = scmp.ne.s32.totalorder %s587, %s589
      %p596 = scmp.eq.s32.totalorder %s41, 1
      %p597 = por %p595, %p596
      %p598 = scmp.ne.s32.totalorder %s589, %s590
      %p599 = scmp.eq.s32.totalorder %s41, 0
      %p600 = por %p598, %p599
      %p601 = scmp.ne.s32.totalorder %s589, %s590
      %p602 = scmp.eq.s32.totalorder %s42, 1
      %p603 = por %p601, %p602
      %p605 = scmp.ne.s32.totalorder %s590, %s604
      %p606 = scmp.eq.s32.totalorder %s42, 0
      %p607 = por %p605, %p606
      %s609 = sadd.s32 %s608, 1
      %p612 = scmp.eq.s32.totalorder %s36, 1
      %p613 = scmp.ne.s32.totalorder %s608, %s610
      %p614 = scmp.eq.s32.totalorder %s36, 0
      %p615 = por %p613, %p614
      %p616 = scmp.ne.s32.totalorder %s608, %s610
      %p617 = scmp.eq.s32.totalorder %s41, 1
      %p618 = por %p616, %p617
      %p619 = scmp.ne.s32.totalorder %s610, %s611
      %p620 = scmp.eq.s32.totalorder %s41, 0
      %p621 = por %p619, %p620
      %p622 = scmp.ne.s32.totalorder %s610, %s611
      %p623 = scmp.eq.s32.totalorder %s42, 1
      %p624 = por %p622, %p623
      %p626 = scmp.ne.s32.totalorder %s611, %s625
      %p627 = scmp.eq.s32.totalorder %s42, 0
      %p628 = por %p626, %p627
      %s630 = sadd.s32 %s629, 1
      %p633 = scmp.eq.s32.totalorder %s36, 1
      %p634 = scmp.ne.s32.totalorder %s629, %s631
      %p635 = scmp.eq.s32.totalorder %s36, 0
      %p636 = por %p634, %p635
      %p637 = scmp.ne.s32.totalorder %s629, %s631
      %p638 = scmp.eq.s32.totalorder %s41, 1
      %p639 = por %p637, %p638
      %p640 = scmp.ne.s32.totalorder %s631, %s632
      %p641 = scmp.eq.s32.totalorder %s41, 0
      %p642 = por %p640, %p641
      %p643 = scmp.ne.s32.totalorder %s631, %s632
      %p644 = scmp.eq.s32.totalorder %s42, 1
      %p645 = por %p643, %p644
      %p647 = scmp.ne.s32.totalorder %s632, %s646
      %p648 = scmp.eq.s32.totalorder %s42, 0
      %p649 = por %p647, %p648
      %p650 = scmp.le.s32.totalorder 1, %s36
      %p651 = scmp.lt.s32.totalorder %s36, 3
      %p652 = pnand %p650, %p651
      %p653 = pneg %p652
      // Predicated region
      $region9: #{multitask_bert_forward.1} parent=5 // pred_check
        _
      $region10: #{multitask_bert_forward.1} parent=5 // pred_check_branch
        %655 = sbr.rel (%p652) target = $region12
      $region11: #{multitask_bert_forward.1} parent=5 // pred_region
        %s656 = ssub.s32 %s36, 1
        // Predicated region
        $region13: #{multitask_bert_forward.1} parent=11 // pred_check
          %p657 = pneg %p57
        $region14: #{multitask_bert_forward.1} parent=11 // pred_check_branch
          %659 = sbr.rel (%p657) target = $region16
        $region15: #{multitask_bert_forward.1} parent=11 // pred_region
          _
        $region16: #{multitask_bert_forward.1} parent=11 // pred_fallthru
          _
        // Predicated region
        $region17: #{multitask_bert_forward.1} parent=11 // pred_check
          %p660 = pneg %p78
        $region18: #{multitask_bert_forward.1} parent=11 // pred_check_branch
          %662 = sbr.rel (%p660) target = $region20
        $region19: #{multitask_bert_forward.1} parent=11 // pred_region
          _
        $region20: #{multitask_bert_forward.1} parent=11 // pred_fallthru
          _
        // Predicated region
        $region21: #{multitask_bert_forward.1} parent=11 // pred_check
          %p663 = pneg %p99
        $region22: #{multitask_bert_forward.1} parent=11 // pred_check_branch
          %665 = sbr.rel (%p663) target = $region24
        $region23: #{multitask_bert_forward.1} parent=11 // pred_region
          _
        $region24: #{multitask_bert_forward.1} parent=11 // pred_fallthru
          _
        // Predicated region
        $region25: #{multitask_bert_forward.1} parent=11 // pred_check
          %p666 = pneg %p120
        $region26: #{multitask_bert_forward.1} parent=11 // pred_check_branch
          %668 = sbr.rel (%p666) target = $region28
        $region27: #{multitask_bert_forward.1} parent=11 // pred_region
          %670 = vsyncadd [#allocation4], 0
          %s672 = sshll.u32 %s3, 4
          %s673 = int_to_ptr.hbm [resolvable:$true] %s672
          %s674 = sshll.u32 [#allocation3], 4
          %s675 = int_to_ptr.vmem [resolvable:$true] %s674
          %677 = dma.hbm_to_vmem [thread:$0]  %s673, 32, %s675, [#allocation4]
        $region28: #{multitask_bert_forward.1} parent=11 // pred_fallthru
          _
        // Predicated region
        $region29: #{multitask_bert_forward.1} parent=11 // pred_check
          %p678 = pneg %p141
        $region30: #{multitask_bert_forward.1} parent=11 // pred_check_branch
          %680 = sbr.rel (%p678) target = $region32
        $region31: #{multitask_bert_forward.1} parent=11 // pred_region
          %682 = vsyncadd [#allocation7], 0
          %s684 = sshll.u32 %s4, 4
          %s685 = int_to_ptr.hbm [resolvable:$true] %s684
          %s686 = sshll.u32 [#allocation6], 4
          %s687 = int_to_ptr.vmem [resolvable:$true] %s686
          %689 = dma.hbm_to_vmem [thread:$0]  %s685, 32, %s687, [#allocation7]
        $region32: #{multitask_bert_forward.1} parent=11 // pred_fallthru
          _
        // Predicated region
        $region33: #{multitask_bert_forward.1} parent=11 // pred_check
          %p690 = pneg %p162
        $region34: #{multitask_bert_forward.1} parent=11 // pred_check_branch
          %692 = sbr.rel (%p690) target = $region36
        $region35: #{multitask_bert_forward.1} parent=11 // pred_region
          _
        $region36: #{multitask_bert_forward.1} parent=11 // pred_fallthru
          _
        // Predicated region
        $region37: #{multitask_bert_forward.1} parent=11 // pred_check
          %p693 = pneg %p183
        $region38: #{multitask_bert_forward.1} parent=11 // pred_check_branch
          %695 = sbr.rel (%p693) target = $region40
        $region39: #{multitask_bert_forward.1} parent=11 // pred_region
          %697 = vsyncadd [#allocation7], 0
          %s698 = sshll.u32 %s6, 4
          %s699 = int_to_ptr.hbm [resolvable:$true] %s698
          %s700 = sshll.u32 [#allocation8], 4
          %s701 = int_to_ptr.vmem [resolvable:$true] %s700
          %706 = dma.hbm_to_vmem [thread:$0]  %s699, 4096, %s701, [#allocation7], 128, 128, 8
        $region40: #{multitask_bert_forward.1} parent=11 // pred_fallthru
          _
        // Predicated region
        $region41: #{multitask_bert_forward.1} parent=11 // pred_check
          %p707 = pneg %p204
        $region42: #{multitask_bert_forward.1} parent=11 // pred_check_branch
          %709 = sbr.rel (%p707) target = $region44
        $region43: #{multitask_bert_forward.1} parent=11 // pred_region
          %711 = vsyncadd [#allocation10], 0
          %s713 = sshll.u32 %s7, 4
          %s714 = int_to_ptr.hbm [resolvable:$true] %s713
          %s715 = sshll.u32 [#allocation9], 4
          %s716 = int_to_ptr.vmem [resolvable:$true] %s715
          %718 = dma.hbm_to_vmem [thread:$0]  %s714, 32, %s716, [#allocation10]
        $region44: #{multitask_bert_forward.1} parent=11 // pred_fallthru
          _
        // Predicated region
        $region45: #{multitask_bert_forward.1} parent=11 // pred_check
          %p719 = pneg %p225
        $region46: #{multitask_bert_forward.1} parent=11 // pred_check_branch
          %721 = sbr.rel (%p719) target = $region48
        $region47: #{multitask_bert_forward.1} parent=11 // pred_region
          _
        $region48: #{multitask_bert_forward.1} parent=11 // pred_fallthru
          _
        // Predicated region
        $region49: #{multitask_bert_forward.1} parent=11 // pred_check
          %p722 = pneg %p246
        $region50: #{multitask_bert_forward.1} parent=11 // pred_check_branch
          %724 = sbr.rel (%p722) target = $region52
        $region51: #{multitask_bert_forward.1} parent=11 // pred_region
          _
        $region52: #{multitask_bert_forward.1} parent=11 // pred_fallthru
          _
      $region12: #{multitask_bert_forward.1} parent=5 // pred_fallthru
        _
      %p725 = scmp.lt.s32.totalorder %s36, 2
      // Predicated region
      $region53: #{multitask_bert_forward.1} parent=5 // pred_check
        %p726 = pneg %p725
      $region54: #{multitask_bert_forward.1} parent=5 // pred_check_branch
        %728 = sbr.rel (%p726) target = $region56
      $region55: #{multitask_bert_forward.1} parent=5 // pred_region
        // Predicated region
        $region57: #{multitask_bert_forward.1} parent=55 // pred_check
          %p729 = pneg %p266
        $region58: #{multitask_bert_forward.1} parent=55 // pred_check_branch
          %731 = sbr.rel (%p729) target = $region60
        $region59: #{multitask_bert_forward.1} parent=55 // pred_region
          %s732 = sand.u32 %s36, 1
          %s733 = scalar_lea.sflag [#allocation4], %s732
          %s734 = sand.u32 %s256, 1
          %s735 = smul.addr %s734, 768
          %s736 = scalar_lea.vmem [#allocation11], %s735
          %738 = vsyncadd %s733, 0
          %s739 = smul.addr %s36, 192
          %s740 = smul.addr %s739, 4
          %s741 = scalar_lea.hbm %s10, %s740
          %s742 = sshll.u32 %s741, 4
          %s743 = int_to_ptr.hbm [resolvable:$true] %s742
          %s744 = sshll.u32 %s736, 4
          %s745 = int_to_ptr.vmem [resolvable:$true] %s744
          %750 = dma.hbm_to_vmem [thread:$0]  %s743, 12288, %s745, %s733, 384, 384, 24
        $region60: #{multitask_bert_forward.1} parent=55 // pred_fallthru
          _
        // Predicated region
        $region61: #{multitask_bert_forward.1} parent=55 // pred_check
          %p751 = pneg %p292
        $region62: #{multitask_bert_forward.1} parent=55 // pred_check_branch
          %753 = sbr.rel (%p751) target = $region64
        $region63: #{multitask_bert_forward.1} parent=55 // pred_region
          %p754 = scmp.lt.s32.totalorder %s36, 1
          %s755 = scalar_select %p754, %s36, 1
          %s756 = smul.addr %s755, 6
          %s757 = scalar_lea.vmem %s11, %s756
        $region64: #{multitask_bert_forward.1} parent=55 // pred_fallthru
          _
        // Predicated region
        $region65: #{multitask_bert_forward.1} parent=55 // pred_check
          %p758 = pneg %p318
        $region66: #{multitask_bert_forward.1} parent=55 // pred_check_branch
          %760 = sbr.rel (%p758) target = $region68
        $region67: #{multitask_bert_forward.1} parent=55 // pred_region
          %p761 = scmp.lt.s32.totalorder %s36, 1
          %s762 = scalar_select %p761, %s36, 1
          %s763 = smul.addr %s762, 64
          %s764 = smul.addr %s763, 4
          %s765 = scalar_lea.vmem %s12, %s764
        $region68: #{multitask_bert_forward.1} parent=55 // pred_fallthru
          _
        // Predicated region
        $region69: #{multitask_bert_forward.1} parent=55 // pred_check
          %p766 = pneg %p344
        $region70: #{multitask_bert_forward.1} parent=55 // pred_check_branch
          %768 = sbr.rel (%p766) target = $region72
        $region71: #{multitask_bert_forward.1} parent=55 // pred_region
          %p769 = scmp.lt.s32.totalorder %s36, 1
          %s770 = scalar_select %p769, %s36, 1
          %s771 = smul.addr %s770, 2
          %s772 = scalar_lea.vmem %s13, %s771
        $region72: #{multitask_bert_forward.1} parent=55 // pred_fallthru
          _
        // Predicated region
        $region73: #{multitask_bert_forward.1} parent=55 // pred_check
          %p773 = pneg %p370
        $region74: #{multitask_bert_forward.1} parent=55 // pred_check_branch
          %775 = sbr.rel (%p773) target = $region76
        $region75: #{multitask_bert_forward.1} parent=55 // pred_region
          %p776 = scmp.lt.s32.totalorder %s36, 1
          %s777 = scalar_select %p776, %s36, 1
          %s778 = smul.addr %s777, 2
          %s779 = scalar_lea.vmem %s14, %s778
        $region76: #{multitask_bert_forward.1} parent=55 // pred_fallthru
          _
        // Predicated region
        $region77: #{multitask_bert_forward.1} parent=55 // pred_check
          %p780 = pneg %p396
        $region78: #{multitask_bert_forward.1} parent=55 // pred_check_branch
          %782 = sbr.rel (%p780) target = $region80
        $region79: #{multitask_bert_forward.1} parent=55 // pred_region
          %p783 = scmp.lt.s32.totalorder %s36, 1
          %s784 = scalar_select %p783, %s36, 1
          %s785 = smul.addr %s784, 2
          %s786 = scalar_lea.vmem %s15, %s785
        $region80: #{multitask_bert_forward.1} parent=55 // pred_fallthru
          _
        // Predicated region
        $region81: #{multitask_bert_forward.1} parent=55 // pred_check
          %p787 = pneg %p422
        $region82: #{multitask_bert_forward.1} parent=55 // pred_check_branch
          %789 = sbr.rel (%p787) target = $region84
        $region83: #{multitask_bert_forward.1} parent=55 // pred_region
          %s790 = sand.u32 %s36, 1
          %s791 = scalar_lea.sflag [#allocation4], %s790
          %s792 = sand.u32 %s412, 1
          %s793 = smul.addr %s792, 512
          %s794 = scalar_lea.vmem [#allocation12], %s793
          %796 = vsyncadd %s791, 0
          %s797 = smul.addr %s36, 128
          %s798 = smul.addr %s797, 4
          %s799 = scalar_lea.hbm %s16, %s798
          %s800 = sshll.u32 %s799, 4
          %s801 = int_to_ptr.hbm [resolvable:$true] %s800
          %s802 = sshll.u32 %s794, 4
          %s803 = int_to_ptr.vmem [resolvable:$true] %s802
          %808 = dma.hbm_to_vmem [thread:$0]  %s801, 8192, %s803, %s791, 256, 256, 16
        $region84: #{multitask_bert_forward.1} parent=55 // pred_fallthru
          _
        // Predicated region
        $region85: #{multitask_bert_forward.1} parent=55 // pred_check
          %p809 = pneg %p448
        $region86: #{multitask_bert_forward.1} parent=55 // pred_check_branch
          %811 = sbr.rel (%p809) target = $region88
        $region87: #{multitask_bert_forward.1} parent=55 // pred_region
          %p812 = scmp.lt.s32.totalorder %s36, 1
          %s813 = scalar_select %p812, %s36, 1
          %s814 = smul.addr %s813, 4
          %s815 = scalar_lea.vmem %s17, %s814
        $region88: #{multitask_bert_forward.1} parent=55 // pred_fallthru
          _
        // Predicated region
        $region89: #{multitask_bert_forward.1} parent=55 // pred_check
          %p816 = pneg %p474
        $region90: #{multitask_bert_forward.1} parent=55 // pred_check_branch
          %818 = sbr.rel (%p816) target = $region92
        $region91: #{multitask_bert_forward.1} parent=55 // pred_region
          %s819 = sand.u32 %s36, 1
          %s820 = scalar_lea.sflag [#allocation4], %s819
          %s821 = sand.u32 %s464, 1
          %s822 = smul.addr %s821, 512
          %s823 = scalar_lea.vmem [#allocation13], %s822
          %825 = vsyncadd %s820, 0
          %s826 = smul.addr %s36, 128
          %s827 = smul.addr %s826, 4
          %s828 = scalar_lea.hbm %s18, %s827
          %s829 = sshll.u32 %s828, 4
          %s830 = int_to_ptr.hbm [resolvable:$true] %s829
          %s831 = sshll.u32 %s823, 4
          %s832 = int_to_ptr.vmem [resolvable:$true] %s831
          %837 = dma.hbm_to_vmem [thread:$0]  %s830, 8192, %s832, %s820, 128, 128, 8
        $region92: #{multitask_bert_forward.1} parent=55 // pred_fallthru
          _
        // Predicated region
        $region93: #{multitask_bert_forward.1} parent=55 // pred_check
          %p838 = pneg %p500
        $region94: #{multitask_bert_forward.1} parent=55 // pred_check_branch
          %840 = sbr.rel (%p838) target = $region96
        $region95: #{multitask_bert_forward.1} parent=55 // pred_region
          %s841 = sand.u32 %s36, 1
          %s842 = scalar_lea.sflag [#allocation4], %s841
          %s843 = sand.u32 %s490, 1
          %s844 = smul.addr %s843, 2
          %s845 = scalar_lea.vmem [#allocation14], %s844
          %847 = vsyncadd %s842, 0
          %s848 = smul.addr %s36, 2
          %s849 = scalar_lea.hbm %s19, %s848
          %s851 = sshll.u32 %s849, 4
          %s852 = int_to_ptr.hbm [resolvable:$true] %s851
          %s853 = sshll.u32 %s845, 4
          %s854 = int_to_ptr.vmem [resolvable:$true] %s853
          %856 = dma.hbm_to_vmem [thread:$0]  %s852, 32, %s854, %s842
        $region96: #{multitask_bert_forward.1} parent=55 // pred_fallthru
          _
        // Predicated region
        $region97: #{multitask_bert_forward.1} parent=55 // pred_check
          %p857 = pneg %p526
        $region98: #{multitask_bert_forward.1} parent=55 // pred_check_branch
          %859 = sbr.rel (%p857) target = $region100
        $region99: #{multitask_bert_forward.1} parent=55 // pred_region
          %s860 = sand.u32 %s36, 1
          %s861 = scalar_lea.sflag [#allocation4], %s860
          %s862 = sand.u32 %s516, 1
          %s863 = smul.addr %s862, 2
          %s864 = scalar_lea.vmem [#allocation15], %s863
          %866 = vsyncadd %s861, 0
          %s867 = smul.addr %s36, 2
          %s868 = scalar_lea.hbm %s20, %s867
          %s870 = sshll.u32 %s868, 4
          %s871 = int_to_ptr.hbm [resolvable:$true] %s870
          %s872 = sshll.u32 %s864, 4
          %s873 = int_to_ptr.vmem [resolvable:$true] %s872
          %875 = dma.hbm_to_vmem [thread:$0]  %s871, 32, %s873, %s861
        $region100: #{multitask_bert_forward.1} parent=55 // pred_fallthru
          _
        // Predicated region
        $region101: #{multitask_bert_forward.1} parent=55 // pred_check
          %p876 = pneg %p552
        $region102: #{multitask_bert_forward.1} parent=55 // pred_check_branch
          %878 = sbr.rel (%p876) target = $region104
        $region103: #{multitask_bert_forward.1} parent=55 // pred_region
          %s879 = sand.u32 %s36, 1
          %s880 = scalar_lea.sflag [#allocation4], %s879
          %s881 = sand.u32 %s542, 1
          %s882 = smul.addr %s881, 2
          %s883 = scalar_lea.vmem [#allocation16], %s882
          %885 = vsyncadd %s880, 0
          %s886 = smul.addr %s36, 2
          %s887 = scalar_lea.hbm %s21, %s886
          %s889 = sshll.u32 %s887, 4
          %s890 = int_to_ptr.hbm [resolvable:$true] %s889
          %s891 = sshll.u32 %s883, 4
          %s892 = int_to_ptr.vmem [resolvable:$true] %s891
          %894 = dma.hbm_to_vmem [thread:$0]  %s890, 32, %s892, %s880
        $region104: #{multitask_bert_forward.1} parent=55 // pred_fallthru
          _
      $region56: #{multitask_bert_forward.1} parent=5 // pred_fallthru
        _
      %p895 = scmp.le.s32.totalorder 1, %s36
      %p896 = scmp.lt.s32.totalorder %s36, 3
      %p897 = pnand %p895, %p896
      %p898 = pneg %p897
      // Predicated region
      $region105: #{multitask_bert_forward.1} parent=5 // pred_check
        _
      $region106: #{multitask_bert_forward.1} parent=5 // pred_check_branch
        %900 = sbr.rel (%p897) target = $region108
      $region107: #{multitask_bert_forward.1} parent=5 // pred_region
        %s901 = ssub.s32 %s36, 1
        // Predicated region
        $region109: #{multitask_bert_forward.1} parent=107 // pred_check
          %p902 = pneg %p120
        $region110: #{multitask_bert_forward.1} parent=107 // pred_check_branch
          %904 = sbr.rel (%p902) target = $region112
        $region111: #{multitask_bert_forward.1} parent=107 // pred_region
          %906 = dma.done [#allocation4], 32
        $region112: #{multitask_bert_forward.1} parent=107 // pred_fallthru
          _
        // Predicated region
        $region113: #{multitask_bert_forward.1} parent=107 // pred_check
          %p907 = pneg %p141
        $region114: #{multitask_bert_forward.1} parent=107 // pred_check_branch
          %909 = sbr.rel (%p907) target = $region116
        $region115: #{multitask_bert_forward.1} parent=107 // pred_region
          %911 = dma.done [#allocation7], 32
        $region116: #{multitask_bert_forward.1} parent=107 // pred_fallthru
          _
        // Predicated region
        $region117: #{multitask_bert_forward.1} parent=107 // pred_check
          %p912 = pneg %p183
        $region118: #{multitask_bert_forward.1} parent=107 // pred_check_branch
          %914 = sbr.rel (%p912) target = $region120
        $region119: #{multitask_bert_forward.1} parent=107 // pred_region
          %916 = dma.done [#allocation7], 4096
        $region120: #{multitask_bert_forward.1} parent=107 // pred_fallthru
          _
        // Predicated region
        $region121: #{multitask_bert_forward.1} parent=107 // pred_check
          %p917 = pneg %p204
        $region122: #{multitask_bert_forward.1} parent=107 // pred_check_branch
          %919 = sbr.rel (%p917) target = $region124
        $region123: #{multitask_bert_forward.1} parent=107 // pred_region
          %921 = dma.done [#allocation10], 32
        $region124: #{multitask_bert_forward.1} parent=107 // pred_fallthru
          _
        %s922 = sand.u32 %s41, 1
        %s923 = scalar_lea.sflag [#allocation4], %s922
        %s924 = sand.u32 %s259, 1
        %s925 = smul.addr %s924, 768
        %s926 = scalar_lea.vmem [#allocation11], %s925
        // Predicated region
        $region125: #{multitask_bert_forward.1} parent=107 // pred_check
          %p927 = pneg %p272
        $region126: #{multitask_bert_forward.1} parent=107 // pred_check_branch
          %929 = sbr.rel (%p927) target = $region128
        $region127: #{multitask_bert_forward.1} parent=107 // pred_region
          %931 = dma.done %s923, 12288
        $region128: #{multitask_bert_forward.1} parent=107 // pred_fallthru
          _
        %s932 = sand.u32 %s41, 1
        %s933 = scalar_lea.sflag [#allocation4], %s932
        %s934 = sand.u32 %s415, 1
        %s935 = smul.addr %s934, 512
        %s936 = scalar_lea.vmem [#allocation12], %s935
        // Predicated region
        $region129: #{multitask_bert_forward.1} parent=107 // pred_check
          %p937 = pneg %p428
        $region130: #{multitask_bert_forward.1} parent=107 // pred_check_branch
          %939 = sbr.rel (%p937) target = $region132
        $region131: #{multitask_bert_forward.1} parent=107 // pred_region
          %941 = dma.done %s933, 8192
        $region132: #{multitask_bert_forward.1} parent=107 // pred_fallthru
          _
        %s942 = sand.u32 %s41, 1
        %s943 = scalar_lea.sflag [#allocation4], %s942
        %s944 = sand.u32 %s467, 1
        %s945 = smul.addr %s944, 512
        %s946 = scalar_lea.vmem [#allocation13], %s945
        // Predicated region
        $region133: #{multitask_bert_forward.1} parent=107 // pred_check
          %p947 = pneg %p480
        $region134: #{multitask_bert_forward.1} parent=107 // pred_check_branch
          %949 = sbr.rel (%p947) target = $region136
        $region135: #{multitask_bert_forward.1} parent=107 // pred_region
          %951 = dma.done %s943, 8192
        $region136: #{multitask_bert_forward.1} parent=107 // pred_fallthru
          _
        %s952 = sand.u32 %s41, 1
        %s953 = scalar_lea.sflag [#allocation4], %s952
        %s954 = sand.u32 %s493, 1
        %s955 = smul.addr %s954, 2
        %s956 = scalar_lea.vmem [#allocation14], %s955
        // Predicated region
        $region137: #{multitask_bert_forward.1} parent=107 // pred_check
          %p957 = pneg %p506
        $region138: #{multitask_bert_forward.1} parent=107 // pred_check_branch
          %959 = sbr.rel (%p957) target = $region140
        $region139: #{multitask_bert_forward.1} parent=107 // pred_region
          %961 = dma.done %s953, 32
        $region140: #{multitask_bert_forward.1} parent=107 // pred_fallthru
          _
        %s962 = sand.u32 %s41, 1
        %s963 = scalar_lea.sflag [#allocation4], %s962
        %s964 = sand.u32 %s519, 1
        %s965 = smul.addr %s964, 2
        %s966 = scalar_lea.vmem [#allocation15], %s965
        // Predicated region
        $region141: #{multitask_bert_forward.1} parent=107 // pred_check
          %p967 = pneg %p532
        $region142: #{multitask_bert_forward.1} parent=107 // pred_check_branch
          %969 = sbr.rel (%p967) target = $region144
        $region143: #{multitask_bert_forward.1} parent=107 // pred_region
          %971 = dma.done %s963, 32
        $region144: #{multitask_bert_forward.1} parent=107 // pred_fallthru
          _
        %s972 = sand.u32 %s41, 1
        %s973 = scalar_lea.sflag [#allocation4], %s972
        %s974 = sand.u32 %s545, 1
        %s975 = smul.addr %s974, 2
        %s976 = scalar_lea.vmem [#allocation16], %s975
        // Predicated region
        $region145: #{multitask_bert_forward.1} parent=107 // pred_check
          %p977 = pneg %p558
        $region146: #{multitask_bert_forward.1} parent=107 // pred_check_branch
          %979 = sbr.rel (%p977) target = $region148
        $region147: #{multitask_bert_forward.1} parent=107 // pred_region
          %981 = dma.done %s973, 32
        $region148: #{multitask_bert_forward.1} parent=107 // pred_fallthru
          _
        %p982 = pneg %p57
        %p983 = pneg %p54
        %p984 = pneg %p78
        %p985 = pneg %p75
        %p986 = pneg %p99
        %p987 = pneg %p96
        %p988 = pneg %p120
        %p989 = pneg %p117
        %p990 = pneg %p141
        %p991 = pneg %p138
        %p992 = pneg %p162
        %p993 = pneg %p159
        %p994 = pneg %p183
        %p995 = pneg %p180
        %p996 = pneg %p204
        %p997 = pneg %p201
        %p998 = pneg %p225
        %p999 = pneg %p222
        %p1000 = pneg %p246
        %p1001 = pneg %p243
        %s1002 = sand.u32 %s41, 1
        %s1003 = scalar_lea.sflag [#allocation4], %s1002
        %s1004 = sand.u32 %s259, 1
        %s1005 = smul.addr %s1004, 768
        %s1006 = scalar_lea.vmem [#allocation11], %s1005
        %p1007 = pneg %p272
        %p1008 = pneg %p269
        %p1009 = scmp.lt.s32.totalorder %s41, 1
        %s1010 = scalar_select %p1009, %s41, 1
        %s1011 = smul.addr %s1010, 6
        %s1012 = scalar_lea.vmem %s11, %s1011
        %p1013 = pneg %p298
        %p1014 = pneg %p295
        %p1015 = scmp.lt.s32.totalorder %s41, 1
        %s1016 = scalar_select %p1015, %s41, 1
        %s1017 = smul.addr %s1016, 64
        %s1018 = smul.addr %s1017, 4
        %s1019 = scalar_lea.vmem %s12, %s1018
        %p1020 = pneg %p324
        %p1021 = pneg %p321
        %p1022 = scmp.lt.s32.totalorder %s41, 1
        %s1023 = scalar_select %p1022, %s41, 1
        %s1024 = smul.addr %s1023, 2
        %s1025 = scalar_lea.vmem %s13, %s1024
        %p1026 = pneg %p350
        %p1027 = pneg %p347
        %p1028 = scmp.lt.s32.totalorder %s41, 1
        %s1029 = scalar_select %p1028, %s41, 1
        %s1030 = smul.addr %s1029, 2
        %s1031 = scalar_lea.vmem %s14, %s1030
        %p1032 = pneg %p376
        %p1033 = pneg %p373
        %p1034 = scmp.lt.s32.totalorder %s41, 1
        %s1035 = scalar_select %p1034, %s41, 1
        %s1036 = smul.addr %s1035, 2
        %s1037 = scalar_lea.vmem %s15, %s1036
        %p1038 = pneg %p402
        %p1039 = pneg %p399
        %s1040 = sand.u32 %s41, 1
        %s1041 = scalar_lea.sflag [#allocation4], %s1040
        %s1042 = sand.u32 %s415, 1
        %s1043 = smul.addr %s1042, 512
        %s1044 = scalar_lea.vmem [#allocation12], %s1043
        %p1045 = pneg %p428
        %p1046 = pneg %p425
        %p1047 = scmp.lt.s32.totalorder %s41, 1
        %s1048 = scalar_select %p1047, %s41, 1
        %s1049 = smul.addr %s1048, 4
        %s1050 = scalar_lea.vmem %s17, %s1049
        %p1051 = pneg %p454
        %p1052 = pneg %p451
        %s1053 = sand.u32 %s41, 1
        %s1054 = scalar_lea.sflag [#allocation4], %s1053
        %s1055 = sand.u32 %s467, 1
        %s1056 = smul.addr %s1055, 512
        %s1057 = scalar_lea.vmem [#allocation13], %s1056
        %p1058 = pneg %p480
        %p1059 = pneg %p477
        %s1060 = sand.u32 %s41, 1
        %s1061 = scalar_lea.sflag [#allocation4], %s1060
        %s1062 = sand.u32 %s493, 1
        %s1063 = smul.addr %s1062, 2
        %s1064 = scalar_lea.vmem [#allocation14], %s1063
        %p1065 = pneg %p506
        %p1066 = pneg %p503
        %s1067 = sand.u32 %s41, 1
        %s1068 = scalar_lea.sflag [#allocation4], %s1067
        %s1069 = sand.u32 %s519, 1
        %s1070 = smul.addr %s1069, 2
        %s1071 = scalar_lea.vmem [#allocation15], %s1070
        %p1072 = pneg %p532
        %p1073 = pneg %p529
        %s1074 = sand.u32 %s41, 1
        %s1075 = scalar_lea.sflag [#allocation4], %s1074
        %s1076 = sand.u32 %s545, 1
        %s1077 = smul.addr %s1076, 2
        %s1078 = scalar_lea.vmem [#allocation16], %s1077
        %p1079 = pneg %p558
        %p1080 = pneg %p555
        %p1081 = pneg %p579
        %p1082 = pneg %p576
        %p1083 = pneg %p600
        %p1084 = pneg %p597
        %p1085 = pneg %p621
        %p1086 = pneg %p618
        %p1087 = pneg %p642
        %p1088 = pneg %p639
        %p1089 = scmp.lt.s32.totalorder %s41, 1
        %s1090 = scalar_select %p1089, %s41, 1
        %s1091 = smul.addr %s1090, 6
        %s1092 = scalar_lea.vmem %s11, %s1091
        %p1093 = scmp.lt.s32.totalorder %s41, 1
        %s1094 = scalar_select %p1093, %s41, 1
        %s1095 = smul.addr %s1094, 64
        %s1096 = smul.addr %s1095, 4
        %s1097 = scalar_lea.vmem %s12, %s1096
        %p1098 = scmp.lt.s32.totalorder %s41, 1
        %s1099 = scalar_select %p1098, %s41, 1
        %s1100 = smul.addr %s1099, 2
        %s1101 = scalar_lea.vmem %s13, %s1100
        %p1102 = scmp.lt.s32.totalorder %s41, 1
        %s1103 = scalar_select %p1102, %s41, 1
        %s1104 = smul.addr %s1103, 2
        %s1105 = scalar_lea.vmem %s14, %s1104
        %p1106 = scmp.lt.s32.totalorder %s41, 1
        %s1107 = scalar_select %p1106, %s41, 1
        %s1108 = smul.addr %s1107, 2
        %s1109 = scalar_lea.vmem %s15, %s1108
        %p1110 = scmp.lt.s32.totalorder %s41, 1
        %s1111 = scalar_select %p1110, %s41, 1
        %s1112 = smul.addr %s1111, 4
        %s1113 = scalar_lea.vmem %s17, %s1112
        %p1115 = scmp.eq.s32.totalorder %s41, 0
        // Predicated region
        $region149: #{multitask_bert_forward.1} parent=107 // pred_check
          %p1116 = pneg %p1115
        $region150: #{multitask_bert_forward.1} parent=107 // pred_check_branch
          %1118 = sbr.rel (%p1116) target = $region152
        $region151: #{multitask_bert_forward.1} parent=107 // pred_region
          %v1119 = vld [vmem:[%s0] sm:$0xff]
          %v1120 = vld [vmem:[%s0 + $0x8] sm:$0xff]
          %v1121 = vld [vmem:[%s0 + $0x10] sm:$0xff]
          %v1122 = vld [vmem:[%s0 + $0x18] sm:$0xff]
          %v1123 = vld [vmem:[%s0 + $0x20] sm:$0xff]
          %v1124 = vld [vmem:[%s0 + $0x28] sm:$0xff]
          %v1125 = vld [vmem:[%s0 + $0x30] sm:$0xff]
          %v1126 = vld [vmem:[%s0 + $0x38] sm:$0xff]
          %v1127 = vld [vmem:[%s1] sm:$0xff]
          %v1128 = vld [vmem:[%s1 + $0x8] sm:$0xff]
          %v1129 = vld [vmem:[%s1 + $0x10] sm:$0xff]
          %v1130 = vld [vmem:[%s1 + $0x18] sm:$0xff]
          %v1131 = vadd.f32 %v1119, %v1127
          %v1132 = vadd.f32 %v1120, %v1128
          %v1133 = vadd.f32 %v1121, %v1129
          %v1134 = vadd.f32 %v1122, %v1130
          %v1135 = vadd.f32 %v1123, %v1127
          %v1136 = vadd.f32 %v1124, %v1128
          %v1137 = vadd.f32 %v1125, %v1129
          %v1138 = vadd.f32 %v1126, %v1130
          %v1139 = vld [vmem:[%s2] sm:$0x3]
          %v1141 = vperm.slane %v1139, 0
          %v1142 = vperm.slane %v1139, 1
          %v1145 = vadd.f32 %v1131, %v1141
          %v1146 = vadd.f32 %v1132, %v1142
          %v1147 = vadd.f32 %v1133, %v1141
          %v1148 = vadd.f32 %v1134, %v1142
          %v1149 = vadd.f32 %v1135, %v1141
          %v1150 = vadd.f32 %v1136, %v1142
          %v1151 = vadd.f32 %v1137, %v1141
          %v1152 = vadd.f32 %v1138, %v1142
          %v1153 = vld [vmem:[#allocation3] sm:$0x3]
          %v1154 = vld [vmem:[#allocation6] sm:$0x3]
          %v1155 = vadd.f32 %v1145, %v1146
          %1156 = vadd.xlane.f32.xlu0 %v1155
          %v1157 = vpop.xlane.xlu0 %1156
          %v1158 = vadd.f32 %v1147, %v1148
          %1159 = vadd.xlane.f32.xlu0 %v1158
          %v1160 = vpop.xlane.xlu0 %1159
          %v1161 = vadd.f32 %v1149, %v1150
          %1162 = vadd.xlane.f32.xlu0 %v1161
          %v1163 = vpop.xlane.xlu0 %1162
          %v1164 = vadd.f32 %v1151, %v1152
          %1165 = vadd.xlane.f32.xlu0 %v1164
          %v1166 = vpop.xlane.xlu0 %1165
          %v1167 = vrcp.pop 256.0
          %v1168 = vmul.f32 256.0, %v1167
          %v1169 = vsub.f32 1.0, %v1168
          %v1170 = vmul.f32 %v1167, %v1169
          %v1171 = vadd.f32 %v1167, %v1170
          %vm1172 = vweird.f32 %v1167
          %v1173 = vsel %vm1172, %v1167, %v1171
          %v1174 = vmul.f32 %v1157, %v1173
          %v1175 = vmul.f32 %v1160, %v1173
          %v1176 = vmul.f32 %v1163, %v1173
          %v1177 = vmul.f32 %v1166, %v1173
          %v1178 = vsub.f32 %v1145, %v1174
          %v1179 = vsub.f32 %v1146, %v1174
          %v1180 = vsub.f32 %v1147, %v1175
          %v1181 = vsub.f32 %v1148, %v1175
          %v1182 = vsub.f32 %v1149, %v1176
          %v1183 = vsub.f32 %v1150, %v1176
          %v1184 = vsub.f32 %v1151, %v1177
          %v1185 = vsub.f32 %v1152, %v1177
          %v1186 = vmul.f32 %v1178, %v1178
          %v1187 = vmul.f32 %v1179, %v1179
          %v1188 = vmul.f32 %v1180, %v1180
          %v1189 = vmul.f32 %v1181, %v1181
          %v1190 = vmul.f32 %v1182, %v1182
          %v1191 = vmul.f32 %v1183, %v1183
          %v1192 = vmul.f32 %v1184, %v1184
          %v1193 = vmul.f32 %v1185, %v1185
          %v1194 = vadd.f32 %v1186, %v1187
          %1195 = vadd.xlane.f32.xlu0 %v1194
          %v1196 = vpop.xlane.xlu0 %1195
          %v1197 = vadd.f32 %v1188, %v1189
          %1198 = vadd.xlane.f32.xlu0 %v1197
          %v1199 = vpop.xlane.xlu0 %1198
          %v1200 = vadd.f32 %v1190, %v1191
          %1201 = vadd.xlane.f32.xlu0 %v1200
          %v1202 = vpop.xlane.xlu0 %1201
          %v1203 = vadd.f32 %v1192, %v1193
          %1204 = vadd.xlane.f32.xlu0 %v1203
          %v1205 = vpop.xlane.xlu0 %1204
          %v1206 = vmul.f32 %v1196, %v1173
          %v1207 = vmul.f32 %v1199, %v1173
          %v1208 = vmul.f32 %v1202, %v1173
          %v1209 = vmul.f32 %v1205, %v1173
          %v1210 = vadd.f32 %v1206, 1e-12
          %v1211 = vadd.f32 %v1207, 1e-12
          %v1212 = vadd.f32 %v1208, 1e-12
          %v1213 = vadd.f32 %v1209, 1e-12
          %v1214 = vrsqrt.pop %v1210
          %v1215 = vmul.f32 %v1214, %v1210
          %v1216 = vmul.f32 %v1215, %v1214
          %v1217 = vmul.f32 0.5, %v1216
          %v1218 = vsub.f32 1.5, %v1217
          %v1219 = vmul.f32 %v1214, %v1218
          %vm1220 = vweird.f32 %v1210
          %vm1221 = vweird.f32 %v1214
          %vm1222 = vmor %vm1220, %vm1221
          %v1223 = vsel %vm1222, %v1214, %v1219
          %v1224 = vrsqrt.pop %v1211
          %v1225 = vmul.f32 %v1224, %v1211
          %v1226 = vmul.f32 %v1225, %v1224
          %v1227 = vmul.f32 0.5, %v1226
          %v1228 = vsub.f32 1.5, %v1227
          %v1229 = vmul.f32 %v1224, %v1228
          %vm1230 = vweird.f32 %v1211
          %vm1231 = vweird.f32 %v1224
          %vm1232 = vmor %vm1230, %vm1231
          %v1233 = vsel %vm1232, %v1224, %v1229
          %v1234 = vrsqrt.pop %v1212
          %v1235 = vmul.f32 %v1234, %v1212
          %v1236 = vmul.f32 %v1235, %v1234
          %v1237 = vmul.f32 0.5, %v1236
          %v1238 = vsub.f32 1.5, %v1237
          %v1239 = vmul.f32 %v1234, %v1238
          %vm1240 = vweird.f32 %v1212
          %vm1241 = vweird.f32 %v1234
          %vm1242 = vmor %vm1240, %vm1241
          %v1243 = vsel %vm1242, %v1234, %v1239
          %v1244 = vrsqrt.pop %v1213
          %v1245 = vmul.f32 %v1244, %v1213
          %v1246 = vmul.f32 %v1245, %v1244
          %v1247 = vmul.f32 0.5, %v1246
          %v1248 = vsub.f32 1.5, %v1247
          %v1249 = vmul.f32 %v1244, %v1248
          %vm1250 = vweird.f32 %v1213
          %vm1251 = vweird.f32 %v1244
          %vm1252 = vmor %vm1250, %vm1251
          %v1253 = vsel %vm1252, %v1244, %v1249
          %v1254 = vmul.f32 %v1178, %v1223
          %v1255 = vmul.f32 %v1179, %v1223
          %v1256 = vmul.f32 %v1180, %v1233
          %v1257 = vmul.f32 %v1181, %v1233
          %v1258 = vmul.f32 %v1182, %v1243
          %v1259 = vmul.f32 %v1183, %v1243
          %v1260 = vmul.f32 %v1184, %v1253
          %v1261 = vmul.f32 %v1185, %v1253
          %v1263 = vperm.slane %v1153, 0
          %v1264 = vperm.slane %v1153, 1
          %v1267 = vmul.f32 %v1254, %v1263
          %v1268 = vmul.f32 %v1255, %v1264
          %v1269 = vmul.f32 %v1256, %v1263
          %v1270 = vmul.f32 %v1257, %v1264
          %v1271 = vmul.f32 %v1258, %v1263
          %v1272 = vmul.f32 %v1259, %v1264
          %v1273 = vmul.f32 %v1260, %v1263
          %v1274 = vmul.f32 %v1261, %v1264
          %v1276 = vperm.slane %v1154, 0
          %v1277 = vperm.slane %v1154, 1
          %v1280 = vadd.f32 %v1267, %v1276
          %v1281 = vadd.f32 %v1268, %v1277
          %v1282 = vadd.f32 %v1269, %v1276
          %v1283 = vadd.f32 %v1270, %v1277
          %v1284 = vadd.f32 %v1271, %v1276
          %v1285 = vadd.f32 %v1272, %v1277
          %v1286 = vadd.f32 %v1273, %v1276
          %v1287 = vadd.f32 %v1274, %v1277
          %1288 = vst [vmem:[#allocation2] sm:$0xff] %v1280
          %1289 = vst [vmem:[#allocation2 + $0x8] sm:$0xff] %v1281
          %1290 = vst [vmem:[#allocation2 + $0x10] sm:$0xff] %v1282
          %1291 = vst [vmem:[#allocation2 + $0x18] sm:$0xff] %v1283
          %1292 = vst [vmem:[#allocation2 + $0x20] sm:$0xff] %v1284
          %1293 = vst [vmem:[#allocation2 + $0x28] sm:$0xff] %v1285
          %1294 = vst [vmem:[#allocation2 + $0x30] sm:$0xff] %v1286
          %1295 = vst [vmem:[#allocation2 + $0x38] sm:$0xff] %v1287
        $region152: #{multitask_bert_forward.1} parent=107 // pred_fallthru
          _
        %v1296 = vld [vmem:[#allocation2] sm:$0xff]
        %v1297 = vld [vmem:[#allocation2 + $0x8] sm:$0xff]
        %v1298 = vld [vmem:[#allocation2 + $0x10] sm:$0xff]
        %v1299 = vld [vmem:[#allocation2 + $0x18] sm:$0xff]
        %v1300 = vld [vmem:[#allocation2 + $0x20] sm:$0xff]
        %v1301 = vld [vmem:[#allocation2 + $0x28] sm:$0xff]
        %v1302 = vld [vmem:[#allocation2 + $0x30] sm:$0xff]
        %v1303 = vld [vmem:[#allocation2 + $0x38] sm:$0xff]
        %v1304 = vpack.c.bf16 %v1298, %v1296
        %v1305 = vpack.c.bf16 %v1299, %v1297
        %v1306 = vpack.c.bf16 %v1302, %v1300
        %v1307 = vpack.c.bf16 %v1303, %v1301
        %v1308 = vld [vmem:[%s926] sm:$0xff]
        %v1309 = vld [vmem:[%s926 + $0x8] sm:$0xff]
        %v1310 = vld [vmem:[%s926 + $0x10] sm:$0xff]
        %v1311 = vld [vmem:[%s926 + $0x18] sm:$0xff]
        %v1312 = vld [vmem:[%s926 + $0x20] sm:$0xff]
        %v1313 = vld [vmem:[%s926 + $0x28] sm:$0xff]
        %v1314 = vld [vmem:[%s926 + $0x30] sm:$0xff]
        %v1315 = vld [vmem:[%s926 + $0x38] sm:$0xff]
        %v1316 = vld [vmem:[%s926 + $0x40] sm:$0xff]
        %v1317 = vld [vmem:[%s926 + $0x48] sm:$0xff]
        %v1318 = vld [vmem:[%s926 + $0x50] sm:$0xff]
        %v1319 = vld [vmem:[%s926 + $0x58] sm:$0xff]
        %v1320 = vld [vmem:[%s926 + $0x60] sm:$0xff]
        %v1321 = vld [vmem:[%s926 + $0x68] sm:$0xff]
        %v1322 = vld [vmem:[%s926 + $0x70] sm:$0xff]
        %v1323 = vld [vmem:[%s926 + $0x78] sm:$0xff]
        %v1324 = vld [vmem:[%s926 + $0x80] sm:$0xff]
        %v1325 = vld [vmem:[%s926 + $0x88] sm:$0xff]
        %v1326 = vld [vmem:[%s926 + $0x90] sm:$0xff]
        %v1327 = vld [vmem:[%s926 + $0x98] sm:$0xff]
        %v1328 = vld [vmem:[%s926 + $0xa0] sm:$0xff]
        %v1329 = vld [vmem:[%s926 + $0xa8] sm:$0xff]
        %v1330 = vld [vmem:[%s926 + $0xb0] sm:$0xff]
        %v1331 = vld [vmem:[%s926 + $0xb8] sm:$0xff]
        %v1332 = vld [vmem:[%s926 + $0xc0] sm:$0xff]
        %v1333 = vld [vmem:[%s926 + $0xc8] sm:$0xff]
        %v1334 = vld [vmem:[%s926 + $0xd0] sm:$0xff]
        %v1335 = vld [vmem:[%s926 + $0xd8] sm:$0xff]
        %v1336 = vld [vmem:[%s926 + $0xe0] sm:$0xff]
        %v1337 = vld [vmem:[%s926 + $0xe8] sm:$0xff]
        %v1338 = vld [vmem:[%s926 + $0xf0] sm:$0xff]
        %v1339 = vld [vmem:[%s926 + $0xf8] sm:$0xff]
        %v1340 = vld [vmem:[%s926 + $0x100] sm:$0xff]
        %v1341 = vld [vmem:[%s926 + $0x108] sm:$0xff]
        %v1342 = vld [vmem:[%s926 + $0x110] sm:$0xff]
        %v1343 = vld [vmem:[%s926 + $0x118] sm:$0xff]
        %v1344 = vld [vmem:[%s926 + $0x120] sm:$0xff]
        %v1345 = vld [vmem:[%s926 + $0x128] sm:$0xff]
        %v1346 = vld [vmem:[%s926 + $0x130] sm:$0xff]
        %v1347 = vld [vmem:[%s926 + $0x138] sm:$0xff]
        %v1348 = vld [vmem:[%s926 + $0x140] sm:$0xff]
        %v1349 = vld [vmem:[%s926 + $0x148] sm:$0xff]
        %v1350 = vld [vmem:[%s926 + $0x150] sm:$0xff]
        %v1351 = vld [vmem:[%s926 + $0x158] sm:$0xff]
        %v1352 = vld [vmem:[%s926 + $0x160] sm:$0xff]
        %v1353 = vld [vmem:[%s926 + $0x168] sm:$0xff]
        %v1354 = vld [vmem:[%s926 + $0x170] sm:$0xff]
        %v1355 = vld [vmem:[%s926 + $0x178] sm:$0xff]
        %v1356 = vld [vmem:[%s926 + $0x180] sm:$0xff]
        %v1357 = vld [vmem:[%s926 + $0x188] sm:$0xff]
        %v1358 = vld [vmem:[%s926 + $0x190] sm:$0xff]
        %v1359 = vld [vmem:[%s926 + $0x198] sm:$0xff]
        %v1360 = vld [vmem:[%s926 + $0x1a0] sm:$0xff]
        %v1361 = vld [vmem:[%s926 + $0x1a8] sm:$0xff]
        %v1362 = vld [vmem:[%s926 + $0x1b0] sm:$0xff]
        %v1363 = vld [vmem:[%s926 + $0x1b8] sm:$0xff]
        %v1364 = vld [vmem:[%s926 + $0x1c0] sm:$0xff]
        %v1365 = vld [vmem:[%s926 + $0x1c8] sm:$0xff]
        %v1366 = vld [vmem:[%s926 + $0x1d0] sm:$0xff]
        %v1367 = vld [vmem:[%s926 + $0x1d8] sm:$0xff]
        %v1368 = vld [vmem:[%s926 + $0x1e0] sm:$0xff]
        %v1369 = vld [vmem:[%s926 + $0x1e8] sm:$0xff]
        %v1370 = vld [vmem:[%s926 + $0x1f0] sm:$0xff]
        %v1371 = vld [vmem:[%s926 + $0x1f8] sm:$0xff]
        %v1372 = vld [vmem:[%s926 + $0x200] sm:$0xff]
        %v1373 = vld [vmem:[%s926 + $0x208] sm:$0xff]
        %v1374 = vld [vmem:[%s926 + $0x210] sm:$0xff]
        %v1375 = vld [vmem:[%s926 + $0x218] sm:$0xff]
        %v1376 = vld [vmem:[%s926 + $0x220] sm:$0xff]
        %v1377 = vld [vmem:[%s926 + $0x228] sm:$0xff]
        %v1378 = vld [vmem:[%s926 + $0x230] sm:$0xff]
        %v1379 = vld [vmem:[%s926 + $0x238] sm:$0xff]
        %v1380 = vld [vmem:[%s926 + $0x240] sm:$0xff]
        %v1381 = vld [vmem:[%s926 + $0x248] sm:$0xff]
        %v1382 = vld [vmem:[%s926 + $0x250] sm:$0xff]
        %v1383 = vld [vmem:[%s926 + $0x258] sm:$0xff]
        %v1384 = vld [vmem:[%s926 + $0x260] sm:$0xff]
        %v1385 = vld [vmem:[%s926 + $0x268] sm:$0xff]
        %v1386 = vld [vmem:[%s926 + $0x270] sm:$0xff]
        %v1387 = vld [vmem:[%s926 + $0x278] sm:$0xff]
        %v1388 = vld [vmem:[%s926 + $0x280] sm:$0xff]
        %v1389 = vld [vmem:[%s926 + $0x288] sm:$0xff]
        %v1390 = vld [vmem:[%s926 + $0x290] sm:$0xff]
        %v1391 = vld [vmem:[%s926 + $0x298] sm:$0xff]
        %v1392 = vld [vmem:[%s926 + $0x2a0] sm:$0xff]
        %v1393 = vld [vmem:[%s926 + $0x2a8] sm:$0xff]
        %v1394 = vld [vmem:[%s926 + $0x2b0] sm:$0xff]
        %v1395 = vld [vmem:[%s926 + $0x2b8] sm:$0xff]
        %v1396 = vld [vmem:[%s926 + $0x2c0] sm:$0xff]
        %v1397 = vld [vmem:[%s926 + $0x2c8] sm:$0xff]
        %v1398 = vld [vmem:[%s926 + $0x2d0] sm:$0xff]
        %v1399 = vld [vmem:[%s926 + $0x2d8] sm:$0xff]
        %v1400 = vld [vmem:[%s926 + $0x2e0] sm:$0xff]
        %v1401 = vld [vmem:[%s926 + $0x2e8] sm:$0xff]
        %v1402 = vld [vmem:[%s926 + $0x2f0] sm:$0xff]
        %v1403 = vld [vmem:[%s926 + $0x2f8] sm:$0xff]
        %v1404 = vld [vmem:[%s1092] sm:$0x3f]
        %v1406 = vperm.slane %v1404, 0
        %v1407 = vperm.slane %v1404, 1
        %v1408 = vperm.slane %v1404, 2
        %v1409 = vperm.slane %v1404, 3
        %v1410 = vperm.slane %v1404, 4
        %v1411 = vperm.slane %v1404, 5
        %v1514 = vunpack.c.l.b16 %v1308
        %v1515 = vunpack.c.h.b16 %v1308
        %v1516 = vunpack.c.l.b16 %v1309
        %v1517 = vunpack.c.h.b16 %v1309
        %v1518 = vunpack.c.l.b16 %v1310
        %v1519 = vunpack.c.h.b16 %v1310
        %v1520 = vunpack.c.l.b16 %v1311
        %v1521 = vunpack.c.h.b16 %v1311
        %v1522 = vunpack.c.l.b16 %v1312
        %v1523 = vunpack.c.h.b16 %v1312
        %v1524 = vunpack.c.l.b16 %v1313
        %v1525 = vunpack.c.h.b16 %v1313
        %v1526 = vunpack.c.l.b16 %v1314
        %v1527 = vunpack.c.h.b16 %v1314
        %v1528 = vunpack.c.l.b16 %v1315
        %v1529 = vunpack.c.h.b16 %v1315
        %v1530 = vunpack.c.l.b16 %v1316
        %v1531 = vunpack.c.h.b16 %v1316
        %v1532 = vunpack.c.l.b16 %v1317
        %v1533 = vunpack.c.h.b16 %v1317
        %v1534 = vunpack.c.l.b16 %v1318
        %v1535 = vunpack.c.h.b16 %v1318
        %v1536 = vunpack.c.l.b16 %v1319
        %v1537 = vunpack.c.h.b16 %v1319
        %v1538 = vunpack.c.l.b16 %v1320
        %v1539 = vunpack.c.h.b16 %v1320
        %v1540 = vunpack.c.l.b16 %v1321
        %v1541 = vunpack.c.h.b16 %v1321
        %v1542 = vunpack.c.l.b16 %v1322
        %v1543 = vunpack.c.h.b16 %v1322
        %v1544 = vunpack.c.l.b16 %v1323
        %v1545 = vunpack.c.h.b16 %v1323
        %v1546 = vunpack.c.l.b16 %v1324
        %v1547 = vunpack.c.h.b16 %v1324
        %v1548 = vunpack.c.l.b16 %v1325
        %v1549 = vunpack.c.h.b16 %v1325
        %v1550 = vunpack.c.l.b16 %v1326
        %v1551 = vunpack.c.h.b16 %v1326
        %v1552 = vunpack.c.l.b16 %v1327
        %v1553 = vunpack.c.h.b16 %v1327
        %v1554 = vunpack.c.l.b16 %v1328
        %v1555 = vunpack.c.h.b16 %v1328
        %v1556 = vunpack.c.l.b16 %v1329
        %v1557 = vunpack.c.h.b16 %v1329
        %v1558 = vunpack.c.l.b16 %v1330
        %v1559 = vunpack.c.h.b16 %v1330
        %v1560 = vunpack.c.l.b16 %v1331
        %v1561 = vunpack.c.h.b16 %v1331
        %v1562 = vunpack.c.l.b16 %v1332
        %v1563 = vunpack.c.h.b16 %v1332
        %v1564 = vunpack.c.l.b16 %v1333
        %v1565 = vunpack.c.h.b16 %v1333
        %v1566 = vunpack.c.l.b16 %v1334
        %v1567 = vunpack.c.h.b16 %v1334
        %v1568 = vunpack.c.l.b16 %v1335
        %v1569 = vunpack.c.h.b16 %v1335
        %v1570 = vunpack.c.l.b16 %v1336
        %v1571 = vunpack.c.h.b16 %v1336
        %v1572 = vunpack.c.l.b16 %v1337
        %v1573 = vunpack.c.h.b16 %v1337
        %v1574 = vunpack.c.l.b16 %v1338
        %v1575 = vunpack.c.h.b16 %v1338
        %v1576 = vunpack.c.l.b16 %v1339
        %v1577 = vunpack.c.h.b16 %v1339
        %v1578 = vunpack.c.l.b16 %v1340
        %v1579 = vunpack.c.h.b16 %v1340
        %v1580 = vunpack.c.l.b16 %v1341
        %v1581 = vunpack.c.h.b16 %v1341
        %v1582 = vunpack.c.l.b16 %v1342
        %v1583 = vunpack.c.h.b16 %v1342
        %v1584 = vunpack.c.l.b16 %v1343
        %v1585 = vunpack.c.h.b16 %v1343
        %v1586 = vunpack.c.l.b16 %v1344
        %v1587 = vunpack.c.h.b16 %v1344
        %v1588 = vunpack.c.l.b16 %v1345
        %v1589 = vunpack.c.h.b16 %v1345
        %v1590 = vunpack.c.l.b16 %v1346
        %v1591 = vunpack.c.h.b16 %v1346
        %v1592 = vunpack.c.l.b16 %v1347
        %v1593 = vunpack.c.h.b16 %v1347
        %v1594 = vunpack.c.l.b16 %v1348
        %v1595 = vunpack.c.h.b16 %v1348
        %v1596 = vunpack.c.l.b16 %v1349
        %v1597 = vunpack.c.h.b16 %v1349
        %v1598 = vunpack.c.l.b16 %v1350
        %v1599 = vunpack.c.h.b16 %v1350
        %v1600 = vunpack.c.l.b16 %v1351
        %v1601 = vunpack.c.h.b16 %v1351
        %v1602 = vunpack.c.l.b16 %v1352
        %v1603 = vunpack.c.h.b16 %v1352
        %v1604 = vunpack.c.l.b16 %v1353
        %v1605 = vunpack.c.h.b16 %v1353
        %v1606 = vunpack.c.l.b16 %v1354
        %v1607 = vunpack.c.h.b16 %v1354
        %v1608 = vunpack.c.l.b16 %v1355
        %v1609 = vunpack.c.h.b16 %v1355
        %v1610 = vunpack.c.l.b16 %v1356
        %v1611 = vunpack.c.h.b16 %v1356
        %v1612 = vunpack.c.l.b16 %v1357
        %v1613 = vunpack.c.h.b16 %v1357
        %v1614 = vunpack.c.l.b16 %v1358
        %v1615 = vunpack.c.h.b16 %v1358
        %v1616 = vunpack.c.l.b16 %v1359
        %v1617 = vunpack.c.h.b16 %v1359
        %v1618 = vunpack.c.l.b16 %v1360
        %v1619 = vunpack.c.h.b16 %v1360
        %v1620 = vunpack.c.l.b16 %v1361
        %v1621 = vunpack.c.h.b16 %v1361
        %v1622 = vunpack.c.l.b16 %v1362
        %v1623 = vunpack.c.h.b16 %v1362
        %v1624 = vunpack.c.l.b16 %v1363
        %v1625 = vunpack.c.h.b16 %v1363
        %v1626 = vunpack.c.l.b16 %v1364
        %v1627 = vunpack.c.h.b16 %v1364
        %v1628 = vunpack.c.l.b16 %v1365
        %v1629 = vunpack.c.h.b16 %v1365
        %v1630 = vunpack.c.l.b16 %v1366
        %v1631 = vunpack.c.h.b16 %v1366
        %v1632 = vunpack.c.l.b16 %v1367
        %v1633 = vunpack.c.h.b16 %v1367
        %v1634 = vunpack.c.l.b16 %v1368
        %v1635 = vunpack.c.h.b16 %v1368
        %v1636 = vunpack.c.l.b16 %v1369
        %v1637 = vunpack.c.h.b16 %v1369
        %v1638 = vunpack.c.l.b16 %v1370
        %v1639 = vunpack.c.h.b16 %v1370
        %v1640 = vunpack.c.l.b16 %v1371
        %v1641 = vunpack.c.h.b16 %v1371
        %v1642 = vunpack.c.l.b16 %v1372
        %v1643 = vunpack.c.h.b16 %v1372
        %v1644 = vunpack.c.l.b16 %v1373
        %v1645 = vunpack.c.h.b16 %v1373
        %v1646 = vunpack.c.l.b16 %v1374
        %v1647 = vunpack.c.h.b16 %v1374
        %v1648 = vunpack.c.l.b16 %v1375
        %v1649 = vunpack.c.h.b16 %v1375
        %v1650 = vunpack.c.l.b16 %v1376
        %v1651 = vunpack.c.h.b16 %v1376
        %v1652 = vunpack.c.l.b16 %v1377
        %v1653 = vunpack.c.h.b16 %v1377
        %v1654 = vunpack.c.l.b16 %v1378
        %v1655 = vunpack.c.h.b16 %v1378
        %v1656 = vunpack.c.l.b16 %v1379
        %v1657 = vunpack.c.h.b16 %v1379
        %v1658 = vunpack.c.l.b16 %v1380
        %v1659 = vunpack.c.h.b16 %v1380
        %v1660 = vunpack.c.l.b16 %v1381
        %v1661 = vunpack.c.h.b16 %v1381
        %v1662 = vunpack.c.l.b16 %v1382
        %v1663 = vunpack.c.h.b16 %v1382
        %v1664 = vunpack.c.l.b16 %v1383
        %v1665 = vunpack.c.h.b16 %v1383
        %v1666 = vunpack.c.l.b16 %v1384
        %v1667 = vunpack.c.h.b16 %v1384
        %v1668 = vunpack.c.l.b16 %v1385
        %v1669 = vunpack.c.h.b16 %v1385
        %v1670 = vunpack.c.l.b16 %v1386
        %v1671 = vunpack.c.h.b16 %v1386
        %v1672 = vunpack.c.l.b16 %v1387
        %v1673 = vunpack.c.h.b16 %v1387
        %v1674 = vunpack.c.l.b16 %v1388
        %v1675 = vunpack.c.h.b16 %v1388
        %v1676 = vunpack.c.l.b16 %v1389
        %v1677 = vunpack.c.h.b16 %v1389
        %v1678 = vunpack.c.l.b16 %v1390
        %v1679 = vunpack.c.h.b16 %v1390
        %v1680 = vunpack.c.l.b16 %v1391
        %v1681 = vunpack.c.h.b16 %v1391
        %v1682 = vunpack.c.l.b16 %v1392
        %v1683 = vunpack.c.h.b16 %v1392
        %v1684 = vunpack.c.l.b16 %v1393
        %v1685 = vunpack.c.h.b16 %v1393
        %v1686 = vunpack.c.l.b16 %v1394
        %v1687 = vunpack.c.h.b16 %v1394
        %v1688 = vunpack.c.l.b16 %v1395
        %v1689 = vunpack.c.h.b16 %v1395
        %v1690 = vunpack.c.l.b16 %v1396
        %v1691 = vunpack.c.h.b16 %v1396
        %v1692 = vunpack.c.l.b16 %v1397
        %v1693 = vunpack.c.h.b16 %v1397
        %v1694 = vunpack.c.l.b16 %v1398
        %v1695 = vunpack.c.h.b16 %v1398
        %v1696 = vunpack.c.l.b16 %v1399
        %v1697 = vunpack.c.h.b16 %v1399
        %v1698 = vunpack.c.l.b16 %v1400
        %v1699 = vunpack.c.h.b16 %v1400
        %v1700 = vunpack.c.l.b16 %v1401
        %v1701 = vunpack.c.h.b16 %v1401
        %v1702 = vunpack.c.l.b16 %v1402
        %v1703 = vunpack.c.h.b16 %v1402
        %v1704 = vunpack.c.l.b16 %v1403
        %v1705 = vunpack.c.h.b16 %v1403
        %v1706 = vpack.c.b16 %v1520, %v1514
        %v1707 = vpack.c.b16 %v1521, %v1515
        %v1708 = vpack.c.b16 %v1522, %v1516
        %v1709 = vpack.c.b16 %v1523, %v1517
        %v1710 = vpack.c.b16 %v1524, %v1518
        %v1711 = vpack.c.b16 %v1525, %v1519
        %v1712 = vpack.c.b16 %v1532, %v1526
        %v1713 = vpack.c.b16 %v1533, %v1527
        %v1714 = vpack.c.b16 %v1534, %v1528
        %v1715 = vpack.c.b16 %v1535, %v1529
        %v1716 = vpack.c.b16 %v1536, %v1530
        %v1717 = vpack.c.b16 %v1537, %v1531
        %v1718 = vpack.c.b16 %v1544, %v1538
        %v1719 = vpack.c.b16 %v1545, %v1539
        %v1720 = vpack.c.b16 %v1546, %v1540
        %v1721 = vpack.c.b16 %v1547, %v1541
        %v1722 = vpack.c.b16 %v1548, %v1542
        %v1723 = vpack.c.b16 %v1549, %v1543
        %v1724 = vpack.c.b16 %v1556, %v1550
        %v1725 = vpack.c.b16 %v1557, %v1551
        %v1726 = vpack.c.b16 %v1558, %v1552
        %v1727 = vpack.c.b16 %v1559, %v1553
        %v1728 = vpack.c.b16 %v1560, %v1554
        %v1729 = vpack.c.b16 %v1561, %v1555
        %v1730 = vpack.c.b16 %v1568, %v1562
        %v1731 = vpack.c.b16 %v1569, %v1563
        %v1732 = vpack.c.b16 %v1570, %v1564
        %v1733 = vpack.c.b16 %v1571, %v1565
        %v1734 = vpack.c.b16 %v1572, %v1566
        %v1735 = vpack.c.b16 %v1573, %v1567
        %v1736 = vpack.c.b16 %v1580, %v1574
        %v1737 = vpack.c.b16 %v1581, %v1575
        %v1738 = vpack.c.b16 %v1582, %v1576
        %v1739 = vpack.c.b16 %v1583, %v1577
        %v1740 = vpack.c.b16 %v1584, %v1578
        %v1741 = vpack.c.b16 %v1585, %v1579
        %v1742 = vpack.c.b16 %v1592, %v1586
        %v1743 = vpack.c.b16 %v1593, %v1587
        %v1744 = vpack.c.b16 %v1594, %v1588
        %v1745 = vpack.c.b16 %v1595, %v1589
        %v1746 = vpack.c.b16 %v1596, %v1590
        %v1747 = vpack.c.b16 %v1597, %v1591
        %v1748 = vpack.c.b16 %v1604, %v1598
        %v1749 = vpack.c.b16 %v1605, %v1599
        %v1750 = vpack.c.b16 %v1606, %v1600
        %v1751 = vpack.c.b16 %v1607, %v1601
        %v1752 = vpack.c.b16 %v1608, %v1602
        %v1753 = vpack.c.b16 %v1609, %v1603
        %v1754 = vpack.c.b16 %v1616, %v1610
        %v1755 = vpack.c.b16 %v1617, %v1611
        %v1756 = vpack.c.b16 %v1618, %v1612
        %v1757 = vpack.c.b16 %v1619, %v1613
        %v1758 = vpack.c.b16 %v1620, %v1614
        %v1759 = vpack.c.b16 %v1621, %v1615
        %v1760 = vpack.c.b16 %v1628, %v1622
        %v1761 = vpack.c.b16 %v1629, %v1623
        %v1762 = vpack.c.b16 %v1630, %v1624
        %v1763 = vpack.c.b16 %v1631, %v1625
        %v1764 = vpack.c.b16 %v1632, %v1626
        %v1765 = vpack.c.b16 %v1633, %v1627
        %v1766 = vpack.c.b16 %v1640, %v1634
        %v1767 = vpack.c.b16 %v1641, %v1635
        %v1768 = vpack.c.b16 %v1642, %v1636
        %v1769 = vpack.c.b16 %v1643, %v1637
        %v1770 = vpack.c.b16 %v1644, %v1638
        %v1771 = vpack.c.b16 %v1645, %v1639
        %v1772 = vpack.c.b16 %v1652, %v1646
        %v1773 = vpack.c.b16 %v1653, %v1647
        %v1774 = vpack.c.b16 %v1654, %v1648
        %v1775 = vpack.c.b16 %v1655, %v1649
        %v1776 = vpack.c.b16 %v1656, %v1650
        %v1777 = vpack.c.b16 %v1657, %v1651
        %v1778 = vpack.c.b16 %v1664, %v1658
        %v1779 = vpack.c.b16 %v1665, %v1659
        %v1780 = vpack.c.b16 %v1666, %v1660
        %v1781 = vpack.c.b16 %v1667, %v1661
        %v1782 = vpack.c.b16 %v1668, %v1662
        %v1783 = vpack.c.b16 %v1669, %v1663
        %v1784 = vpack.c.b16 %v1676, %v1670
        %v1785 = vpack.c.b16 %v1677, %v1671
        %v1786 = vpack.c.b16 %v1678, %v1672
        %v1787 = vpack.c.b16 %v1679, %v1673
        %v1788 = vpack.c.b16 %v1680, %v1674
        %v1789 = vpack.c.b16 %v1681, %v1675
        %v1790 = vpack.c.b16 %v1688, %v1682
        %v1791 = vpack.c.b16 %v1689, %v1683
        %v1792 = vpack.c.b16 %v1690, %v1684
        %v1793 = vpack.c.b16 %v1691, %v1685
        %v1794 = vpack.c.b16 %v1692, %v1686
        %v1795 = vpack.c.b16 %v1693, %v1687
        %v1796 = vpack.c.b16 %v1700, %v1694
        %v1797 = vpack.c.b16 %v1701, %v1695
        %v1798 = vpack.c.b16 %v1702, %v1696
        %v1799 = vpack.c.b16 %v1703, %v1697
        %v1800 = vpack.c.b16 %v1704, %v1698
        %v1801 = vpack.c.b16 %v1705, %v1699
        %1898 = vmatpush.bf16.msra.mxu0 %v1748
        %1899 = vmatpush.bf16.msra.mxu0 %v1742
        %1900 = vmatpush.bf16.msra.mxu0 %v1736
        %1901 = vmatpush.bf16.msra.mxu0 %v1730
        %1902 = vmatpush.bf16.msra.mxu0 %v1724
        %1903 = vmatpush.bf16.msra.mxu0 %v1718
        %1904 = vmatpush.bf16.msra.mxu0 %v1712
        %1905 = vmatpush.bf16.msra.mxu0 %v1706
        %1906 = vmatmul.bf16.gmra.mxu0 %v1304
        %v1907 = vpop.f32.mrf.mxu0
        %v1908 = vadd.f32 %v1406, %v1907
        %v1909 = vpop.f32.mrf.mxu0
        %v1910 = vadd.f32 %v1406, %v1909
        %1911 = vmatmul.bf16.gmra.mxu0 %v1306
        %v1912 = vpop.f32.mrf.mxu0
        %v1913 = vadd.f32 %v1406, %v1912
        %v1914 = vpop.f32.mrf.mxu0
        %v1915 = vadd.f32 %v1406, %v1914
        %1916 = vdwg.mxu0
        %1917 = vmatpush.bf16.msra.mxu0 %v1796
        %1918 = vmatpush.bf16.msra.mxu0 %v1790
        %1919 = vmatpush.bf16.msra.mxu0 %v1784
        %1920 = vmatpush.bf16.msra.mxu0 %v1778
        %1921 = vmatpush.bf16.msra.mxu0 %v1772
        %1922 = vmatpush.bf16.msra.mxu0 %v1766
        %1923 = vmatpush.bf16.msra.mxu0 %v1760
        %1924 = vmatpush.bf16.msra.mxu0 %v1754
        %1925 = vmatmul.bf16.gmra.mxu0 %v1305
        %v1926 = vpop.f32.mrf.mxu0
        %v1927 = vadd.f32 %v1908, %v1926
        %v1928 = vpop.f32.mrf.mxu0
        %v1929 = vadd.f32 %v1910, %v1928
        %1930 = vmatmul.bf16.gmra.mxu0 %v1307
        %v1931 = vpop.f32.mrf.mxu0
        %v1932 = vadd.f32 %v1913, %v1931
        %v1933 = vpop.f32.mrf.mxu0
        %v1934 = vadd.f32 %v1915, %v1933
        %1935 = vdwg.mxu0
        %1936 = vmatpush.bf16.msra.mxu0 %v1749
        %1937 = vmatpush.bf16.msra.mxu0 %v1743
        %1938 = vmatpush.bf16.msra.mxu0 %v1737
        %1939 = vmatpush.bf16.msra.mxu0 %v1731
        %1940 = vmatpush.bf16.msra.mxu0 %v1725
        %1941 = vmatpush.bf16.msra.mxu0 %v1719
        %1942 = vmatpush.bf16.msra.mxu0 %v1713
        %1943 = vmatpush.bf16.msra.mxu0 %v1707
        %1944 = vmatmul.bf16.gmra.mxu0 %v1304
        %v1945 = vpop.f32.mrf.mxu0
        %v1946 = vadd.f32 %v1407, %v1945
        %v1947 = vpop.f32.mrf.mxu0
        %v1948 = vadd.f32 %v1407, %v1947
        %1949 = vmatmul.bf16.gmra.mxu0 %v1306
        %v1950 = vpop.f32.mrf.mxu0
        %v1951 = vadd.f32 %v1407, %v1950
        %v1952 = vpop.f32.mrf.mxu0
        %v1953 = vadd.f32 %v1407, %v1952
        %1954 = vdwg.mxu0
        %1955 = vmatpush.bf16.msra.mxu0 %v1797
        %1956 = vmatpush.bf16.msra.mxu0 %v1791
        %1957 = vmatpush.bf16.msra.mxu0 %v1785
        %1958 = vmatpush.bf16.msra.mxu0 %v1779
        %1959 = vmatpush.bf16.msra.mxu0 %v1773
        %1960 = vmatpush.bf16.msra.mxu0 %v1767
        %1961 = vmatpush.bf16.msra.mxu0 %v1761
        %1962 = vmatpush.bf16.msra.mxu0 %v1755
        %1963 = vmatmul.bf16.gmra.mxu0 %v1305
        %v1964 = vpop.f32.mrf.mxu0
        %v1965 = vadd.f32 %v1946, %v1964
        %v1966 = vpop.f32.mrf.mxu0
        %v1967 = vadd.f32 %v1948, %v1966
        %1968 = vmatmul.bf16.gmra.mxu0 %v1307
        %v1969 = vpop.f32.mrf.mxu0
        %v1970 = vadd.f32 %v1951, %v1969
        %v1971 = vpop.f32.mrf.mxu0
        %v1972 = vadd.f32 %v1953, %v1971
        %1973 = vdwg.mxu0
        %1974 = vmatpush.bf16.msra.mxu0 %v1750
        %1975 = vmatpush.bf16.msra.mxu0 %v1744
        %1976 = vmatpush.bf16.msra.mxu0 %v1738
        %1977 = vmatpush.bf16.msra.mxu0 %v1732
        %1978 = vmatpush.bf16.msra.mxu0 %v1726
        %1979 = vmatpush.bf16.msra.mxu0 %v1720
        %1980 = vmatpush.bf16.msra.mxu0 %v1714
        %1981 = vmatpush.bf16.msra.mxu0 %v1708
        %1982 = vmatmul.bf16.gmra.mxu0 %v1304
        %v1983 = vpop.f32.mrf.mxu0
        %v1984 = vadd.f32 %v1408, %v1983
        %v1985 = vpop.f32.mrf.mxu0
        %v1986 = vadd.f32 %v1408, %v1985
        %1987 = vmatmul.bf16.gmra.mxu0 %v1306
        %v1988 = vpop.f32.mrf.mxu0
        %v1989 = vadd.f32 %v1408, %v1988
        %v1990 = vpop.f32.mrf.mxu0
        %v1991 = vadd.f32 %v1408, %v1990
        %1992 = vdwg.mxu0
        %1993 = vmatpush.bf16.msra.mxu0 %v1798
        %1994 = vmatpush.bf16.msra.mxu0 %v1792
        %1995 = vmatpush.bf16.msra.mxu0 %v1786
        %1996 = vmatpush.bf16.msra.mxu0 %v1780
        %1997 = vmatpush.bf16.msra.mxu0 %v1774
        %1998 = vmatpush.bf16.msra.mxu0 %v1768
        %1999 = vmatpush.bf16.msra.mxu0 %v1762
        %2000 = vmatpush.bf16.msra.mxu0 %v1756
        %2001 = vmatmul.bf16.gmra.mxu0 %v1305
        %v2002 = vpop.f32.mrf.mxu0
        %v2003 = vadd.f32 %v1984, %v2002
        %v2004 = vpop.f32.mrf.mxu0
        %v2005 = vadd.f32 %v1986, %v2004
        %2006 = vmatmul.bf16.gmra.mxu0 %v1307
        %v2007 = vpop.f32.mrf.mxu0
        %v2008 = vadd.f32 %v1989, %v2007
        %v2009 = vpop.f32.mrf.mxu0
        %v2010 = vadd.f32 %v1991, %v2009
        %2011 = vdwg.mxu0
        %2012 = vmatpush.bf16.msra.mxu0 %v1751
        %2013 = vmatpush.bf16.msra.mxu0 %v1745
        %2014 = vmatpush.bf16.msra.mxu0 %v1739
        %2015 = vmatpush.bf16.msra.mxu0 %v1733
        %2016 = vmatpush.bf16.msra.mxu0 %v1727
        %2017 = vmatpush.bf16.msra.mxu0 %v1721
        %2018 = vmatpush.bf16.msra.mxu0 %v1715
        %2019 = vmatpush.bf16.msra.mxu0 %v1709
        %2020 = vmatmul.bf16.gmra.mxu0 %v1304
        %v2021 = vpop.f32.mrf.mxu0
        %v2022 = vadd.f32 %v1409, %v2021
        %v2023 = vpop.f32.mrf.mxu0
        %v2024 = vadd.f32 %v1409, %v2023
        %2025 = vmatmul.bf16.gmra.mxu0 %v1306
        %v2026 = vpop.f32.mrf.mxu0
        %v2027 = vadd.f32 %v1409, %v2026
        %v2028 = vpop.f32.mrf.mxu0
        %v2029 = vadd.f32 %v1409, %v2028
        %2030 = vdwg.mxu0
        %2031 = vmatpush.bf16.msra.mxu0 %v1799
        %2032 = vmatpush.bf16.msra.mxu0 %v1793
        %2033 = vmatpush.bf16.msra.mxu0 %v1787
        %2034 = vmatpush.bf16.msra.mxu0 %v1781
        %2035 = vmatpush.bf16.msra.mxu0 %v1775
        %2036 = vmatpush.bf16.msra.mxu0 %v1769
        %2037 = vmatpush.bf16.msra.mxu0 %v1763
        %2038 = vmatpush.bf16.msra.mxu0 %v1757
        %2039 = vmatmul.bf16.gmra.mxu0 %v1305
        %v2040 = vpop.f32.mrf.mxu0
        %v2041 = vadd.f32 %v2022, %v2040
        %v2042 = vpop.f32.mrf.mxu0
        %v2043 = vadd.f32 %v2024, %v2042
        %2044 = vmatmul.bf16.gmra.mxu0 %v1307
        %v2045 = vpop.f32.mrf.mxu0
        %v2046 = vadd.f32 %v2027, %v2045
        %v2047 = vpop.f32.mrf.mxu0
        %v2048 = vadd.f32 %v2029, %v2047
        %2049 = vdwg.mxu0
        %2050 = vmatpush.bf16.msra.mxu0 %v1752
        %2051 = vmatpush.bf16.msra.mxu0 %v1746
        %2052 = vmatpush.bf16.msra.mxu0 %v1740
        %2053 = vmatpush.bf16.msra.mxu0 %v1734
        %2054 = vmatpush.bf16.msra.mxu0 %v1728
        %2055 = vmatpush.bf16.msra.mxu0 %v1722
        %2056 = vmatpush.bf16.msra.mxu0 %v1716
        %2057 = vmatpush.bf16.msra.mxu0 %v1710
        %2058 = vmatmul.bf16.gmra.mxu0 %v1304
        %v2059 = vpop.f32.mrf.mxu0
        %v2060 = vadd.f32 %v1410, %v2059
        %v2061 = vpop.f32.mrf.mxu0
        %v2062 = vadd.f32 %v1410, %v2061
        %2063 = vmatmul.bf16.gmra.mxu0 %v1306
        %v2064 = vpop.f32.mrf.mxu0
        %v2065 = vadd.f32 %v1410, %v2064
        %v2066 = vpop.f32.mrf.mxu0
        %v2067 = vadd.f32 %v1410, %v2066
        %2068 = vdwg.mxu0
        %2069 = vmatpush.bf16.msra.mxu0 %v1800
        %2070 = vmatpush.bf16.msra.mxu0 %v1794
        %2071 = vmatpush.bf16.msra.mxu0 %v1788
        %2072 = vmatpush.bf16.msra.mxu0 %v1782
        %2073 = vmatpush.bf16.msra.mxu0 %v1776
        %2074 = vmatpush.bf16.msra.mxu0 %v1770
        %2075 = vmatpush.bf16.msra.mxu0 %v1764
        %2076 = vmatpush.bf16.msra.mxu0 %v1758
        %2077 = vmatmul.bf16.gmra.mxu0 %v1305
        %v2078 = vpop.f32.mrf.mxu0
        %v2079 = vadd.f32 %v2060, %v2078
        %v2080 = vpop.f32.mrf.mxu0
        %v2081 = vadd.f32 %v2062, %v2080
        %2082 = vmatmul.bf16.gmra.mxu0 %v1307
        %v2083 = vpop.f32.mrf.mxu0
        %v2084 = vadd.f32 %v2065, %v2083
        %v2085 = vpop.f32.mrf.mxu0
        %v2086 = vadd.f32 %v2067, %v2085
        %2087 = vdwg.mxu0
        %2088 = vmatpush.bf16.msra.mxu0 %v1753
        %2089 = vmatpush.bf16.msra.mxu0 %v1747
        %2090 = vmatpush.bf16.msra.mxu0 %v1741
        %2091 = vmatpush.bf16.msra.mxu0 %v1735
        %2092 = vmatpush.bf16.msra.mxu0 %v1729
        %2093 = vmatpush.bf16.msra.mxu0 %v1723
        %2094 = vmatpush.bf16.msra.mxu0 %v1717
        %2095 = vmatpush.bf16.msra.mxu0 %v1711
        %2096 = vmatmul.bf16.gmra.mxu0 %v1304
        %v2097 = vpop.f32.mrf.mxu0
        %v2098 = vadd.f32 %v1411, %v2097
        %v2099 = vpop.f32.mrf.mxu0
        %v2100 = vadd.f32 %v1411, %v2099
        %2101 = vmatmul.bf16.gmra.mxu0 %v1306
        %v2102 = vpop.f32.mrf.mxu0
        %v2103 = vadd.f32 %v1411, %v2102
        %v2104 = vpop.f32.mrf.mxu0
        %v2105 = vadd.f32 %v1411, %v2104
        %2106 = vdwg.mxu0
        %2107 = vmatpush.bf16.msra.mxu0 %v1801
        %2108 = vmatpush.bf16.msra.mxu0 %v1795
        %2109 = vmatpush.bf16.msra.mxu0 %v1789
        %2110 = vmatpush.bf16.msra.mxu0 %v1783
        %2111 = vmatpush.bf16.msra.mxu0 %v1777
        %2112 = vmatpush.bf16.msra.mxu0 %v1771
        %2113 = vmatpush.bf16.msra.mxu0 %v1765
        %2114 = vmatpush.bf16.msra.mxu0 %v1759
        %2115 = vmatmul.bf16.gmra.mxu0 %v1305
        %v2116 = vpop.f32.mrf.mxu0
        %v2117 = vadd.f32 %v2098, %v2116
        %v2118 = vpop.f32.mrf.mxu0
        %v2119 = vadd.f32 %v2100, %v2118
        %2120 = vmatmul.bf16.gmra.mxu0 %v1307
        %v2121 = vpop.f32.mrf.mxu0
        %v2122 = vadd.f32 %v2103, %v2121
        %v2123 = vpop.f32.mrf.mxu0
        %v2124 = vadd.f32 %v2105, %v2123
        %2125 = vdwg.mxu0
        %v2126 = vpack.c.bf16 %v1965, %v1927
        %v2127 = vpack.c.bf16 %v2041, %v2003
        %v2128 = vpack.c.bf16 %v2117, %v2079
        %v2129 = vpack.c.bf16 %v1967, %v1929
        %v2130 = vpack.c.bf16 %v2043, %v2005
        %v2131 = vpack.c.bf16 %v2119, %v2081
        %v2132 = vpack.c.bf16 %v1970, %v1932
        %v2133 = vpack.c.bf16 %v2046, %v2008
        %v2134 = vpack.c.bf16 %v2122, %v2084
        %v2135 = vpack.c.bf16 %v1972, %v1934
        %v2136 = vpack.c.bf16 %v2048, %v2010
        %v2137 = vpack.c.bf16 %v2124, %v2086
        %v2138 = vld [vmem:[%s5] sm:$0xff]
        %v2139 = vld [vmem:[%s5 + $0x8] sm:$0xff]
        %v2140 = vld [vmem:[%s5 + $0x10] sm:$0xff]
        %v2141 = vld [vmem:[%s5 + $0x18] sm:$0xff]
        %v2146 = vunpack.c.l.b16 %v2126
        %v2147 = vunpack.c.l.b16 %v2129
        %v2148 = vunpack.c.l.b16 %v2132
        %v2149 = vunpack.c.l.b16 %v2135
        %v2150 = vpack.c.b16 %v2147, %v2146
        %v2151 = vpack.c.b16 %v2149, %v2148
        %v2158 = vunpack.c.l.b16 %v2127
        %v2159 = vunpack.c.l.b16 %v2130
        %v2160 = vunpack.c.l.b16 %v2133
        %v2161 = vunpack.c.l.b16 %v2136
        %v2162 = vpack.c.b16 %v2159, %v2158
        %v2163 = vpack.c.b16 %v2161, %v2160
        %2166 = vmatpush.bf16.xpose.msra.mxu0 0
        %2167 = vmatpush.bf16.xpose.msra.mxu0 0
        %2168 = vmatpush.bf16.xpose.msra.mxu0 0
        %2169 = vmatpush.bf16.xpose.msra.mxu0 0
        %2170 = vmatpush.bf16.xpose.msra.mxu0 0
        %2171 = vmatpush.bf16.xpose.msra.mxu0 0
        %2172 = vmatpush.bf16.xpose.msra.mxu0 %v2163
        %2173 = vmatpush.bf16.xpose.msra.mxu0 %v2162
        %2174 = vmatmul.bf16.gmra.mxu0 %v2150
        %v2175 = vpop.f32.mrf.mxu0
        %v2176 = vadd.f32 0.0, %v2175
        %v2177 = vpop.f32.mrf.mxu0
        %v2178 = vadd.f32 0.0, %v2177
        %2179 = vmatmul.bf16.gmra.mxu0 %v2151
        %v2180 = vpop.f32.mrf.mxu0
        %v2181 = vadd.f32 0.0, %v2180
        %v2182 = vpop.f32.mrf.mxu0
        %v2183 = vadd.f32 0.0, %v2182
        %2184 = vdwg.mxu0
        %v2185 = vmul.f32 %v2176, 0.088388346
        %v2186 = vmul.f32 %v2178, 0.088388346
        %v2187 = vmul.f32 %v2181, 0.088388346
        %v2188 = vmul.f32 %v2183, 0.088388346
        %v2189 = vadd.f32 %v2185, %v2138
        %v2190 = vadd.f32 %v2186, %v2139
        %v2191 = vadd.f32 %v2187, %v2140
        %v2192 = vadd.f32 %v2188, %v2141
        %vm2193 = vcmask 261120
        %v2194 = vsel %vm2193, %v2189, -inf
        %2195 = vmax.xlane.f32.xlu0 %v2194
        %v2196 = vpop.xlane.xlu0 %2195
        %v2197 = vsel %vm2193, %v2190, -inf
        %2198 = vmax.xlane.f32.xlu0 %v2197
        %v2199 = vpop.xlane.xlu0 %2198
        %v2200 = vsel %vm2193, %v2191, -inf
        %2201 = vmax.xlane.f32.xlu0 %v2200
        %v2202 = vpop.xlane.xlu0 %2201
        %v2203 = vsel %vm2193, %v2192, -inf
        %2204 = vmax.xlane.f32.xlu0 %v2203
        %v2205 = vpop.xlane.xlu0 %2204
        %v2206 = vsub.f32 %v2189, %v2196
        %v2207 = vsub.f32 %v2190, %v2199
        %v2208 = vsub.f32 %v2191, %v2202
        %v2209 = vsub.f32 %v2192, %v2205
        %v2210 = vmul.f32 %v2206, 1.442695
        %v2211 = vpow.pop %v2210
        %v2212 = vmul.f32 %v2207, 1.442695
        %v2213 = vpow.pop %v2212
        %v2214 = vmul.f32 %v2208, 1.442695
        %v2215 = vpow.pop %v2214
        %v2216 = vmul.f32 %v2209, 1.442695
        %v2217 = vpow.pop %v2216
        %v2218 = vsel %vm2193, %v2211, 0.0
        %2219 = vadd.xlane.f32.xlu0 %v2218
        %v2220 = vpop.xlane.xlu0 %2219
        %v2221 = vsel %vm2193, %v2213, 0.0
        %2222 = vadd.xlane.f32.xlu0 %v2221
        %v2223 = vpop.xlane.xlu0 %2222
        %v2224 = vsel %vm2193, %v2215, 0.0
        %2225 = vadd.xlane.f32.xlu0 %v2224
        %v2226 = vpop.xlane.xlu0 %2225
        %v2227 = vsel %vm2193, %v2217, 0.0
        %2228 = vadd.xlane.f32.xlu0 %v2227
        %v2229 = vpop.xlane.xlu0 %2228
        %v2230 = vrcp.pop %v2220
        %v2231 = vrcp.pop %v2223
        %v2232 = vrcp.pop %v2226
        %v2233 = vrcp.pop %v2229
        %v2234 = vmul.f32 %v2211, %v2230
        %v2235 = vmul.f32 %v2213, %v2231
        %v2236 = vmul.f32 %v2215, %v2232
        %v2237 = vmul.f32 %v2217, %v2233
        %v2238 = vpack.c.bf16 %v2235, %v2234
        %v2239 = vpack.c.bf16 %v2237, %v2236
        %v2244 = vunpack.c.l.b16 %v2128
        %v2245 = vunpack.c.l.b16 %v2131
        %v2246 = vunpack.c.l.b16 %v2134
        %v2247 = vunpack.c.l.b16 %v2137
        %v2248 = vpack.c.b16 %v2245, %v2244
        %v2249 = vpack.c.b16 %v2247, %v2246
        %v2253 = vsel %vm2193, %v2238, 0
        %v2256 = vsel %vm2193, %v2239, 0
        %2258 = vmatpush.bf16.msra.mxu0 0
        %2259 = vmatpush.bf16.msra.mxu0 0
        %2260 = vmatpush.bf16.msra.mxu0 0
        %2261 = vmatpush.bf16.msra.mxu0 0
        %2262 = vmatpush.bf16.msra.mxu0 0
        %2263 = vmatpush.bf16.msra.mxu0 0
        %2264 = vmatpush.bf16.msra.mxu0 %v2249
        %2265 = vmatpush.bf16.msra.mxu0 %v2248
        %2266 = vmatmul.bf16.gmra.mxu0 %v2253
        %v2267 = vpop.f32.mrf.mxu0
        %v2268 = vadd.f32 0.0, %v2267
        %v2269 = vpop.f32.mrf.mxu0
        %v2270 = vadd.f32 0.0, %v2269
        %2271 = vmatmul.bf16.gmra.mxu0 %v2256
        %v2272 = vpop.f32.mrf.mxu0
        %v2273 = vadd.f32 0.0, %v2272
        %v2274 = vpop.f32.mrf.mxu0
        %v2275 = vadd.f32 0.0, %v2274
        %2276 = vdwg.mxu0
        %v2277 = vpack.c.bf16 %v2268, %v2268
        %v2278 = vpack.c.bf16 %v2270, %v2270
        %v2279 = vpack.c.bf16 %v2273, %v2273
        %v2280 = vpack.c.bf16 %v2275, %v2275
        %v2281 = vunpack.c.h.b16 %v2126
        %v2282 = vunpack.c.h.b16 %v2129
        %v2283 = vunpack.c.h.b16 %v2132
        %v2284 = vunpack.c.h.b16 %v2135
        %v2285 = vpack.c.b16 %v2282, %v2281
        %v2286 = vpack.c.b16 %v2284, %v2283
        %v2289 = vunpack.c.h.b16 %v2127
        %v2290 = vunpack.c.h.b16 %v2130
        %v2291 = vunpack.c.h.b16 %v2133
        %v2292 = vunpack.c.h.b16 %v2136
        %v2293 = vpack.c.b16 %v2290, %v2289
        %v2294 = vpack.c.b16 %v2292, %v2291
        %2297 = vmatpush.bf16.xpose.msra.mxu0 0
        %2298 = vmatpush.bf16.xpose.msra.mxu0 0
        %2299 = vmatpush.bf16.xpose.msra.mxu0 0
        %2300 = vmatpush.bf16.xpose.msra.mxu0 0
        %2301 = vmatpush.bf16.xpose.msra.mxu0 0
        %2302 = vmatpush.bf16.xpose.msra.mxu0 0
        %2303 = vmatpush.bf16.xpose.msra.mxu0 %v2294
        %2304 = vmatpush.bf16.xpose.msra.mxu0 %v2293
        %2305 = vmatmul.bf16.gmra.mxu0 %v2285
        %v2306 = vpop.f32.mrf.mxu0
        %v2307 = vadd.f32 0.0, %v2306
        %v2308 = vpop.f32.mrf.mxu0
        %v2309 = vadd.f32 0.0, %v2308
        %2310 = vmatmul.bf16.gmra.mxu0 %v2286
        %v2311 = vpop.f32.mrf.mxu0
        %v2312 = vadd.f32 0.0, %v2311
        %v2313 = vpop.f32.mrf.mxu0
        %v2314 = vadd.f32 0.0, %v2313
        %2315 = vdwg.mxu0
        %v2316 = vmul.f32 %v2307, 0.088388346
        %v2317 = vmul.f32 %v2309, 0.088388346
        %v2318 = vmul.f32 %v2312, 0.088388346
        %v2319 = vmul.f32 %v2314, 0.088388346
        %v2320 = vadd.f32 %v2316, %v2138
        %v2321 = vadd.f32 %v2317, %v2139
        %v2322 = vadd.f32 %v2318, %v2140
        %v2323 = vadd.f32 %v2319, %v2141
        %v2324 = vsel %vm2193, %v2320, -inf
        %2325 = vmax.xlane.f32.xlu0 %v2324
        %v2326 = vpop.xlane.xlu0 %2325
        %v2327 = vsel %vm2193, %v2321, -inf
        %2328 = vmax.xlane.f32.xlu0 %v2327
        %v2329 = vpop.xlane.xlu0 %2328
        %v2330 = vsel %vm2193, %v2322, -inf
        %2331 = vmax.xlane.f32.xlu0 %v2330
        %v2332 = vpop.xlane.xlu0 %2331
        %v2333 = vsel %vm2193, %v2323, -inf
        %2334 = vmax.xlane.f32.xlu0 %v2333
        %v2335 = vpop.xlane.xlu0 %2334
        %v2336 = vsub.f32 %v2320, %v2326
        %v2337 = vsub.f32 %v2321, %v2329
        %v2338 = vsub.f32 %v2322, %v2332
        %v2339 = vsub.f32 %v2323, %v2335
        %v2340 = vmul.f32 %v2336, 1.442695
        %v2341 = vpow.pop %v2340
        %v2342 = vmul.f32 %v2337, 1.442695
        %v2343 = vpow.pop %v2342
        %v2344 = vmul.f32 %v2338, 1.442695
        %v2345 = vpow.pop %v2344
        %v2346 = vmul.f32 %v2339, 1.442695
        %v2347 = vpow.pop %v2346
        %v2348 = vsel %vm2193, %v2341, 0.0
        %2349 = vadd.xlane.f32.xlu0 %v2348
        %v2350 = vpop.xlane.xlu0 %2349
        %v2351 = vsel %vm2193, %v2343, 0.0
        %2352 = vadd.xlane.f32.xlu0 %v2351
        %v2353 = vpop.xlane.xlu0 %2352
        %v2354 = vsel %vm2193, %v2345, 0.0
        %2355 = vadd.xlane.f32.xlu0 %v2354
        %v2356 = vpop.xlane.xlu0 %2355
        %v2357 = vsel %vm2193, %v2347, 0.0
        %2358 = vadd.xlane.f32.xlu0 %v2357
        %v2359 = vpop.xlane.xlu0 %2358
        %v2360 = vrcp.pop %v2350
        %v2361 = vrcp.pop %v2353
        %v2362 = vrcp.pop %v2356
        %v2363 = vrcp.pop %v2359
        %v2364 = vmul.f32 %v2341, %v2360
        %v2365 = vmul.f32 %v2343, %v2361
        %v2366 = vmul.f32 %v2345, %v2362
        %v2367 = vmul.f32 %v2347, %v2363
        %v2368 = vpack.c.bf16 %v2365, %v2364
        %v2369 = vpack.c.bf16 %v2367, %v2366
        %v2370 = vunpack.c.h.b16 %v2128
        %v2371 = vunpack.c.h.b16 %v2131
        %v2372 = vunpack.c.h.b16 %v2134
        %v2373 = vunpack.c.h.b16 %v2137
        %v2374 = vpack.c.b16 %v2371, %v2370
        %v2375 = vpack.c.b16 %v2373, %v2372
        %v2379 = vsel %vm2193, %v2368, 0
        %v2382 = vsel %vm2193, %v2369, 0
        %2384 = vmatpush.bf16.msra.mxu0 0
        %2385 = vmatpush.bf16.msra.mxu0 0
        %2386 = vmatpush.bf16.msra.mxu0 0
        %2387 = vmatpush.bf16.msra.mxu0 0
        %2388 = vmatpush.bf16.msra.mxu0 0
        %2389 = vmatpush.bf16.msra.mxu0 0
        %2390 = vmatpush.bf16.msra.mxu0 %v2375
        %2391 = vmatpush.bf16.msra.mxu0 %v2374
        %2392 = vmatmul.bf16.gmra.mxu0 %v2379
        %v2393 = vpop.f32.mrf.mxu0
        %v2394 = vadd.f32 0.0, %v2393
        %v2395 = vpop.f32.mrf.mxu0
        %v2396 = vadd.f32 0.0, %v2395
        %2397 = vmatmul.bf16.gmra.mxu0 %v2382
        %v2398 = vpop.f32.mrf.mxu0
        %v2399 = vadd.f32 0.0, %v2398
        %v2400 = vpop.f32.mrf.mxu0
        %v2401 = vadd.f32 0.0, %v2400
        %2402 = vdwg.mxu0
        %v2403 = vpack.c.bf16 %v2394, %v2394
        %v2404 = vpack.c.bf16 %v2396, %v2396
        %v2405 = vpack.c.bf16 %v2399, %v2399
        %v2406 = vpack.c.bf16 %v2401, %v2401
        %v2411 = vunpack.c.l.b16 %v2277
        %v2412 = vunpack.c.l.b16 %v2278
        %v2413 = vunpack.c.l.b16 %v2279
        %v2414 = vunpack.c.l.b16 %v2280
        %v2415 = vpack.c.b16 %v2412, %v2411
        %v2416 = vpack.c.b16 %v2414, %v2413
        %v2423 = vunpack.c.l.b16 %v2403
        %v2424 = vunpack.c.l.b16 %v2404
        %v2425 = vunpack.c.l.b16 %v2405
        %v2426 = vunpack.c.l.b16 %v2406
        %v2427 = vpack.c.b16 %v2424, %v2423
        %v2428 = vpack.c.b16 %v2426, %v2425
        %v2431 = vld [vmem:[%s1097] sm:$0xff]
        %v2432 = vld [vmem:[%s1097 + $0x8] sm:$0xff]
        %v2433 = vld [vmem:[%s1097 + $0x10] sm:$0xff]
        %v2434 = vld [vmem:[%s1097 + $0x18] sm:$0xff]
        %v2435 = vld [vmem:[%s1097 + $0x20] sm:$0xff]
        %v2436 = vld [vmem:[%s1097 + $0x28] sm:$0xff]
        %v2437 = vld [vmem:[%s1097 + $0x30] sm:$0xff]
        %v2438 = vld [vmem:[%s1097 + $0x38] sm:$0xff]
        %v2439 = vld [vmem:[%s1097 + $0x40] sm:$0xff]
        %v2440 = vld [vmem:[%s1097 + $0x48] sm:$0xff]
        %v2441 = vld [vmem:[%s1097 + $0x50] sm:$0xff]
        %v2442 = vld [vmem:[%s1097 + $0x58] sm:$0xff]
        %v2443 = vld [vmem:[%s1097 + $0x60] sm:$0xff]
        %v2444 = vld [vmem:[%s1097 + $0x68] sm:$0xff]
        %v2445 = vld [vmem:[%s1097 + $0x70] sm:$0xff]
        %v2446 = vld [vmem:[%s1097 + $0x78] sm:$0xff]
        %v2447 = vld [vmem:[%s1097 + $0x80] sm:$0xff]
        %v2448 = vld [vmem:[%s1097 + $0x88] sm:$0xff]
        %v2449 = vld [vmem:[%s1097 + $0x90] sm:$0xff]
        %v2450 = vld [vmem:[%s1097 + $0x98] sm:$0xff]
        %v2451 = vld [vmem:[%s1097 + $0xa0] sm:$0xff]
        %v2452 = vld [vmem:[%s1097 + $0xa8] sm:$0xff]
        %v2453 = vld [vmem:[%s1097 + $0xb0] sm:$0xff]
        %v2454 = vld [vmem:[%s1097 + $0xb8] sm:$0xff]
        %v2455 = vld [vmem:[%s1097 + $0xc0] sm:$0xff]
        %v2456 = vld [vmem:[%s1097 + $0xc8] sm:$0xff]
        %v2457 = vld [vmem:[%s1097 + $0xd0] sm:$0xff]
        %v2458 = vld [vmem:[%s1097 + $0xd8] sm:$0xff]
        %v2459 = vld [vmem:[%s1097 + $0xe0] sm:$0xff]
        %v2460 = vld [vmem:[%s1097 + $0xe8] sm:$0xff]
        %v2461 = vld [vmem:[%s1097 + $0xf0] sm:$0xff]
        %v2462 = vld [vmem:[%s1097 + $0xf8] sm:$0xff]
        %v2463 = vld [vmem:[%s1101] sm:$0x3]
        %v2465 = vperm.slane %v2463, 0
        %v2466 = vperm.slane %v2463, 1
        %v2501 = vunpack.c.l.b16 %v2431
        %v2502 = vunpack.c.h.b16 %v2431
        %v2503 = vunpack.c.l.b16 %v2432
        %v2504 = vunpack.c.h.b16 %v2432
        %v2505 = vunpack.c.l.b16 %v2433
        %v2506 = vunpack.c.h.b16 %v2433
        %v2507 = vunpack.c.l.b16 %v2434
        %v2508 = vunpack.c.h.b16 %v2434
        %v2509 = vunpack.c.l.b16 %v2435
        %v2510 = vunpack.c.h.b16 %v2435
        %v2511 = vunpack.c.l.b16 %v2436
        %v2512 = vunpack.c.h.b16 %v2436
        %v2513 = vunpack.c.l.b16 %v2437
        %v2514 = vunpack.c.h.b16 %v2437
        %v2515 = vunpack.c.l.b16 %v2438
        %v2516 = vunpack.c.h.b16 %v2438
        %v2517 = vunpack.c.l.b16 %v2439
        %v2518 = vunpack.c.h.b16 %v2439
        %v2519 = vunpack.c.l.b16 %v2440
        %v2520 = vunpack.c.h.b16 %v2440
        %v2521 = vunpack.c.l.b16 %v2441
        %v2522 = vunpack.c.h.b16 %v2441
        %v2523 = vunpack.c.l.b16 %v2442
        %v2524 = vunpack.c.h.b16 %v2442
        %v2525 = vunpack.c.l.b16 %v2443
        %v2526 = vunpack.c.h.b16 %v2443
        %v2527 = vunpack.c.l.b16 %v2444
        %v2528 = vunpack.c.h.b16 %v2444
        %v2529 = vunpack.c.l.b16 %v2445
        %v2530 = vunpack.c.h.b16 %v2445
        %v2531 = vunpack.c.l.b16 %v2446
        %v2532 = vunpack.c.h.b16 %v2446
        %v2533 = vunpack.c.l.b16 %v2447
        %v2534 = vunpack.c.h.b16 %v2447
        %v2535 = vunpack.c.l.b16 %v2448
        %v2536 = vunpack.c.h.b16 %v2448
        %v2537 = vunpack.c.l.b16 %v2449
        %v2538 = vunpack.c.h.b16 %v2449
        %v2539 = vunpack.c.l.b16 %v2450
        %v2540 = vunpack.c.h.b16 %v2450
        %v2541 = vunpack.c.l.b16 %v2451
        %v2542 = vunpack.c.h.b16 %v2451
        %v2543 = vunpack.c.l.b16 %v2452
        %v2544 = vunpack.c.h.b16 %v2452
        %v2545 = vunpack.c.l.b16 %v2453
        %v2546 = vunpack.c.h.b16 %v2453
        %v2547 = vunpack.c.l.b16 %v2454
        %v2548 = vunpack.c.h.b16 %v2454
        %v2549 = vunpack.c.l.b16 %v2455
        %v2550 = vunpack.c.h.b16 %v2455
        %v2551 = vunpack.c.l.b16 %v2456
        %v2552 = vunpack.c.h.b16 %v2456
        %v2553 = vunpack.c.l.b16 %v2457
        %v2554 = vunpack.c.h.b16 %v2457
        %v2555 = vunpack.c.l.b16 %v2458
        %v2556 = vunpack.c.h.b16 %v2458
        %v2557 = vunpack.c.l.b16 %v2459
        %v2558 = vunpack.c.h.b16 %v2459
        %v2559 = vunpack.c.l.b16 %v2460
        %v2560 = vunpack.c.h.b16 %v2460
        %v2561 = vunpack.c.l.b16 %v2461
        %v2562 = vunpack.c.h.b16 %v2461
        %v2563 = vunpack.c.l.b16 %v2462
        %v2564 = vunpack.c.h.b16 %v2462
        %v2565 = vpack.c.b16 %v2503, %v2501
        %v2566 = vpack.c.b16 %v2504, %v2502
        %v2567 = vpack.c.b16 %v2507, %v2505
        %v2568 = vpack.c.b16 %v2508, %v2506
        %v2569 = vpack.c.b16 %v2511, %v2509
        %v2570 = vpack.c.b16 %v2512, %v2510
        %v2571 = vpack.c.b16 %v2515, %v2513
        %v2572 = vpack.c.b16 %v2516, %v2514
        %v2573 = vpack.c.b16 %v2519, %v2517
        %v2574 = vpack.c.b16 %v2520, %v2518
        %v2575 = vpack.c.b16 %v2523, %v2521
        %v2576 = vpack.c.b16 %v2524, %v2522
        %v2577 = vpack.c.b16 %v2527, %v2525
        %v2578 = vpack.c.b16 %v2528, %v2526
        %v2579 = vpack.c.b16 %v2531, %v2529
        %v2580 = vpack.c.b16 %v2532, %v2530
        %v2581 = vpack.c.b16 %v2535, %v2533
        %v2582 = vpack.c.b16 %v2536, %v2534
        %v2583 = vpack.c.b16 %v2539, %v2537
        %v2584 = vpack.c.b16 %v2540, %v2538
        %v2585 = vpack.c.b16 %v2543, %v2541
        %v2586 = vpack.c.b16 %v2544, %v2542
        %v2587 = vpack.c.b16 %v2547, %v2545
        %v2588 = vpack.c.b16 %v2548, %v2546
        %v2589 = vpack.c.b16 %v2551, %v2549
        %v2590 = vpack.c.b16 %v2552, %v2550
        %v2591 = vpack.c.b16 %v2555, %v2553
        %v2592 = vpack.c.b16 %v2556, %v2554
        %v2593 = vpack.c.b16 %v2559, %v2557
        %v2594 = vpack.c.b16 %v2560, %v2558
        %v2595 = vpack.c.b16 %v2563, %v2561
        %v2596 = vpack.c.b16 %v2564, %v2562
        %2629 = vmatpush.bf16.msra.mxu0 %v2579
        %2630 = vmatpush.bf16.msra.mxu0 %v2577
        %2631 = vmatpush.bf16.msra.mxu0 %v2575
        %2632 = vmatpush.bf16.msra.mxu0 %v2573
        %2633 = vmatpush.bf16.msra.mxu0 %v2571
        %2634 = vmatpush.bf16.msra.mxu0 %v2569
        %2635 = vmatpush.bf16.msra.mxu0 %v2567
        %2636 = vmatpush.bf16.msra.mxu0 %v2565
        %2637 = vmatmul.bf16.gmra.mxu0 %v2415
        %v2638 = vpop.f32.mrf.mxu0
        %v2639 = vadd.f32 %v2465, %v2638
        %v2640 = vpop.f32.mrf.mxu0
        %v2641 = vadd.f32 %v2465, %v2640
        %2642 = vmatmul.bf16.gmra.mxu0 %v2416
        %v2643 = vpop.f32.mrf.mxu0
        %v2644 = vadd.f32 %v2465, %v2643
        %v2645 = vpop.f32.mrf.mxu0
        %v2646 = vadd.f32 %v2465, %v2645
        %2647 = vdwg.mxu0
        %2648 = vmatpush.bf16.msra.mxu0 %v2595
        %2649 = vmatpush.bf16.msra.mxu0 %v2593
        %2650 = vmatpush.bf16.msra.mxu0 %v2591
        %2651 = vmatpush.bf16.msra.mxu0 %v2589
        %2652 = vmatpush.bf16.msra.mxu0 %v2587
        %2653 = vmatpush.bf16.msra.mxu0 %v2585
        %2654 = vmatpush.bf16.msra.mxu0 %v2583
        %2655 = vmatpush.bf16.msra.mxu0 %v2581
        %2656 = vmatmul.bf16.gmra.mxu0 %v2427
        %v2657 = vpop.f32.mrf.mxu0
        %v2658 = vadd.f32 %v2639, %v2657
        %v2659 = vpop.f32.mrf.mxu0
        %v2660 = vadd.f32 %v2641, %v2659
        %2661 = vmatmul.bf16.gmra.mxu0 %v2428
        %v2662 = vpop.f32.mrf.mxu0
        %v2663 = vadd.f32 %v2644, %v2662
        %v2664 = vpop.f32.mrf.mxu0
        %v2665 = vadd.f32 %v2646, %v2664
        %2666 = vdwg.mxu0
        %2667 = vmatpush.bf16.msra.mxu0 %v2580
        %2668 = vmatpush.bf16.msra.mxu0 %v2578
        %2669 = vmatpush.bf16.msra.mxu0 %v2576
        %2670 = vmatpush.bf16.msra.mxu0 %v2574
        %2671 = vmatpush.bf16.msra.mxu0 %v2572
        %2672 = vmatpush.bf16.msra.mxu0 %v2570
        %2673 = vmatpush.bf16.msra.mxu0 %v2568
        %2674 = vmatpush.bf16.msra.mxu0 %v2566
        %2675 = vmatmul.bf16.gmra.mxu0 %v2415
        %v2676 = vpop.f32.mrf.mxu0
        %v2677 = vadd.f32 %v2466, %v2676
        %v2678 = vpop.f32.mrf.mxu0
        %v2679 = vadd.f32 %v2466, %v2678
        %2680 = vmatmul.bf16.gmra.mxu0 %v2416
        %v2681 = vpop.f32.mrf.mxu0
        %v2682 = vadd.f32 %v2466, %v2681
        %v2683 = vpop.f32.mrf.mxu0
        %v2684 = vadd.f32 %v2466, %v2683
        %2685 = vdwg.mxu0
        %2686 = vmatpush.bf16.msra.mxu0 %v2596
        %2687 = vmatpush.bf16.msra.mxu0 %v2594
        %2688 = vmatpush.bf16.msra.mxu0 %v2592
        %2689 = vmatpush.bf16.msra.mxu0 %v2590
        %2690 = vmatpush.bf16.msra.mxu0 %v2588
        %2691 = vmatpush.bf16.msra.mxu0 %v2586
        %2692 = vmatpush.bf16.msra.mxu0 %v2584
        %2693 = vmatpush.bf16.msra.mxu0 %v2582
        %2694 = vmatmul.bf16.gmra.mxu0 %v2427
        %v2695 = vpop.f32.mrf.mxu0
        %v2696 = vadd.f32 %v2677, %v2695
        %v2697 = vpop.f32.mrf.mxu0
        %v2698 = vadd.f32 %v2679, %v2697
        %2699 = vmatmul.bf16.gmra.mxu0 %v2428
        %v2700 = vpop.f32.mrf.mxu0
        %v2701 = vadd.f32 %v2682, %v2700
        %v2702 = vpop.f32.mrf.mxu0
        %v2703 = vadd.f32 %v2684, %v2702
        %2704 = vdwg.mxu0
        %v2705 = vadd.f32 %v1296, %v2658
        %v2706 = vadd.f32 %v1297, %v2696
        %v2707 = vadd.f32 %v1298, %v2660
        %v2708 = vadd.f32 %v1299, %v2698
        %v2709 = vadd.f32 %v1300, %v2663
        %v2710 = vadd.f32 %v1301, %v2701
        %v2711 = vadd.f32 %v1302, %v2665
        %v2712 = vadd.f32 %v1303, %v2703
        %v2713 = vld [vmem:[%s1105] sm:$0x3]
        %v2714 = vld [vmem:[%s1109] sm:$0x3]
        %v2715 = vadd.f32 %v2705, %v2706
        %2716 = vadd.xlane.f32.xlu0 %v2715
        %v2717 = vpop.xlane.xlu0 %2716
        %v2718 = vadd.f32 %v2707, %v2708
        %2719 = vadd.xlane.f32.xlu0 %v2718
        %v2720 = vpop.xlane.xlu0 %2719
        %v2721 = vadd.f32 %v2709, %v2710
        %2722 = vadd.xlane.f32.xlu0 %v2721
        %v2723 = vpop.xlane.xlu0 %2722
        %v2724 = vadd.f32 %v2711, %v2712
        %2725 = vadd.xlane.f32.xlu0 %v2724
        %v2726 = vpop.xlane.xlu0 %2725
        %v2727 = vrcp.pop 256.0
        %v2728 = vmul.f32 256.0, %v2727
        %v2729 = vsub.f32 1.0, %v2728
        %v2730 = vmul.f32 %v2727, %v2729
        %v2731 = vadd.f32 %v2727, %v2730
        %vm2732 = vweird.f32 %v2727
        %v2733 = vsel %vm2732, %v2727, %v2731
        %v2734 = vmul.f32 %v2717, %v2733
        %v2735 = vmul.f32 %v2720, %v2733
        %v2736 = vmul.f32 %v2723, %v2733
        %v2737 = vmul.f32 %v2726, %v2733
        %v2738 = vsub.f32 %v2705, %v2734
        %v2739 = vsub.f32 %v2706, %v2734
        %v2740 = vsub.f32 %v2707, %v2735
        %v2741 = vsub.f32 %v2708, %v2735
        %v2742 = vsub.f32 %v2709, %v2736
        %v2743 = vsub.f32 %v2710, %v2736
        %v2744 = vsub.f32 %v2711, %v2737
        %v2745 = vsub.f32 %v2712, %v2737
        %v2746 = vmul.f32 %v2738, %v2738
        %v2747 = vmul.f32 %v2739, %v2739
        %v2748 = vmul.f32 %v2740, %v2740
        %v2749 = vmul.f32 %v2741, %v2741
        %v2750 = vmul.f32 %v2742, %v2742
        %v2751 = vmul.f32 %v2743, %v2743
        %v2752 = vmul.f32 %v2744, %v2744
        %v2753 = vmul.f32 %v2745, %v2745
        %v2754 = vadd.f32 %v2746, %v2747
        %2755 = vadd.xlane.f32.xlu0 %v2754
        %v2756 = vpop.xlane.xlu0 %2755
        %v2757 = vadd.f32 %v2748, %v2749
        %2758 = vadd.xlane.f32.xlu0 %v2757
        %v2759 = vpop.xlane.xlu0 %2758
        %v2760 = vadd.f32 %v2750, %v2751
        %2761 = vadd.xlane.f32.xlu0 %v2760
        %v2762 = vpop.xlane.xlu0 %2761
        %v2763 = vadd.f32 %v2752, %v2753
        %2764 = vadd.xlane.f32.xlu0 %v2763
        %v2765 = vpop.xlane.xlu0 %2764
        %v2766 = vmul.f32 %v2756, %v2733
        %v2767 = vmul.f32 %v2759, %v2733
        %v2768 = vmul.f32 %v2762, %v2733
        %v2769 = vmul.f32 %v2765, %v2733
        %v2770 = vadd.f32 %v2766, 1e-12
        %v2771 = vadd.f32 %v2767, 1e-12
        %v2772 = vadd.f32 %v2768, 1e-12
        %v2773 = vadd.f32 %v2769, 1e-12
        %v2774 = vrsqrt.pop %v2770
        %v2775 = vmul.f32 %v2774, %v2770
        %v2776 = vmul.f32 %v2775, %v2774
        %v2777 = vmul.f32 0.5, %v2776
        %v2778 = vsub.f32 1.5, %v2777
        %v2779 = vmul.f32 %v2774, %v2778
        %vm2780 = vweird.f32 %v2770
        %vm2781 = vweird.f32 %v2774
        %vm2782 = vmor %vm2780, %vm2781
        %v2783 = vsel %vm2782, %v2774, %v2779
        %v2784 = vrsqrt.pop %v2771
        %v2785 = vmul.f32 %v2784, %v2771
        %v2786 = vmul.f32 %v2785, %v2784
        %v2787 = vmul.f32 0.5, %v2786
        %v2788 = vsub.f32 1.5, %v2787
        %v2789 = vmul.f32 %v2784, %v2788
        %vm2790 = vweird.f32 %v2771
        %vm2791 = vweird.f32 %v2784
        %vm2792 = vmor %vm2790, %vm2791
        %v2793 = vsel %vm2792, %v2784, %v2789
        %v2794 = vrsqrt.pop %v2772
        %v2795 = vmul.f32 %v2794, %v2772
        %v2796 = vmul.f32 %v2795, %v2794
        %v2797 = vmul.f32 0.5, %v2796
        %v2798 = vsub.f32 1.5, %v2797
        %v2799 = vmul.f32 %v2794, %v2798
        %vm2800 = vweird.f32 %v2772
        %vm2801 = vweird.f32 %v2794
        %vm2802 = vmor %vm2800, %vm2801
        %v2803 = vsel %vm2802, %v2794, %v2799
        %v2804 = vrsqrt.pop %v2773
        %v2805 = vmul.f32 %v2804, %v2773
        %v2806 = vmul.f32 %v2805, %v2804
        %v2807 = vmul.f32 0.5, %v2806
        %v2808 = vsub.f32 1.5, %v2807
        %v2809 = vmul.f32 %v2804, %v2808
        %vm2810 = vweird.f32 %v2773
        %vm2811 = vweird.f32 %v2804
        %vm2812 = vmor %vm2810, %vm2811
        %v2813 = vsel %vm2812, %v2804, %v2809
        %v2814 = vmul.f32 %v2738, %v2783
        %v2815 = vmul.f32 %v2739, %v2783
        %v2816 = vmul.f32 %v2740, %v2793
        %v2817 = vmul.f32 %v2741, %v2793
        %v2818 = vmul.f32 %v2742, %v2803
        %v2819 = vmul.f32 %v2743, %v2803
        %v2820 = vmul.f32 %v2744, %v2813
        %v2821 = vmul.f32 %v2745, %v2813
        %v2823 = vperm.slane %v2713, 0
        %v2824 = vperm.slane %v2713, 1
        %v2827 = vmul.f32 %v2814, %v2823
        %v2828 = vmul.f32 %v2815, %v2824
        %v2829 = vmul.f32 %v2816, %v2823
        %v2830 = vmul.f32 %v2817, %v2824
        %v2831 = vmul.f32 %v2818, %v2823
        %v2832 = vmul.f32 %v2819, %v2824
        %v2833 = vmul.f32 %v2820, %v2823
        %v2834 = vmul.f32 %v2821, %v2824
        %v2836 = vperm.slane %v2714, 0
        %v2837 = vperm.slane %v2714, 1
        %v2840 = vadd.f32 %v2827, %v2836
        %v2841 = vadd.f32 %v2828, %v2837
        %v2842 = vadd.f32 %v2829, %v2836
        %v2843 = vadd.f32 %v2830, %v2837
        %v2844 = vadd.f32 %v2831, %v2836
        %v2845 = vadd.f32 %v2832, %v2837
        %v2846 = vadd.f32 %v2833, %v2836
        %v2847 = vadd.f32 %v2834, %v2837
        %v2848 = vpack.c.bf16 %v2842, %v2840
        %v2849 = vpack.c.bf16 %v2843, %v2841
        %v2850 = vpack.c.bf16 %v2846, %v2844
        %v2851 = vpack.c.bf16 %v2847, %v2845
        %v2852 = vld [vmem:[%s936] sm:$0xff]
        %v2853 = vld [vmem:[%s936 + $0x8] sm:$0xff]
        %v2854 = vld [vmem:[%s936 + $0x10] sm:$0xff]
        %v2855 = vld [vmem:[%s936 + $0x18] sm:$0xff]
        %v2856 = vld [vmem:[%s936 + $0x20] sm:$0xff]
        %v2857 = vld [vmem:[%s936 + $0x28] sm:$0xff]
        %v2858 = vld [vmem:[%s936 + $0x30] sm:$0xff]
        %v2859 = vld [vmem:[%s936 + $0x38] sm:$0xff]
        %v2860 = vld [vmem:[%s936 + $0x40] sm:$0xff]
        %v2861 = vld [vmem:[%s936 + $0x48] sm:$0xff]
        %v2862 = vld [vmem:[%s936 + $0x50] sm:$0xff]
        %v2863 = vld [vmem:[%s936 + $0x58] sm:$0xff]
        %v2864 = vld [vmem:[%s936 + $0x60] sm:$0xff]
        %v2865 = vld [vmem:[%s936 + $0x68] sm:$0xff]
        %v2866 = vld [vmem:[%s936 + $0x70] sm:$0xff]
        %v2867 = vld [vmem:[%s936 + $0x78] sm:$0xff]
        %v2868 = vld [vmem:[%s936 + $0x80] sm:$0xff]
        %v2869 = vld [vmem:[%s936 + $0x88] sm:$0xff]
        %v2870 = vld [vmem:[%s936 + $0x90] sm:$0xff]
        %v2871 = vld [vmem:[%s936 + $0x98] sm:$0xff]
        %v2872 = vld [vmem:[%s936 + $0xa0] sm:$0xff]
        %v2873 = vld [vmem:[%s936 + $0xa8] sm:$0xff]
        %v2874 = vld [vmem:[%s936 + $0xb0] sm:$0xff]
        %v2875 = vld [vmem:[%s936 + $0xb8] sm:$0xff]
        %v2876 = vld [vmem:[%s936 + $0xc0] sm:$0xff]
        %v2877 = vld [vmem:[%s936 + $0xc8] sm:$0xff]
        %v2878 = vld [vmem:[%s936 + $0xd0] sm:$0xff]
        %v2879 = vld [vmem:[%s936 + $0xd8] sm:$0xff]
        %v2880 = vld [vmem:[%s936 + $0xe0] sm:$0xff]
        %v2881 = vld [vmem:[%s936 + $0xe8] sm:$0xff]
        %v2882 = vld [vmem:[%s936 + $0xf0] sm:$0xff]
        %v2883 = vld [vmem:[%s936 + $0xf8] sm:$0xff]
        %v2884 = vld [vmem:[%s936 + $0x100] sm:$0xff]
        %v2885 = vld [vmem:[%s936 + $0x108] sm:$0xff]
        %v2886 = vld [vmem:[%s936 + $0x110] sm:$0xff]
        %v2887 = vld [vmem:[%s936 + $0x118] sm:$0xff]
        %v2888 = vld [vmem:[%s936 + $0x120] sm:$0xff]
        %v2889 = vld [vmem:[%s936 + $0x128] sm:$0xff]
        %v2890 = vld [vmem:[%s936 + $0x130] sm:$0xff]
        %v2891 = vld [vmem:[%s936 + $0x138] sm:$0xff]
        %v2892 = vld [vmem:[%s936 + $0x140] sm:$0xff]
        %v2893 = vld [vmem:[%s936 + $0x148] sm:$0xff]
        %v2894 = vld [vmem:[%s936 + $0x150] sm:$0xff]
        %v2895 = vld [vmem:[%s936 + $0x158] sm:$0xff]
        %v2896 = vld [vmem:[%s936 + $0x160] sm:$0xff]
        %v2897 = vld [vmem:[%s936 + $0x168] sm:$0xff]
        %v2898 = vld [vmem:[%s936 + $0x170] sm:$0xff]
        %v2899 = vld [vmem:[%s936 + $0x178] sm:$0xff]
        %v2900 = vld [vmem:[%s936 + $0x180] sm:$0xff]
        %v2901 = vld [vmem:[%s936 + $0x188] sm:$0xff]
        %v2902 = vld [vmem:[%s936 + $0x190] sm:$0xff]
        %v2903 = vld [vmem:[%s936 + $0x198] sm:$0xff]
        %v2904 = vld [vmem:[%s936 + $0x1a0] sm:$0xff]
        %v2905 = vld [vmem:[%s936 + $0x1a8] sm:$0xff]
        %v2906 = vld [vmem:[%s936 + $0x1b0] sm:$0xff]
        %v2907 = vld [vmem:[%s936 + $0x1b8] sm:$0xff]
        %v2908 = vld [vmem:[%s936 + $0x1c0] sm:$0xff]
        %v2909 = vld [vmem:[%s936 + $0x1c8] sm:$0xff]
        %v2910 = vld [vmem:[%s936 + $0x1d0] sm:$0xff]
        %v2911 = vld [vmem:[%s936 + $0x1d8] sm:$0xff]
        %v2912 = vld [vmem:[%s936 + $0x1e0] sm:$0xff]
        %v2913 = vld [vmem:[%s936 + $0x1e8] sm:$0xff]
        %v2914 = vld [vmem:[%s936 + $0x1f0] sm:$0xff]
        %v2915 = vld [vmem:[%s936 + $0x1f8] sm:$0xff]
        %v2916 = vld [vmem:[%s1113] sm:$0xf]
        %v2918 = vperm.slane %v2916, 0
        %v2919 = vperm.slane %v2916, 1
        %v2920 = vperm.slane %v2916, 2
        %v2921 = vperm.slane %v2916, 3
        %v2990 = vunpack.c.l.b16 %v2852
        %v2991 = vunpack.c.h.b16 %v2852
        %v2992 = vunpack.c.l.b16 %v2853
        %v2993 = vunpack.c.h.b16 %v2853
        %v2994 = vunpack.c.l.b16 %v2854
        %v2995 = vunpack.c.h.b16 %v2854
        %v2996 = vunpack.c.l.b16 %v2855
        %v2997 = vunpack.c.h.b16 %v2855
        %v2998 = vunpack.c.l.b16 %v2856
        %v2999 = vunpack.c.h.b16 %v2856
        %v3000 = vunpack.c.l.b16 %v2857
        %v3001 = vunpack.c.h.b16 %v2857
        %v3002 = vunpack.c.l.b16 %v2858
        %v3003 = vunpack.c.h.b16 %v2858
        %v3004 = vunpack.c.l.b16 %v2859
        %v3005 = vunpack.c.h.b16 %v2859
        %v3006 = vunpack.c.l.b16 %v2860
        %v3007 = vunpack.c.h.b16 %v2860
        %v3008 = vunpack.c.l.b16 %v2861
        %v3009 = vunpack.c.h.b16 %v2861
        %v3010 = vunpack.c.l.b16 %v2862
        %v3011 = vunpack.c.h.b16 %v2862
        %v3012 = vunpack.c.l.b16 %v2863
        %v3013 = vunpack.c.h.b16 %v2863
        %v3014 = vunpack.c.l.b16 %v2864
        %v3015 = vunpack.c.h.b16 %v2864
        %v3016 = vunpack.c.l.b16 %v2865
        %v3017 = vunpack.c.h.b16 %v2865
        %v3018 = vunpack.c.l.b16 %v2866
        %v3019 = vunpack.c.h.b16 %v2866
        %v3020 = vunpack.c.l.b16 %v2867
        %v3021 = vunpack.c.h.b16 %v2867
        %v3022 = vunpack.c.l.b16 %v2868
        %v3023 = vunpack.c.h.b16 %v2868
        %v3024 = vunpack.c.l.b16 %v2869
        %v3025 = vunpack.c.h.b16 %v2869
        %v3026 = vunpack.c.l.b16 %v2870
        %v3027 = vunpack.c.h.b16 %v2870
        %v3028 = vunpack.c.l.b16 %v2871
        %v3029 = vunpack.c.h.b16 %v2871
        %v3030 = vunpack.c.l.b16 %v2872
        %v3031 = vunpack.c.h.b16 %v2872
        %v3032 = vunpack.c.l.b16 %v2873
        %v3033 = vunpack.c.h.b16 %v2873
        %v3034 = vunpack.c.l.b16 %v2874
        %v3035 = vunpack.c.h.b16 %v2874
        %v3036 = vunpack.c.l.b16 %v2875
        %v3037 = vunpack.c.h.b16 %v2875
        %v3038 = vunpack.c.l.b16 %v2876
        %v3039 = vunpack.c.h.b16 %v2876
        %v3040 = vunpack.c.l.b16 %v2877
        %v3041 = vunpack.c.h.b16 %v2877
        %v3042 = vunpack.c.l.b16 %v2878
        %v3043 = vunpack.c.h.b16 %v2878
        %v3044 = vunpack.c.l.b16 %v2879
        %v3045 = vunpack.c.h.b16 %v2879
        %v3046 = vunpack.c.l.b16 %v2880
        %v3047 = vunpack.c.h.b16 %v2880
        %v3048 = vunpack.c.l.b16 %v2881
        %v3049 = vunpack.c.h.b16 %v2881
        %v3050 = vunpack.c.l.b16 %v2882
        %v3051 = vunpack.c.h.b16 %v2882
        %v3052 = vunpack.c.l.b16 %v2883
        %v3053 = vunpack.c.h.b16 %v2883
        %v3054 = vunpack.c.l.b16 %v2884
        %v3055 = vunpack.c.h.b16 %v2884
        %v3056 = vunpack.c.l.b16 %v2885
        %v3057 = vunpack.c.h.b16 %v2885
        %v3058 = vunpack.c.l.b16 %v2886
        %v3059 = vunpack.c.h.b16 %v2886
        %v3060 = vunpack.c.l.b16 %v2887
        %v3061 = vunpack.c.h.b16 %v2887
        %v3062 = vunpack.c.l.b16 %v2888
        %v3063 = vunpack.c.h.b16 %v2888
        %v3064 = vunpack.c.l.b16 %v2889
        %v3065 = vunpack.c.h.b16 %v2889
        %v3066 = vunpack.c.l.b16 %v2890
        %v3067 = vunpack.c.h.b16 %v2890
        %v3068 = vunpack.c.l.b16 %v2891
        %v3069 = vunpack.c.h.b16 %v2891
        %v3070 = vunpack.c.l.b16 %v2892
        %v3071 = vunpack.c.h.b16 %v2892
        %v3072 = vunpack.c.l.b16 %v2893
        %v3073 = vunpack.c.h.b16 %v2893
        %v3074 = vunpack.c.l.b16 %v2894
        %v3075 = vunpack.c.h.b16 %v2894
        %v3076 = vunpack.c.l.b16 %v2895
        %v3077 = vunpack.c.h.b16 %v2895
        %v3078 = vunpack.c.l.b16 %v2896
        %v3079 = vunpack.c.h.b16 %v2896
        %v3080 = vunpack.c.l.b16 %v2897
        %v3081 = vunpack.c.h.b16 %v2897
        %v3082 = vunpack.c.l.b16 %v2898
        %v3083 = vunpack.c.h.b16 %v2898
        %v3084 = vunpack.c.l.b16 %v2899
        %v3085 = vunpack.c.h.b16 %v2899
        %v3086 = vunpack.c.l.b16 %v2900
        %v3087 = vunpack.c.h.b16 %v2900
        %v3088 = vunpack.c.l.b16 %v2901
        %v3089 = vunpack.c.h.b16 %v2901
        %v3090 = vunpack.c.l.b16 %v2902
        %v3091 = vunpack.c.h.b16 %v2902
        %v3092 = vunpack.c.l.b16 %v2903
        %v3093 = vunpack.c.h.b16 %v2903
        %v3094 = vunpack.c.l.b16 %v2904
        %v3095 = vunpack.c.h.b16 %v2904
        %v3096 = vunpack.c.l.b16 %v2905
        %v3097 = vunpack.c.h.b16 %v2905
        %v3098 = vunpack.c.l.b16 %v2906
        %v3099 = vunpack.c.h.b16 %v2906
        %v3100 = vunpack.c.l.b16 %v2907
        %v3101 = vunpack.c.h.b16 %v2907
        %v3102 = vunpack.c.l.b16 %v2908
        %v3103 = vunpack.c.h.b16 %v2908
        %v3104 = vunpack.c.l.b16 %v2909
        %v3105 = vunpack.c.h.b16 %v2909
        %v3106 = vunpack.c.l.b16 %v2910
        %v3107 = vunpack.c.h.b16 %v2910
        %v3108 = vunpack.c.l.b16 %v2911
        %v3109 = vunpack.c.h.b16 %v2911
        %v3110 = vunpack.c.l.b16 %v2912
        %v3111 = vunpack.c.h.b16 %v2912
        %v3112 = vunpack.c.l.b16 %v2913
        %v3113 = vunpack.c.h.b16 %v2913
        %v3114 = vunpack.c.l.b16 %v2914
        %v3115 = vunpack.c.h.b16 %v2914
        %v3116 = vunpack.c.l.b16 %v2915
        %v3117 = vunpack.c.h.b16 %v2915
        %v3118 = vpack.c.b16 %v2994, %v2990
        %v3119 = vpack.c.b16 %v2995, %v2991
        %v3120 = vpack.c.b16 %v2996, %v2992
        %v3121 = vpack.c.b16 %v2997, %v2993
        %v3122 = vpack.c.b16 %v3002, %v2998
        %v3123 = vpack.c.b16 %v3003, %v2999
        %v3124 = vpack.c.b16 %v3004, %v3000
        %v3125 = vpack.c.b16 %v3005, %v3001
        %v3126 = vpack.c.b16 %v3010, %v3006
        %v3127 = vpack.c.b16 %v3011, %v3007
        %v3128 = vpack.c.b16 %v3012, %v3008
        %v3129 = vpack.c.b16 %v3013, %v3009
        %v3130 = vpack.c.b16 %v3018, %v3014
        %v3131 = vpack.c.b16 %v3019, %v3015
        %v3132 = vpack.c.b16 %v3020, %v3016
        %v3133 = vpack.c.b16 %v3021, %v3017
        %v3134 = vpack.c.b16 %v3026, %v3022
        %v3135 = vpack.c.b16 %v3027, %v3023
        %v3136 = vpack.c.b16 %v3028, %v3024
        %v3137 = vpack.c.b16 %v3029, %v3025
        %v3138 = vpack.c.b16 %v3034, %v3030
        %v3139 = vpack.c.b16 %v3035, %v3031
        %v3140 = vpack.c.b16 %v3036, %v3032
        %v3141 = vpack.c.b16 %v3037, %v3033
        %v3142 = vpack.c.b16 %v3042, %v3038
        %v3143 = vpack.c.b16 %v3043, %v3039
        %v3144 = vpack.c.b16 %v3044, %v3040
        %v3145 = vpack.c.b16 %v3045, %v3041
        %v3146 = vpack.c.b16 %v3050, %v3046
        %v3147 = vpack.c.b16 %v3051, %v3047
        %v3148 = vpack.c.b16 %v3052, %v3048
        %v3149 = vpack.c.b16 %v3053, %v3049
        %v3150 = vpack.c.b16 %v3058, %v3054
        %v3151 = vpack.c.b16 %v3059, %v3055
        %v3152 = vpack.c.b16 %v3060, %v3056
        %v3153 = vpack.c.b16 %v3061, %v3057
        %v3154 = vpack.c.b16 %v3066, %v3062
        %v3155 = vpack.c.b16 %v3067, %v3063
        %v3156 = vpack.c.b16 %v3068, %v3064
        %v3157 = vpack.c.b16 %v3069, %v3065
        %v3158 = vpack.c.b16 %v3074, %v3070
        %v3159 = vpack.c.b16 %v3075, %v3071
        %v3160 = vpack.c.b16 %v3076, %v3072
        %v3161 = vpack.c.b16 %v3077, %v3073
        %v3162 = vpack.c.b16 %v3082, %v3078
        %v3163 = vpack.c.b16 %v3083, %v3079
        %v3164 = vpack.c.b16 %v3084, %v3080
        %v3165 = vpack.c.b16 %v3085, %v3081
        %v3166 = vpack.c.b16 %v3090, %v3086
        %v3167 = vpack.c.b16 %v3091, %v3087
        %v3168 = vpack.c.b16 %v3092, %v3088
        %v3169 = vpack.c.b16 %v3093, %v3089
        %v3170 = vpack.c.b16 %v3098, %v3094
        %v3171 = vpack.c.b16 %v3099, %v3095
        %v3172 = vpack.c.b16 %v3100, %v3096
        %v3173 = vpack.c.b16 %v3101, %v3097
        %v3174 = vpack.c.b16 %v3106, %v3102
        %v3175 = vpack.c.b16 %v3107, %v3103
        %v3176 = vpack.c.b16 %v3108, %v3104
        %v3177 = vpack.c.b16 %v3109, %v3105
        %v3178 = vpack.c.b16 %v3114, %v3110
        %v3179 = vpack.c.b16 %v3115, %v3111
        %v3180 = vpack.c.b16 %v3116, %v3112
        %v3181 = vpack.c.b16 %v3117, %v3113
        %3246 = vmatpush.bf16.msra.mxu0 %v3146
        %3247 = vmatpush.bf16.msra.mxu0 %v3142
        %3248 = vmatpush.bf16.msra.mxu0 %v3138
        %3249 = vmatpush.bf16.msra.mxu0 %v3134
        %3250 = vmatpush.bf16.msra.mxu0 %v3130
        %3251 = vmatpush.bf16.msra.mxu0 %v3126
        %3252 = vmatpush.bf16.msra.mxu0 %v3122
        %3253 = vmatpush.bf16.msra.mxu0 %v3118
        %3254 = vmatmul.bf16.gmra.mxu0 %v2848
        %v3255 = vpop.f32.mrf.mxu0
        %v3256 = vadd.f32 %v2918, %v3255
        %v3257 = vpop.f32.mrf.mxu0
        %v3258 = vadd.f32 %v2918, %v3257
        %3259 = vmatmul.bf16.gmra.mxu0 %v2850
        %v3260 = vpop.f32.mrf.mxu0
        %v3261 = vadd.f32 %v2918, %v3260
        %v3262 = vpop.f32.mrf.mxu0
        %v3263 = vadd.f32 %v2918, %v3262
        %3264 = vdwg.mxu0
        %3265 = vmatpush.bf16.msra.mxu0 %v3178
        %3266 = vmatpush.bf16.msra.mxu0 %v3174
        %3267 = vmatpush.bf16.msra.mxu0 %v3170
        %3268 = vmatpush.bf16.msra.mxu0 %v3166
        %3269 = vmatpush.bf16.msra.mxu0 %v3162
        %3270 = vmatpush.bf16.msra.mxu0 %v3158
        %3271 = vmatpush.bf16.msra.mxu0 %v3154
        %3272 = vmatpush.bf16.msra.mxu0 %v3150
        %3273 = vmatmul.bf16.gmra.mxu0 %v2849
        %v3274 = vpop.f32.mrf.mxu0
        %v3275 = vadd.f32 %v3256, %v3274
        %v3276 = vpop.f32.mrf.mxu0
        %v3277 = vadd.f32 %v3258, %v3276
        %3278 = vmatmul.bf16.gmra.mxu0 %v2851
        %v3279 = vpop.f32.mrf.mxu0
        %v3280 = vadd.f32 %v3261, %v3279
        %v3281 = vpop.f32.mrf.mxu0
        %v3282 = vadd.f32 %v3263, %v3281
        %3283 = vdwg.mxu0
        %3284 = vmatpush.bf16.msra.mxu0 %v3147
        %3285 = vmatpush.bf16.msra.mxu0 %v3143
        %3286 = vmatpush.bf16.msra.mxu0 %v3139
        %3287 = vmatpush.bf16.msra.mxu0 %v3135
        %3288 = vmatpush.bf16.msra.mxu0 %v3131
        %3289 = vmatpush.bf16.msra.mxu0 %v3127
        %3290 = vmatpush.bf16.msra.mxu0 %v3123
        %3291 = vmatpush.bf16.msra.mxu0 %v3119
        %3292 = vmatmul.bf16.gmra.mxu0 %v2848
        %v3293 = vpop.f32.mrf.mxu0
        %v3294 = vadd.f32 %v2919, %v3293
        %v3295 = vpop.f32.mrf.mxu0
        %v3296 = vadd.f32 %v2919, %v3295
        %3297 = vmatmul.bf16.gmra.mxu0 %v2850
        %v3298 = vpop.f32.mrf.mxu0
        %v3299 = vadd.f32 %v2919, %v3298
        %v3300 = vpop.f32.mrf.mxu0
        %v3301 = vadd.f32 %v2919, %v3300
        %3302 = vdwg.mxu0
        %3303 = vmatpush.bf16.msra.mxu0 %v3179
        %3304 = vmatpush.bf16.msra.mxu0 %v3175
        %3305 = vmatpush.bf16.msra.mxu0 %v3171
        %3306 = vmatpush.bf16.msra.mxu0 %v3167
        %3307 = vmatpush.bf16.msra.mxu0 %v3163
        %3308 = vmatpush.bf16.msra.mxu0 %v3159
        %3309 = vmatpush.bf16.msra.mxu0 %v3155
        %3310 = vmatpush.bf16.msra.mxu0 %v3151
        %3311 = vmatmul.bf16.gmra.mxu0 %v2849
        %v3312 = vpop.f32.mrf.mxu0
        %v3313 = vadd.f32 %v3294, %v3312
        %v3314 = vpop.f32.mrf.mxu0
        %v3315 = vadd.f32 %v3296, %v3314
        %3316 = vmatmul.bf16.gmra.mxu0 %v2851
        %v3317 = vpop.f32.mrf.mxu0
        %v3318 = vadd.f32 %v3299, %v3317
        %v3319 = vpop.f32.mrf.mxu0
        %v3320 = vadd.f32 %v3301, %v3319
        %3321 = vdwg.mxu0
        %3322 = vmatpush.bf16.msra.mxu0 %v3148
        %3323 = vmatpush.bf16.msra.mxu0 %v3144
        %3324 = vmatpush.bf16.msra.mxu0 %v3140
        %3325 = vmatpush.bf16.msra.mxu0 %v3136
        %3326 = vmatpush.bf16.msra.mxu0 %v3132
        %3327 = vmatpush.bf16.msra.mxu0 %v3128
        %3328 = vmatpush.bf16.msra.mxu0 %v3124
        %3329 = vmatpush.bf16.msra.mxu0 %v3120
        %3330 = vmatmul.bf16.gmra.mxu0 %v2848
        %v3331 = vpop.f32.mrf.mxu0
        %v3332 = vadd.f32 %v2920, %v3331
        %v3333 = vpop.f32.mrf.mxu0
        %v3334 = vadd.f32 %v2920, %v3333
        %3335 = vmatmul.bf16.gmra.mxu0 %v2850
        %v3336 = vpop.f32.mrf.mxu0
        %v3337 = vadd.f32 %v2920, %v3336
        %v3338 = vpop.f32.mrf.mxu0
        %v3339 = vadd.f32 %v2920, %v3338
        %3340 = vdwg.mxu0
        %3341 = vmatpush.bf16.msra.mxu0 %v3180
        %3342 = vmatpush.bf16.msra.mxu0 %v3176
        %3343 = vmatpush.bf16.msra.mxu0 %v3172
        %3344 = vmatpush.bf16.msra.mxu0 %v3168
        %3345 = vmatpush.bf16.msra.mxu0 %v3164
        %3346 = vmatpush.bf16.msra.mxu0 %v3160
        %3347 = vmatpush.bf16.msra.mxu0 %v3156
        %3348 = vmatpush.bf16.msra.mxu0 %v3152
        %3349 = vmatmul.bf16.gmra.mxu0 %v2849
        %v3350 = vpop.f32.mrf.mxu0
        %v3351 = vadd.f32 %v3332, %v3350
        %v3352 = vpop.f32.mrf.mxu0
        %v3353 = vadd.f32 %v3334, %v3352
        %3354 = vmatmul.bf16.gmra.mxu0 %v2851
        %v3355 = vpop.f32.mrf.mxu0
        %v3356 = vadd.f32 %v3337, %v3355
        %v3357 = vpop.f32.mrf.mxu0
        %v3358 = vadd.f32 %v3339, %v3357
        %3359 = vdwg.mxu0
        %3360 = vmatpush.bf16.msra.mxu0 %v3149
        %3361 = vmatpush.bf16.msra.mxu0 %v3145
        %3362 = vmatpush.bf16.msra.mxu0 %v3141
        %3363 = vmatpush.bf16.msra.mxu0 %v3137
        %3364 = vmatpush.bf16.msra.mxu0 %v3133
        %3365 = vmatpush.bf16.msra.mxu0 %v3129
        %3366 = vmatpush.bf16.msra.mxu0 %v3125
        %3367 = vmatpush.bf16.msra.mxu0 %v3121
        %3368 = vmatmul.bf16.gmra.mxu0 %v2848
        %v3369 = vpop.f32.mrf.mxu0
        %v3370 = vadd.f32 %v2921, %v3369
        %v3371 = vpop.f32.mrf.mxu0
        %v3372 = vadd.f32 %v2921, %v3371
        %3373 = vmatmul.bf16.gmra.mxu0 %v2850
        %v3374 = vpop.f32.mrf.mxu0
        %v3375 = vadd.f32 %v2921, %v3374
        %v3376 = vpop.f32.mrf.mxu0
        %v3377 = vadd.f32 %v2921, %v3376
        %3378 = vdwg.mxu0
        %3379 = vmatpush.bf16.msra.mxu0 %v3181
        %3380 = vmatpush.bf16.msra.mxu0 %v3177
        %3381 = vmatpush.bf16.msra.mxu0 %v3173
        %3382 = vmatpush.bf16.msra.mxu0 %v3169
        %3383 = vmatpush.bf16.msra.mxu0 %v3165
        %3384 = vmatpush.bf16.msra.mxu0 %v3161
        %3385 = vmatpush.bf16.msra.mxu0 %v3157
        %3386 = vmatpush.bf16.msra.mxu0 %v3153
        %3387 = vmatmul.bf16.gmra.mxu0 %v2849
        %v3388 = vpop.f32.mrf.mxu0
        %v3389 = vadd.f32 %v3370, %v3388
        %v3390 = vpop.f32.mrf.mxu0
        %v3391 = vadd.f32 %v3372, %v3390
        %3392 = vmatmul.bf16.gmra.mxu0 %v2851
        %v3393 = vpop.f32.mrf.mxu0
        %v3394 = vadd.f32 %v3375, %v3393
        %v3395 = vpop.f32.mrf.mxu0
        %v3396 = vadd.f32 %v3377, %v3395
        %3397 = vdwg.mxu0
        %v3398 = vmul.f32 %v3275, %v3275
        %v3399 = vmul.f32 %v3313, %v3313
        %v3400 = vmul.f32 %v3351, %v3351
        %v3401 = vmul.f32 %v3389, %v3389
        %v3402 = vmul.f32 %v3277, %v3277
        %v3403 = vmul.f32 %v3315, %v3315
        %v3404 = vmul.f32 %v3353, %v3353
        %v3405 = vmul.f32 %v3391, %v3391
        %v3406 = vmul.f32 %v3280, %v3280
        %v3407 = vmul.f32 %v3318, %v3318
        %v3408 = vmul.f32 %v3356, %v3356
        %v3409 = vmul.f32 %v3394, %v3394
        %v3410 = vmul.f32 %v3282, %v3282
        %v3411 = vmul.f32 %v3320, %v3320
        %v3412 = vmul.f32 %v3358, %v3358
        %v3413 = vmul.f32 %v3396, %v3396
        %v3414 = vmul.f32 %v3275, %v3398
        %v3415 = vmul.f32 %v3313, %v3399
        %v3416 = vmul.f32 %v3351, %v3400
        %v3417 = vmul.f32 %v3389, %v3401
        %v3418 = vmul.f32 %v3277, %v3402
        %v3419 = vmul.f32 %v3315, %v3403
        %v3420 = vmul.f32 %v3353, %v3404
        %v3421 = vmul.f32 %v3391, %v3405
        %v3422 = vmul.f32 %v3280, %v3406
        %v3423 = vmul.f32 %v3318, %v3407
        %v3424 = vmul.f32 %v3356, %v3408
        %v3425 = vmul.f32 %v3394, %v3409
        %v3426 = vmul.f32 %v3282, %v3410
        %v3427 = vmul.f32 %v3320, %v3411
        %v3428 = vmul.f32 %v3358, %v3412
        %v3429 = vmul.f32 %v3396, %v3413
        %v3430 = vmul.f32 %v3414, 0.044715
        %v3431 = vmul.f32 %v3415, 0.044715
        %v3432 = vmul.f32 %v3416, 0.044715
        %v3433 = vmul.f32 %v3417, 0.044715
        %v3434 = vmul.f32 %v3418, 0.044715
        %v3435 = vmul.f32 %v3419, 0.044715
        %v3436 = vmul.f32 %v3420, 0.044715
        %v3437 = vmul.f32 %v3421, 0.044715
        %v3438 = vmul.f32 %v3422, 0.044715
        %v3439 = vmul.f32 %v3423, 0.044715
        %v3440 = vmul.f32 %v3424, 0.044715
        %v3441 = vmul.f32 %v3425, 0.044715
        %v3442 = vmul.f32 %v3426, 0.044715
        %v3443 = vmul.f32 %v3427, 0.044715
        %v3444 = vmul.f32 %v3428, 0.044715
        %v3445 = vmul.f32 %v3429, 0.044715
        %v3446 = vadd.f32 %v3275, %v3430
        %v3447 = vadd.f32 %v3313, %v3431
        %v3448 = vadd.f32 %v3351, %v3432
        %v3449 = vadd.f32 %v3389, %v3433
        %v3450 = vadd.f32 %v3277, %v3434
        %v3451 = vadd.f32 %v3315, %v3435
        %v3452 = vadd.f32 %v3353, %v3436
        %v3453 = vadd.f32 %v3391, %v3437
        %v3454 = vadd.f32 %v3280, %v3438
        %v3455 = vadd.f32 %v3318, %v3439
        %v3456 = vadd.f32 %v3356, %v3440
        %v3457 = vadd.f32 %v3394, %v3441
        %v3458 = vadd.f32 %v3282, %v3442
        %v3459 = vadd.f32 %v3320, %v3443
        %v3460 = vadd.f32 %v3358, %v3444
        %v3461 = vadd.f32 %v3396, %v3445
        %v3462 = vmul.f32 %v3446, 0.7978846
        %v3463 = vmul.f32 %v3447, 0.7978846
        %v3464 = vmul.f32 %v3448, 0.7978846
        %v3465 = vmul.f32 %v3449, 0.7978846
        %v3466 = vmul.f32 %v3450, 0.7978846
        %v3467 = vmul.f32 %v3451, 0.7978846
        %v3468 = vmul.f32 %v3452, 0.7978846
        %v3469 = vmul.f32 %v3453, 0.7978846
        %v3470 = vmul.f32 %v3454, 0.7978846
        %v3471 = vmul.f32 %v3455, 0.7978846
        %v3472 = vmul.f32 %v3456, 0.7978846
        %v3473 = vmul.f32 %v3457, 0.7978846
        %v3474 = vmul.f32 %v3458, 0.7978846
        %v3475 = vmul.f32 %v3459, 0.7978846
        %v3476 = vmul.f32 %v3460, 0.7978846
        %v3477 = vmul.f32 %v3461, 0.7978846
        %v3478 = vtanh.pop %v3462
        %v3479 = vtanh.pop %v3463
        %v3480 = vtanh.pop %v3464
        %v3481 = vtanh.pop %v3465
        %v3482 = vtanh.pop %v3466
        %v3483 = vtanh.pop %v3467
        %v3484 = vtanh.pop %v3468
        %v3485 = vtanh.pop %v3469
        %v3486 = vtanh.pop %v3470
        %v3487 = vtanh.pop %v3471
        %v3488 = vtanh.pop %v3472
        %v3489 = vtanh.pop %v3473
        %v3490 = vtanh.pop %v3474
        %v3491 = vtanh.pop %v3475
        %v3492 = vtanh.pop %v3476
        %v3493 = vtanh.pop %v3477
        %v3494 = vadd.f32 %v3478, 1.0
        %v3495 = vadd.f32 %v3479, 1.0
        %v3496 = vadd.f32 %v3480, 1.0
        %v3497 = vadd.f32 %v3481, 1.0
        %v3498 = vadd.f32 %v3482, 1.0
        %v3499 = vadd.f32 %v3483, 1.0
        %v3500 = vadd.f32 %v3484, 1.0
        %v3501 = vadd.f32 %v3485, 1.0
        %v3502 = vadd.f32 %v3486, 1.0
        %v3503 = vadd.f32 %v3487, 1.0
        %v3504 = vadd.f32 %v3488, 1.0
        %v3505 = vadd.f32 %v3489, 1.0
        %v3506 = vadd.f32 %v3490, 1.0
        %v3507 = vadd.f32 %v3491, 1.0
        %v3508 = vadd.f32 %v3492, 1.0
        %v3509 = vadd.f32 %v3493, 1.0
        %v3510 = vmul.f32 %v3494, 0.5
        %v3511 = vmul.f32 %v3495, 0.5
        %v3512 = vmul.f32 %v3496, 0.5
        %v3513 = vmul.f32 %v3497, 0.5
        %v3514 = vmul.f32 %v3498, 0.5
        %v3515 = vmul.f32 %v3499, 0.5
        %v3516 = vmul.f32 %v3500, 0.5
        %v3517 = vmul.f32 %v3501, 0.5
        %v3518 = vmul.f32 %v3502, 0.5
        %v3519 = vmul.f32 %v3503, 0.5
        %v3520 = vmul.f32 %v3504, 0.5
        %v3521 = vmul.f32 %v3505, 0.5
        %v3522 = vmul.f32 %v3506, 0.5
        %v3523 = vmul.f32 %v3507, 0.5
        %v3524 = vmul.f32 %v3508, 0.5
        %v3525 = vmul.f32 %v3509, 0.5
        %v3526 = vmul.f32 %v3275, %v3510
        %v3527 = vmul.f32 %v3313, %v3511
        %v3528 = vmul.f32 %v3351, %v3512
        %v3529 = vmul.f32 %v3389, %v3513
        %v3530 = vmul.f32 %v3277, %v3514
        %v3531 = vmul.f32 %v3315, %v3515
        %v3532 = vmul.f32 %v3353, %v3516
        %v3533 = vmul.f32 %v3391, %v3517
        %v3534 = vmul.f32 %v3280, %v3518
        %v3535 = vmul.f32 %v3318, %v3519
        %v3536 = vmul.f32 %v3356, %v3520
        %v3537 = vmul.f32 %v3394, %v3521
        %v3538 = vmul.f32 %v3282, %v3522
        %v3539 = vmul.f32 %v3320, %v3523
        %v3540 = vmul.f32 %v3358, %v3524
        %v3541 = vmul.f32 %v3396, %v3525
        %v3542 = vpack.c.bf16 %v3530, %v3526
        %v3543 = vpack.c.bf16 %v3531, %v3527
        %v3544 = vpack.c.bf16 %v3532, %v3528
        %v3545 = vpack.c.bf16 %v3533, %v3529
        %v3546 = vpack.c.bf16 %v3538, %v3534
        %v3547 = vpack.c.bf16 %v3539, %v3535
        %v3548 = vpack.c.bf16 %v3540, %v3536
        %v3549 = vpack.c.bf16 %v3541, %v3537
        %v3550 = vld [vmem:[%s946] sm:$0xff]
        %v3551 = vld [vmem:[%s946 + $0x8] sm:$0xff]
        %v3552 = vld [vmem:[%s946 + $0x10] sm:$0xff]
        %v3553 = vld [vmem:[%s946 + $0x18] sm:$0xff]
        %v3554 = vld [vmem:[%s946 + $0x20] sm:$0xff]
        %v3555 = vld [vmem:[%s946 + $0x28] sm:$0xff]
        %v3556 = vld [vmem:[%s946 + $0x30] sm:$0xff]
        %v3557 = vld [vmem:[%s946 + $0x38] sm:$0xff]
        %v3558 = vld [vmem:[%s946 + $0x40] sm:$0xff]
        %v3559 = vld [vmem:[%s946 + $0x48] sm:$0xff]
        %v3560 = vld [vmem:[%s946 + $0x50] sm:$0xff]
        %v3561 = vld [vmem:[%s946 + $0x58] sm:$0xff]
        %v3562 = vld [vmem:[%s946 + $0x60] sm:$0xff]
        %v3563 = vld [vmem:[%s946 + $0x68] sm:$0xff]
        %v3564 = vld [vmem:[%s946 + $0x70] sm:$0xff]
        %v3565 = vld [vmem:[%s946 + $0x78] sm:$0xff]
        %v3566 = vld [vmem:[%s946 + $0x80] sm:$0xff]
        %v3567 = vld [vmem:[%s946 + $0x88] sm:$0xff]
        %v3568 = vld [vmem:[%s946 + $0x90] sm:$0xff]
        %v3569 = vld [vmem:[%s946 + $0x98] sm:$0xff]
        %v3570 = vld [vmem:[%s946 + $0xa0] sm:$0xff]
        %v3571 = vld [vmem:[%s946 + $0xa8] sm:$0xff]
        %v3572 = vld [vmem:[%s946 + $0xb0] sm:$0xff]
        %v3573 = vld [vmem:[%s946 + $0xb8] sm:$0xff]
        %v3574 = vld [vmem:[%s946 + $0xc0] sm:$0xff]
        %v3575 = vld [vmem:[%s946 + $0xc8] sm:$0xff]
        %v3576 = vld [vmem:[%s946 + $0xd0] sm:$0xff]
        %v3577 = vld [vmem:[%s946 + $0xd8] sm:$0xff]
        %v3578 = vld [vmem:[%s946 + $0xe0] sm:$0xff]
        %v3579 = vld [vmem:[%s946 + $0xe8] sm:$0xff]
        %v3580 = vld [vmem:[%s946 + $0xf0] sm:$0xff]
        %v3581 = vld [vmem:[%s946 + $0xf8] sm:$0xff]
        %v3582 = vld [vmem:[%s946 + $0x100] sm:$0xff]
        %v3583 = vld [vmem:[%s946 + $0x108] sm:$0xff]
        %v3584 = vld [vmem:[%s946 + $0x110] sm:$0xff]
        %v3585 = vld [vmem:[%s946 + $0x118] sm:$0xff]
        %v3586 = vld [vmem:[%s946 + $0x120] sm:$0xff]
        %v3587 = vld [vmem:[%s946 + $0x128] sm:$0xff]
        %v3588 = vld [vmem:[%s946 + $0x130] sm:$0xff]
        %v3589 = vld [vmem:[%s946 + $0x138] sm:$0xff]
        %v3590 = vld [vmem:[%s946 + $0x140] sm:$0xff]
        %v3591 = vld [vmem:[%s946 + $0x148] sm:$0xff]
        %v3592 = vld [vmem:[%s946 + $0x150] sm:$0xff]
        %v3593 = vld [vmem:[%s946 + $0x158] sm:$0xff]
        %v3594 = vld [vmem:[%s946 + $0x160] sm:$0xff]
        %v3595 = vld [vmem:[%s946 + $0x168] sm:$0xff]
        %v3596 = vld [vmem:[%s946 + $0x170] sm:$0xff]
        %v3597 = vld [vmem:[%s946 + $0x178] sm:$0xff]
        %v3598 = vld [vmem:[%s946 + $0x180] sm:$0xff]
        %v3599 = vld [vmem:[%s946 + $0x188] sm:$0xff]
        %v3600 = vld [vmem:[%s946 + $0x190] sm:$0xff]
        %v3601 = vld [vmem:[%s946 + $0x198] sm:$0xff]
        %v3602 = vld [vmem:[%s946 + $0x1a0] sm:$0xff]
        %v3603 = vld [vmem:[%s946 + $0x1a8] sm:$0xff]
        %v3604 = vld [vmem:[%s946 + $0x1b0] sm:$0xff]
        %v3605 = vld [vmem:[%s946 + $0x1b8] sm:$0xff]
        %v3606 = vld [vmem:[%s946 + $0x1c0] sm:$0xff]
        %v3607 = vld [vmem:[%s946 + $0x1c8] sm:$0xff]
        %v3608 = vld [vmem:[%s946 + $0x1d0] sm:$0xff]
        %v3609 = vld [vmem:[%s946 + $0x1d8] sm:$0xff]
        %v3610 = vld [vmem:[%s946 + $0x1e0] sm:$0xff]
        %v3611 = vld [vmem:[%s946 + $0x1e8] sm:$0xff]
        %v3612 = vld [vmem:[%s946 + $0x1f0] sm:$0xff]
        %v3613 = vld [vmem:[%s946 + $0x1f8] sm:$0xff]
        %v3614 = vld [vmem:[%s956] sm:$0x3]
        %v3616 = vperm.slane %v3614, 0
        %v3617 = vperm.slane %v3614, 1
        %v3684 = vunpack.c.l.b16 %v3550
        %v3685 = vunpack.c.h.b16 %v3550
        %v3686 = vunpack.c.l.b16 %v3551
        %v3687 = vunpack.c.h.b16 %v3551
        %v3688 = vunpack.c.l.b16 %v3552
        %v3689 = vunpack.c.h.b16 %v3552
        %v3690 = vunpack.c.l.b16 %v3553
        %v3691 = vunpack.c.h.b16 %v3553
        %v3692 = vunpack.c.l.b16 %v3554
        %v3693 = vunpack.c.h.b16 %v3554
        %v3694 = vunpack.c.l.b16 %v3555
        %v3695 = vunpack.c.h.b16 %v3555
        %v3696 = vunpack.c.l.b16 %v3556
        %v3697 = vunpack.c.h.b16 %v3556
        %v3698 = vunpack.c.l.b16 %v3557
        %v3699 = vunpack.c.h.b16 %v3557
        %v3700 = vunpack.c.l.b16 %v3558
        %v3701 = vunpack.c.h.b16 %v3558
        %v3702 = vunpack.c.l.b16 %v3559
        %v3703 = vunpack.c.h.b16 %v3559
        %v3704 = vunpack.c.l.b16 %v3560
        %v3705 = vunpack.c.h.b16 %v3560
        %v3706 = vunpack.c.l.b16 %v3561
        %v3707 = vunpack.c.h.b16 %v3561
        %v3708 = vunpack.c.l.b16 %v3562
        %v3709 = vunpack.c.h.b16 %v3562
        %v3710 = vunpack.c.l.b16 %v3563
        %v3711 = vunpack.c.h.b16 %v3563
        %v3712 = vunpack.c.l.b16 %v3564
        %v3713 = vunpack.c.h.b16 %v3564
        %v3714 = vunpack.c.l.b16 %v3565
        %v3715 = vunpack.c.h.b16 %v3565
        %v3716 = vunpack.c.l.b16 %v3566
        %v3717 = vunpack.c.h.b16 %v3566
        %v3718 = vunpack.c.l.b16 %v3567
        %v3719 = vunpack.c.h.b16 %v3567
        %v3720 = vunpack.c.l.b16 %v3568
        %v3721 = vunpack.c.h.b16 %v3568
        %v3722 = vunpack.c.l.b16 %v3569
        %v3723 = vunpack.c.h.b16 %v3569
        %v3724 = vunpack.c.l.b16 %v3570
        %v3725 = vunpack.c.h.b16 %v3570
        %v3726 = vunpack.c.l.b16 %v3571
        %v3727 = vunpack.c.h.b16 %v3571
        %v3728 = vunpack.c.l.b16 %v3572
        %v3729 = vunpack.c.h.b16 %v3572
        %v3730 = vunpack.c.l.b16 %v3573
        %v3731 = vunpack.c.h.b16 %v3573
        %v3732 = vunpack.c.l.b16 %v3574
        %v3733 = vunpack.c.h.b16 %v3574
        %v3734 = vunpack.c.l.b16 %v3575
        %v3735 = vunpack.c.h.b16 %v3575
        %v3736 = vunpack.c.l.b16 %v3576
        %v3737 = vunpack.c.h.b16 %v3576
        %v3738 = vunpack.c.l.b16 %v3577
        %v3739 = vunpack.c.h.b16 %v3577
        %v3740 = vunpack.c.l.b16 %v3578
        %v3741 = vunpack.c.h.b16 %v3578
        %v3742 = vunpack.c.l.b16 %v3579
        %v3743 = vunpack.c.h.b16 %v3579
        %v3744 = vunpack.c.l.b16 %v3580
        %v3745 = vunpack.c.h.b16 %v3580
        %v3746 = vunpack.c.l.b16 %v3581
        %v3747 = vunpack.c.h.b16 %v3581
        %v3748 = vunpack.c.l.b16 %v3582
        %v3749 = vunpack.c.h.b16 %v3582
        %v3750 = vunpack.c.l.b16 %v3583
        %v3751 = vunpack.c.h.b16 %v3583
        %v3752 = vunpack.c.l.b16 %v3584
        %v3753 = vunpack.c.h.b16 %v3584
        %v3754 = vunpack.c.l.b16 %v3585
        %v3755 = vunpack.c.h.b16 %v3585
        %v3756 = vunpack.c.l.b16 %v3586
        %v3757 = vunpack.c.h.b16 %v3586
        %v3758 = vunpack.c.l.b16 %v3587
        %v3759 = vunpack.c.h.b16 %v3587
        %v3760 = vunpack.c.l.b16 %v3588
        %v3761 = vunpack.c.h.b16 %v3588
        %v3762 = vunpack.c.l.b16 %v3589
        %v3763 = vunpack.c.h.b16 %v3589
        %v3764 = vunpack.c.l.b16 %v3590
        %v3765 = vunpack.c.h.b16 %v3590
        %v3766 = vunpack.c.l.b16 %v3591
        %v3767 = vunpack.c.h.b16 %v3591
        %v3768 = vunpack.c.l.b16 %v3592
        %v3769 = vunpack.c.h.b16 %v3592
        %v3770 = vunpack.c.l.b16 %v3593
        %v3771 = vunpack.c.h.b16 %v3593
        %v3772 = vunpack.c.l.b16 %v3594
        %v3773 = vunpack.c.h.b16 %v3594
        %v3774 = vunpack.c.l.b16 %v3595
        %v3775 = vunpack.c.h.b16 %v3595
        %v3776 = vunpack.c.l.b16 %v3596
        %v3777 = vunpack.c.h.b16 %v3596
        %v3778 = vunpack.c.l.b16 %v3597
        %v3779 = vunpack.c.h.b16 %v3597
        %v3780 = vunpack.c.l.b16 %v3598
        %v3781 = vunpack.c.h.b16 %v3598
        %v3782 = vunpack.c.l.b16 %v3599
        %v3783 = vunpack.c.h.b16 %v3599
        %v3784 = vunpack.c.l.b16 %v3600
        %v3785 = vunpack.c.h.b16 %v3600
        %v3786 = vunpack.c.l.b16 %v3601
        %v3787 = vunpack.c.h.b16 %v3601
        %v3788 = vunpack.c.l.b16 %v3602
        %v3789 = vunpack.c.h.b16 %v3602
        %v3790 = vunpack.c.l.b16 %v3603
        %v3791 = vunpack.c.h.b16 %v3603
        %v3792 = vunpack.c.l.b16 %v3604
        %v3793 = vunpack.c.h.b16 %v3604
        %v3794 = vunpack.c.l.b16 %v3605
        %v3795 = vunpack.c.h.b16 %v3605
        %v3796 = vunpack.c.l.b16 %v3606
        %v3797 = vunpack.c.h.b16 %v3606
        %v3798 = vunpack.c.l.b16 %v3607
        %v3799 = vunpack.c.h.b16 %v3607
        %v3800 = vunpack.c.l.b16 %v3608
        %v3801 = vunpack.c.h.b16 %v3608
        %v3802 = vunpack.c.l.b16 %v3609
        %v3803 = vunpack.c.h.b16 %v3609
        %v3804 = vunpack.c.l.b16 %v3610
        %v3805 = vunpack.c.h.b16 %v3610
        %v3806 = vunpack.c.l.b16 %v3611
        %v3807 = vunpack.c.h.b16 %v3611
        %v3808 = vunpack.c.l.b16 %v3612
        %v3809 = vunpack.c.h.b16 %v3612
        %v3810 = vunpack.c.l.b16 %v3613
        %v3811 = vunpack.c.h.b16 %v3613
        %v3812 = vpack.c.b16 %v3686, %v3684
        %v3813 = vpack.c.b16 %v3687, %v3685
        %v3814 = vpack.c.b16 %v3690, %v3688
        %v3815 = vpack.c.b16 %v3691, %v3689
        %v3816 = vpack.c.b16 %v3694, %v3692
        %v3817 = vpack.c.b16 %v3695, %v3693
        %v3818 = vpack.c.b16 %v3698, %v3696
        %v3819 = vpack.c.b16 %v3699, %v3697
        %v3820 = vpack.c.b16 %v3702, %v3700
        %v3821 = vpack.c.b16 %v3703, %v3701
        %v3822 = vpack.c.b16 %v3706, %v3704
        %v3823 = vpack.c.b16 %v3707, %v3705
        %v3824 = vpack.c.b16 %v3710, %v3708
        %v3825 = vpack.c.b16 %v3711, %v3709
        %v3826 = vpack.c.b16 %v3714, %v3712
        %v3827 = vpack.c.b16 %v3715, %v3713
        %v3828 = vpack.c.b16 %v3718, %v3716
        %v3829 = vpack.c.b16 %v3719, %v3717
        %v3830 = vpack.c.b16 %v3722, %v3720
        %v3831 = vpack.c.b16 %v3723, %v3721
        %v3832 = vpack.c.b16 %v3726, %v3724
        %v3833 = vpack.c.b16 %v3727, %v3725
        %v3834 = vpack.c.b16 %v3730, %v3728
        %v3835 = vpack.c.b16 %v3731, %v3729
        %v3836 = vpack.c.b16 %v3734, %v3732
        %v3837 = vpack.c.b16 %v3735, %v3733
        %v3838 = vpack.c.b16 %v3738, %v3736
        %v3839 = vpack.c.b16 %v3739, %v3737
        %v3840 = vpack.c.b16 %v3742, %v3740
        %v3841 = vpack.c.b16 %v3743, %v3741
        %v3842 = vpack.c.b16 %v3746, %v3744
        %v3843 = vpack.c.b16 %v3747, %v3745
        %v3844 = vpack.c.b16 %v3750, %v3748
        %v3845 = vpack.c.b16 %v3751, %v3749
        %v3846 = vpack.c.b16 %v3754, %v3752
        %v3847 = vpack.c.b16 %v3755, %v3753
        %v3848 = vpack.c.b16 %v3758, %v3756
        %v3849 = vpack.c.b16 %v3759, %v3757
        %v3850 = vpack.c.b16 %v3762, %v3760
        %v3851 = vpack.c.b16 %v3763, %v3761
        %v3852 = vpack.c.b16 %v3766, %v3764
        %v3853 = vpack.c.b16 %v3767, %v3765
        %v3854 = vpack.c.b16 %v3770, %v3768
        %v3855 = vpack.c.b16 %v3771, %v3769
        %v3856 = vpack.c.b16 %v3774, %v3772
        %v3857 = vpack.c.b16 %v3775, %v3773
        %v3858 = vpack.c.b16 %v3778, %v3776
        %v3859 = vpack.c.b16 %v3779, %v3777
        %v3860 = vpack.c.b16 %v3782, %v3780
        %v3861 = vpack.c.b16 %v3783, %v3781
        %v3862 = vpack.c.b16 %v3786, %v3784
        %v3863 = vpack.c.b16 %v3787, %v3785
        %v3864 = vpack.c.b16 %v3790, %v3788
        %v3865 = vpack.c.b16 %v3791, %v3789
        %v3866 = vpack.c.b16 %v3794, %v3792
        %v3867 = vpack.c.b16 %v3795, %v3793
        %v3868 = vpack.c.b16 %v3798, %v3796
        %v3869 = vpack.c.b16 %v3799, %v3797
        %v3870 = vpack.c.b16 %v3802, %v3800
        %v3871 = vpack.c.b16 %v3803, %v3801
        %v3872 = vpack.c.b16 %v3806, %v3804
        %v3873 = vpack.c.b16 %v3807, %v3805
        %v3874 = vpack.c.b16 %v3810, %v3808
        %v3875 = vpack.c.b16 %v3811, %v3809
        %3940 = vmatpush.bf16.msra.mxu0 %v3826
        %3941 = vmatpush.bf16.msra.mxu0 %v3824
        %3942 = vmatpush.bf16.msra.mxu0 %v3822
        %3943 = vmatpush.bf16.msra.mxu0 %v3820
        %3944 = vmatpush.bf16.msra.mxu0 %v3818
        %3945 = vmatpush.bf16.msra.mxu0 %v3816
        %3946 = vmatpush.bf16.msra.mxu0 %v3814
        %3947 = vmatpush.bf16.msra.mxu0 %v3812
        %3948 = vmatmul.bf16.gmra.mxu0 %v3542
        %v3949 = vpop.f32.mrf.mxu0
        %v3950 = vadd.f32 %v3616, %v3949
        %v3951 = vpop.f32.mrf.mxu0
        %v3952 = vadd.f32 %v3616, %v3951
        %3953 = vmatmul.bf16.gmra.mxu0 %v3546
        %v3954 = vpop.f32.mrf.mxu0
        %v3955 = vadd.f32 %v3616, %v3954
        %v3956 = vpop.f32.mrf.mxu0
        %v3957 = vadd.f32 %v3616, %v3956
        %3958 = vdwg.mxu0
        %3959 = vmatpush.bf16.msra.mxu0 %v3842
        %3960 = vmatpush.bf16.msra.mxu0 %v3840
        %3961 = vmatpush.bf16.msra.mxu0 %v3838
        %3962 = vmatpush.bf16.msra.mxu0 %v3836
        %3963 = vmatpush.bf16.msra.mxu0 %v3834
        %3964 = vmatpush.bf16.msra.mxu0 %v3832
        %3965 = vmatpush.bf16.msra.mxu0 %v3830
        %3966 = vmatpush.bf16.msra.mxu0 %v3828
        %3967 = vmatmul.bf16.gmra.mxu0 %v3543
        %v3968 = vpop.f32.mrf.mxu0
        %v3969 = vadd.f32 %v3950, %v3968
        %v3970 = vpop.f32.mrf.mxu0
        %v3971 = vadd.f32 %v3952, %v3970
        %3972 = vmatmul.bf16.gmra.mxu0 %v3547
        %v3973 = vpop.f32.mrf.mxu0
        %v3974 = vadd.f32 %v3955, %v3973
        %v3975 = vpop.f32.mrf.mxu0
        %v3976 = vadd.f32 %v3957, %v3975
        %3977 = vdwg.mxu0
        %3978 = vmatpush.bf16.msra.mxu0 %v3858
        %3979 = vmatpush.bf16.msra.mxu0 %v3856
        %3980 = vmatpush.bf16.msra.mxu0 %v3854
        %3981 = vmatpush.bf16.msra.mxu0 %v3852
        %3982 = vmatpush.bf16.msra.mxu0 %v3850
        %3983 = vmatpush.bf16.msra.mxu0 %v3848
        %3984 = vmatpush.bf16.msra.mxu0 %v3846
        %3985 = vmatpush.bf16.msra.mxu0 %v3844
        %3986 = vmatmul.bf16.gmra.mxu0 %v3544
        %v3987 = vpop.f32.mrf.mxu0
        %v3988 = vadd.f32 %v3969, %v3987
        %v3989 = vpop.f32.mrf.mxu0
        %v3990 = vadd.f32 %v3971, %v3989
        %3991 = vmatmul.bf16.gmra.mxu0 %v3548
        %v3992 = vpop.f32.mrf.mxu0
        %v3993 = vadd.f32 %v3974, %v3992
        %v3994 = vpop.f32.mrf.mxu0
        %v3995 = vadd.f32 %v3976, %v3994
        %3996 = vdwg.mxu0
        %3997 = vmatpush.bf16.msra.mxu0 %v3874
        %3998 = vmatpush.bf16.msra.mxu0 %v3872
        %3999 = vmatpush.bf16.msra.mxu0 %v3870
        %4000 = vmatpush.bf16.msra.mxu0 %v3868
        %4001 = vmatpush.bf16.msra.mxu0 %v3866
        %4002 = vmatpush.bf16.msra.mxu0 %v3864
        %4003 = vmatpush.bf16.msra.mxu0 %v3862
        %4004 = vmatpush.bf16.msra.mxu0 %v3860
        %4005 = vmatmul.bf16.gmra.mxu0 %v3545
        %v4006 = vpop.f32.mrf.mxu0
        %v4007 = vadd.f32 %v3988, %v4006
        %v4008 = vpop.f32.mrf.mxu0
        %v4009 = vadd.f32 %v3990, %v4008
        %4010 = vmatmul.bf16.gmra.mxu0 %v3549
        %v4011 = vpop.f32.mrf.mxu0
        %v4012 = vadd.f32 %v3993, %v4011
        %v4013 = vpop.f32.mrf.mxu0
        %v4014 = vadd.f32 %v3995, %v4013
        %4015 = vdwg.mxu0
        %4016 = vmatpush.bf16.msra.mxu0 %v3827
        %4017 = vmatpush.bf16.msra.mxu0 %v3825
        %4018 = vmatpush.bf16.msra.mxu0 %v3823
        %4019 = vmatpush.bf16.msra.mxu0 %v3821
        %4020 = vmatpush.bf16.msra.mxu0 %v3819
        %4021 = vmatpush.bf16.msra.mxu0 %v3817
        %4022 = vmatpush.bf16.msra.mxu0 %v3815
        %4023 = vmatpush.bf16.msra.mxu0 %v3813
        %4024 = vmatmul.bf16.gmra.mxu0 %v3542
        %v4025 = vpop.f32.mrf.mxu0
        %v4026 = vadd.f32 %v3617, %v4025
        %v4027 = vpop.f32.mrf.mxu0
        %v4028 = vadd.f32 %v3617, %v4027
        %4029 = vmatmul.bf16.gmra.mxu0 %v3546
        %v4030 = vpop.f32.mrf.mxu0
        %v4031 = vadd.f32 %v3617, %v4030
        %v4032 = vpop.f32.mrf.mxu0
        %v4033 = vadd.f32 %v3617, %v4032
        %4034 = vdwg.mxu0
        %4035 = vmatpush.bf16.msra.mxu0 %v3843
        %4036 = vmatpush.bf16.msra.mxu0 %v3841
        %4037 = vmatpush.bf16.msra.mxu0 %v3839
        %4038 = vmatpush.bf16.msra.mxu0 %v3837
        %4039 = vmatpush.bf16.msra.mxu0 %v3835
        %4040 = vmatpush.bf16.msra.mxu0 %v3833
        %4041 = vmatpush.bf16.msra.mxu0 %v3831
        %4042 = vmatpush.bf16.msra.mxu0 %v3829
        %4043 = vmatmul.bf16.gmra.mxu0 %v3543
        %v4044 = vpop.f32.mrf.mxu0
        %v4045 = vadd.f32 %v4026, %v4044
        %v4046 = vpop.f32.mrf.mxu0
        %v4047 = vadd.f32 %v4028, %v4046
        %4048 = vmatmul.bf16.gmra.mxu0 %v3547
        %v4049 = vpop.f32.mrf.mxu0
        %v4050 = vadd.f32 %v4031, %v4049
        %v4051 = vpop.f32.mrf.mxu0
        %v4052 = vadd.f32 %v4033, %v4051
        %4053 = vdwg.mxu0
        %4054 = vmatpush.bf16.msra.mxu0 %v3859
        %4055 = vmatpush.bf16.msra.mxu0 %v3857
        %4056 = vmatpush.bf16.msra.mxu0 %v3855
        %4057 = vmatpush.bf16.msra.mxu0 %v3853
        %4058 = vmatpush.bf16.msra.mxu0 %v3851
        %4059 = vmatpush.bf16.msra.mxu0 %v3849
        %4060 = vmatpush.bf16.msra.mxu0 %v3847
        %4061 = vmatpush.bf16.msra.mxu0 %v3845
        %4062 = vmatmul.bf16.gmra.mxu0 %v3544
        %v4063 = vpop.f32.mrf.mxu0
        %v4064 = vadd.f32 %v4045, %v4063
        %v4065 = vpop.f32.mrf.mxu0
        %v4066 = vadd.f32 %v4047, %v4065
        %4067 = vmatmul.bf16.gmra.mxu0 %v3548
        %v4068 = vpop.f32.mrf.mxu0
        %v4069 = vadd.f32 %v4050, %v4068
        %v4070 = vpop.f32.mrf.mxu0
        %v4071 = vadd.f32 %v4052, %v4070
        %4072 = vdwg.mxu0
        %4073 = vmatpush.bf16.msra.mxu0 %v3875
        %4074 = vmatpush.bf16.msra.mxu0 %v3873
        %4075 = vmatpush.bf16.msra.mxu0 %v3871
        %4076 = vmatpush.bf16.msra.mxu0 %v3869
        %4077 = vmatpush.bf16.msra.mxu0 %v3867
        %4078 = vmatpush.bf16.msra.mxu0 %v3865
        %4079 = vmatpush.bf16.msra.mxu0 %v3863
        %4080 = vmatpush.bf16.msra.mxu0 %v3861
        %4081 = vmatmul.bf16.gmra.mxu0 %v3545
        %v4082 = vpop.f32.mrf.mxu0
        %v4083 = vadd.f32 %v4064, %v4082
        %v4084 = vpop.f32.mrf.mxu0
        %v4085 = vadd.f32 %v4066, %v4084
        %4086 = vmatmul.bf16.gmra.mxu0 %v3549
        %v4087 = vpop.f32.mrf.mxu0
        %v4088 = vadd.f32 %v4069, %v4087
        %v4089 = vpop.f32.mrf.mxu0
        %v4090 = vadd.f32 %v4071, %v4089
        %4091 = vdwg.mxu0
        %v4092 = vadd.f32 %v2840, %v4007
        %v4093 = vadd.f32 %v2841, %v4083
        %v4094 = vadd.f32 %v2842, %v4009
        %v4095 = vadd.f32 %v2843, %v4085
        %v4096 = vadd.f32 %v2844, %v4012
        %v4097 = vadd.f32 %v2845, %v4088
        %v4098 = vadd.f32 %v2846, %v4014
        %v4099 = vadd.f32 %v2847, %v4090
        %v4100 = vld [vmem:[%s966] sm:$0x3]
        %v4101 = vld [vmem:[%s976] sm:$0x3]
        %v4102 = vadd.f32 %v4092, %v4093
        %4103 = vadd.xlane.f32.xlu0 %v4102
        %v4104 = vpop.xlane.xlu0 %4103
        %v4105 = vadd.f32 %v4094, %v4095
        %4106 = vadd.xlane.f32.xlu0 %v4105
        %v4107 = vpop.xlane.xlu0 %4106
        %v4108 = vadd.f32 %v4096, %v4097
        %4109 = vadd.xlane.f32.xlu0 %v4108
        %v4110 = vpop.xlane.xlu0 %4109
        %v4111 = vadd.f32 %v4098, %v4099
        %4112 = vadd.xlane.f32.xlu0 %v4111
        %v4113 = vpop.xlane.xlu0 %4112
        %v4114 = vmul.f32 %v4104, %v2733
        %v4115 = vmul.f32 %v4107, %v2733
        %v4116 = vmul.f32 %v4110, %v2733
        %v4117 = vmul.f32 %v4113, %v2733
        %v4118 = vsub.f32 %v4092, %v4114
        %v4119 = vsub.f32 %v4093, %v4114
        %v4120 = vsub.f32 %v4094, %v4115
        %v4121 = vsub.f32 %v4095, %v4115
        %v4122 = vsub.f32 %v4096, %v4116
        %v4123 = vsub.f32 %v4097, %v4116
        %v4124 = vsub.f32 %v4098, %v4117
        %v4125 = vsub.f32 %v4099, %v4117
        %v4126 = vmul.f32 %v4118, %v4118
        %v4127 = vmul.f32 %v4119, %v4119
        %v4128 = vmul.f32 %v4120, %v4120
        %v4129 = vmul.f32 %v4121, %v4121
        %v4130 = vmul.f32 %v4122, %v4122
        %v4131 = vmul.f32 %v4123, %v4123
        %v4132 = vmul.f32 %v4124, %v4124
        %v4133 = vmul.f32 %v4125, %v4125
        %v4134 = vadd.f32 %v4126, %v4127
        %4135 = vadd.xlane.f32.xlu0 %v4134
        %v4136 = vpop.xlane.xlu0 %4135
        %v4137 = vadd.f32 %v4128, %v4129
        %4138 = vadd.xlane.f32.xlu0 %v4137
        %v4139 = vpop.xlane.xlu0 %4138
        %v4140 = vadd.f32 %v4130, %v4131
        %4141 = vadd.xlane.f32.xlu0 %v4140
        %v4142 = vpop.xlane.xlu0 %4141
        %v4143 = vadd.f32 %v4132, %v4133
        %4144 = vadd.xlane.f32.xlu0 %v4143
        %v4145 = vpop.xlane.xlu0 %4144
        %v4146 = vmul.f32 %v4136, %v2733
        %v4147 = vmul.f32 %v4139, %v2733
        %v4148 = vmul.f32 %v4142, %v2733
        %v4149 = vmul.f32 %v4145, %v2733
        %v4150 = vadd.f32 %v4146, 1e-12
        %v4151 = vadd.f32 %v4147, 1e-12
        %v4152 = vadd.f32 %v4148, 1e-12
        %v4153 = vadd.f32 %v4149, 1e-12
        %v4154 = vrsqrt.pop %v4150
        %v4155 = vmul.f32 %v4154, %v4150
        %v4156 = vmul.f32 %v4155, %v4154
        %v4157 = vmul.f32 0.5, %v4156
        %v4158 = vsub.f32 1.5, %v4157
        %v4159 = vmul.f32 %v4154, %v4158
        %vm4160 = vweird.f32 %v4150
        %vm4161 = vweird.f32 %v4154
        %vm4162 = vmor %vm4160, %vm4161
        %v4163 = vsel %vm4162, %v4154, %v4159
        %v4164 = vrsqrt.pop %v4151
        %v4165 = vmul.f32 %v4164, %v4151
        %v4166 = vmul.f32 %v4165, %v4164
        %v4167 = vmul.f32 0.5, %v4166
        %v4168 = vsub.f32 1.5, %v4167
        %v4169 = vmul.f32 %v4164, %v4168
        %vm4170 = vweird.f32 %v4151
        %vm4171 = vweird.f32 %v4164
        %vm4172 = vmor %vm4170, %vm4171
        %v4173 = vsel %vm4172, %v4164, %v4169
        %v4174 = vrsqrt.pop %v4152
        %v4175 = vmul.f32 %v4174, %v4152
        %v4176 = vmul.f32 %v4175, %v4174
        %v4177 = vmul.f32 0.5, %v4176
        %v4178 = vsub.f32 1.5, %v4177
        %v4179 = vmul.f32 %v4174, %v4178
        %vm4180 = vweird.f32 %v4152
        %vm4181 = vweird.f32 %v4174
        %vm4182 = vmor %vm4180, %vm4181
        %v4183 = vsel %vm4182, %v4174, %v4179
        %v4184 = vrsqrt.pop %v4153
        %v4185 = vmul.f32 %v4184, %v4153
        %v4186 = vmul.f32 %v4185, %v4184
        %v4187 = vmul.f32 0.5, %v4186
        %v4188 = vsub.f32 1.5, %v4187
        %v4189 = vmul.f32 %v4184, %v4188
        %vm4190 = vweird.f32 %v4153
        %vm4191 = vweird.f32 %v4184
        %vm4192 = vmor %vm4190, %vm4191
        %v4193 = vsel %vm4192, %v4184, %v4189
        %v4194 = vmul.f32 %v4118, %v4163
        %v4195 = vmul.f32 %v4119, %v4163
        %v4196 = vmul.f32 %v4120, %v4173
        %v4197 = vmul.f32 %v4121, %v4173
        %v4198 = vmul.f32 %v4122, %v4183
        %v4199 = vmul.f32 %v4123, %v4183
        %v4200 = vmul.f32 %v4124, %v4193
        %v4201 = vmul.f32 %v4125, %v4193
        %v4203 = vperm.slane %v4100, 0
        %v4204 = vperm.slane %v4100, 1
        %v4207 = vmul.f32 %v4194, %v4203
        %v4208 = vmul.f32 %v4195, %v4204
        %v4209 = vmul.f32 %v4196, %v4203
        %v4210 = vmul.f32 %v4197, %v4204
        %v4211 = vmul.f32 %v4198, %v4203
        %v4212 = vmul.f32 %v4199, %v4204
        %v4213 = vmul.f32 %v4200, %v4203
        %v4214 = vmul.f32 %v4201, %v4204
        %v4216 = vperm.slane %v4101, 0
        %v4217 = vperm.slane %v4101, 1
        %v4220 = vadd.f32 %v4207, %v4216
        %v4221 = vadd.f32 %v4208, %v4217
        %v4222 = vadd.f32 %v4209, %v4216
        %v4223 = vadd.f32 %v4210, %v4217
        %v4224 = vadd.f32 %v4211, %v4216
        %v4225 = vadd.f32 %v4212, %v4217
        %v4226 = vadd.f32 %v4213, %v4216
        %v4227 = vadd.f32 %v4214, %v4217
        %4228 = vst [vmem:[#allocation2] sm:$0xff] %v4220
        %4229 = vst [vmem:[#allocation2 + $0x8] sm:$0xff] %v4221
        %4230 = vst [vmem:[#allocation2 + $0x10] sm:$0xff] %v4222
        %4231 = vst [vmem:[#allocation2 + $0x18] sm:$0xff] %v4223
        %4232 = vst [vmem:[#allocation2 + $0x20] sm:$0xff] %v4224
        %4233 = vst [vmem:[#allocation2 + $0x28] sm:$0xff] %v4225
        %4234 = vst [vmem:[#allocation2 + $0x30] sm:$0xff] %v4226
        %4235 = vst [vmem:[#allocation2 + $0x38] sm:$0xff] %v4227
        %p4236 = scmp.eq.s32.totalorder %s41, 1
        // Predicated region
        $region153: #{multitask_bert_forward.1} parent=107 // pred_check
          %p4237 = pneg %p4236
        $region154: #{multitask_bert_forward.1} parent=107 // pred_check_branch
          %4239 = sbr.rel (%p4237) target = $region156
        $region155: #{multitask_bert_forward.1} parent=107 // pred_region
          %4240 = vst [vmem:[#allocation17] sm:$0xff] %v4220
          %4241 = vst [vmem:[#allocation17 + $0x8] sm:$0xff] %v4221
          %4242 = vst [vmem:[#allocation17 + $0x10] sm:$0xff] %v4222
          %4243 = vst [vmem:[#allocation17 + $0x18] sm:$0xff] %v4223
          %4244 = vst [vmem:[#allocation17 + $0x20] sm:$0xff] %v4224
          %4245 = vst [vmem:[#allocation17 + $0x28] sm:$0xff] %v4225
          %4246 = vst [vmem:[#allocation17 + $0x30] sm:$0xff] %v4226
          %4247 = vst [vmem:[#allocation17 + $0x38] sm:$0xff] %v4227
          %v4248 = vpack.c.bf16 %v4222, %v4220
          %v4249 = vpack.c.bf16 %v4223, %v4221
          %v4250 = vpack.c.bf16 %v4226, %v4224
          %v4251 = vpack.c.bf16 %v4227, %v4225
          %v4252 = vld [vmem:[#allocation8] sm:$0xff]
          %v4253 = vld [vmem:[#allocation8 + $0x8] sm:$0xff]
          %v4254 = vld [vmem:[#allocation8 + $0x10] sm:$0xff]
          %v4255 = vld [vmem:[#allocation8 + $0x18] sm:$0xff]
          %v4256 = vld [vmem:[#allocation8 + $0x20] sm:$0xff]
          %v4257 = vld [vmem:[#allocation8 + $0x28] sm:$0xff]
          %v4258 = vld [vmem:[#allocation8 + $0x30] sm:$0xff]
          %v4259 = vld [vmem:[#allocation8 + $0x38] sm:$0xff]
          %v4260 = vld [vmem:[#allocation8 + $0x40] sm:$0xff]
          %v4261 = vld [vmem:[#allocation8 + $0x48] sm:$0xff]
          %v4262 = vld [vmem:[#allocation8 + $0x50] sm:$0xff]
          %v4263 = vld [vmem:[#allocation8 + $0x58] sm:$0xff]
          %v4264 = vld [vmem:[#allocation8 + $0x60] sm:$0xff]
          %v4265 = vld [vmem:[#allocation8 + $0x68] sm:$0xff]
          %v4266 = vld [vmem:[#allocation8 + $0x70] sm:$0xff]
          %v4267 = vld [vmem:[#allocation8 + $0x78] sm:$0xff]
          %v4268 = vld [vmem:[#allocation8 + $0x80] sm:$0xff]
          %v4269 = vld [vmem:[#allocation8 + $0x88] sm:$0xff]
          %v4270 = vld [vmem:[#allocation8 + $0x90] sm:$0xff]
          %v4271 = vld [vmem:[#allocation8 + $0x98] sm:$0xff]
          %v4272 = vld [vmem:[#allocation8 + $0xa0] sm:$0xff]
          %v4273 = vld [vmem:[#allocation8 + $0xa8] sm:$0xff]
          %v4274 = vld [vmem:[#allocation8 + $0xb0] sm:$0xff]
          %v4275 = vld [vmem:[#allocation8 + $0xb8] sm:$0xff]
          %v4276 = vld [vmem:[#allocation8 + $0xc0] sm:$0xff]
          %v4277 = vld [vmem:[#allocation8 + $0xc8] sm:$0xff]
          %v4278 = vld [vmem:[#allocation8 + $0xd0] sm:$0xff]
          %v4279 = vld [vmem:[#allocation8 + $0xd8] sm:$0xff]
          %v4280 = vld [vmem:[#allocation8 + $0xe0] sm:$0xff]
          %v4281 = vld [vmem:[#allocation8 + $0xe8] sm:$0xff]
          %v4282 = vld [vmem:[#allocation8 + $0xf0] sm:$0xff]
          %v4283 = vld [vmem:[#allocation8 + $0xf8] sm:$0xff]
          %v4284 = vld [vmem:[#allocation9] sm:$0x3]
          %v4286 = vperm.slane %v4284, 0
          %v4287 = vperm.slane %v4284, 1
          %v4322 = vunpack.c.l.b16 %v4252
          %v4323 = vunpack.c.h.b16 %v4252
          %v4324 = vunpack.c.l.b16 %v4253
          %v4325 = vunpack.c.h.b16 %v4253
          %v4326 = vunpack.c.l.b16 %v4254
          %v4327 = vunpack.c.h.b16 %v4254
          %v4328 = vunpack.c.l.b16 %v4255
          %v4329 = vunpack.c.h.b16 %v4255
          %v4330 = vunpack.c.l.b16 %v4256
          %v4331 = vunpack.c.h.b16 %v4256
          %v4332 = vunpack.c.l.b16 %v4257
          %v4333 = vunpack.c.h.b16 %v4257
          %v4334 = vunpack.c.l.b16 %v4258
          %v4335 = vunpack.c.h.b16 %v4258
          %v4336 = vunpack.c.l.b16 %v4259
          %v4337 = vunpack.c.h.b16 %v4259
          %v4338 = vunpack.c.l.b16 %v4260
          %v4339 = vunpack.c.h.b16 %v4260
          %v4340 = vunpack.c.l.b16 %v4261
          %v4341 = vunpack.c.h.b16 %v4261
          %v4342 = vunpack.c.l.b16 %v4262
          %v4343 = vunpack.c.h.b16 %v4262
          %v4344 = vunpack.c.l.b16 %v4263
          %v4345 = vunpack.c.h.b16 %v4263
          %v4346 = vunpack.c.l.b16 %v4264
          %v4347 = vunpack.c.h.b16 %v4264
          %v4348 = vunpack.c.l.b16 %v4265
          %v4349 = vunpack.c.h.b16 %v4265
          %v4350 = vunpack.c.l.b16 %v4266
          %v4351 = vunpack.c.h.b16 %v4266
          %v4352 = vunpack.c.l.b16 %v4267
          %v4353 = vunpack.c.h.b16 %v4267
          %v4354 = vunpack.c.l.b16 %v4268
          %v4355 = vunpack.c.h.b16 %v4268
          %v4356 = vunpack.c.l.b16 %v4269
          %v4357 = vunpack.c.h.b16 %v4269
          %v4358 = vunpack.c.l.b16 %v4270
          %v4359 = vunpack.c.h.b16 %v4270
          %v4360 = vunpack.c.l.b16 %v4271
          %v4361 = vunpack.c.h.b16 %v4271
          %v4362 = vunpack.c.l.b16 %v4272
          %v4363 = vunpack.c.h.b16 %v4272
          %v4364 = vunpack.c.l.b16 %v4273
          %v4365 = vunpack.c.h.b16 %v4273
          %v4366 = vunpack.c.l.b16 %v4274
          %v4367 = vunpack.c.h.b16 %v4274
          %v4368 = vunpack.c.l.b16 %v4275
          %v4369 = vunpack.c.h.b16 %v4275
          %v4370 = vunpack.c.l.b16 %v4276
          %v4371 = vunpack.c.h.b16 %v4276
          %v4372 = vunpack.c.l.b16 %v4277
          %v4373 = vunpack.c.h.b16 %v4277
          %v4374 = vunpack.c.l.b16 %v4278
          %v4375 = vunpack.c.h.b16 %v4278
          %v4376 = vunpack.c.l.b16 %v4279
          %v4377 = vunpack.c.h.b16 %v4279
          %v4378 = vunpack.c.l.b16 %v4280
          %v4379 = vunpack.c.h.b16 %v4280
          %v4380 = vunpack.c.l.b16 %v4281
          %v4381 = vunpack.c.h.b16 %v4281
          %v4382 = vunpack.c.l.b16 %v4282
          %v4383 = vunpack.c.h.b16 %v4282
          %v4384 = vunpack.c.l.b16 %v4283
          %v4385 = vunpack.c.h.b16 %v4283
          %v4386 = vpack.c.b16 %v4324, %v4322
          %v4387 = vpack.c.b16 %v4325, %v4323
          %v4388 = vpack.c.b16 %v4328, %v4326
          %v4389 = vpack.c.b16 %v4329, %v4327
          %v4390 = vpack.c.b16 %v4332, %v4330
          %v4391 = vpack.c.b16 %v4333, %v4331
          %v4392 = vpack.c.b16 %v4336, %v4334
          %v4393 = vpack.c.b16 %v4337, %v4335
          %v4394 = vpack.c.b16 %v4340, %v4338
          %v4395 = vpack.c.b16 %v4341, %v4339
          %v4396 = vpack.c.b16 %v4344, %v4342
          %v4397 = vpack.c.b16 %v4345, %v4343
          %v4398 = vpack.c.b16 %v4348, %v4346
          %v4399 = vpack.c.b16 %v4349, %v4347
          %v4400 = vpack.c.b16 %v4352, %v4350
          %v4401 = vpack.c.b16 %v4353, %v4351
          %v4402 = vpack.c.b16 %v4356, %v4354
          %v4403 = vpack.c.b16 %v4357, %v4355
          %v4404 = vpack.c.b16 %v4360, %v4358
          %v4405 = vpack.c.b16 %v4361, %v4359
          %v4406 = vpack.c.b16 %v4364, %v4362
          %v4407 = vpack.c.b16 %v4365, %v4363
          %v4408 = vpack.c.b16 %v4368, %v4366
          %v4409 = vpack.c.b16 %v4369, %v4367
          %v4410 = vpack.c.b16 %v4372, %v4370
          %v4411 = vpack.c.b16 %v4373, %v4371
          %v4412 = vpack.c.b16 %v4376, %v4374
          %v4413 = vpack.c.b16 %v4377, %v4375
          %v4414 = vpack.c.b16 %v4380, %v4378
          %v4415 = vpack.c.b16 %v4381, %v4379
          %v4416 = vpack.c.b16 %v4384, %v4382
          %v4417 = vpack.c.b16 %v4385, %v4383
          %4450 = vmatpush.bf16.msra.mxu0 %v4400
          %4451 = vmatpush.bf16.msra.mxu0 %v4398
          %4452 = vmatpush.bf16.msra.mxu0 %v4396
          %4453 = vmatpush.bf16.msra.mxu0 %v4394
          %4454 = vmatpush.bf16.msra.mxu0 %v4392
          %4455 = vmatpush.bf16.msra.mxu0 %v4390
          %4456 = vmatpush.bf16.msra.mxu0 %v4388
          %4457 = vmatpush.bf16.msra.mxu0 %v4386
          %4458 = vmatmul.bf16.gmra.mxu0 %v4248
          %v4459 = vpop.f32.mrf.mxu0
          %v4460 = vadd.f32 %v4286, %v4459
          %v4461 = vpop.f32.mrf.mxu0
          %v4462 = vadd.f32 %v4286, %v4461
          %4463 = vmatmul.bf16.gmra.mxu0 %v4250
          %v4464 = vpop.f32.mrf.mxu0
          %v4465 = vadd.f32 %v4286, %v4464
          %v4466 = vpop.f32.mrf.mxu0
          %v4467 = vadd.f32 %v4286, %v4466
          %4468 = vdwg.mxu0
          %4469 = vmatpush.bf16.msra.mxu0 %v4416
          %4470 = vmatpush.bf16.msra.mxu0 %v4414
          %4471 = vmatpush.bf16.msra.mxu0 %v4412
          %4472 = vmatpush.bf16.msra.mxu0 %v4410
          %4473 = vmatpush.bf16.msra.mxu0 %v4408
          %4474 = vmatpush.bf16.msra.mxu0 %v4406
          %4475 = vmatpush.bf16.msra.mxu0 %v4404
          %4476 = vmatpush.bf16.msra.mxu0 %v4402
          %4477 = vmatmul.bf16.gmra.mxu0 %v4249
          %v4478 = vpop.f32.mrf.mxu0
          %v4479 = vadd.f32 %v4460, %v4478
          %v4480 = vpop.f32.mrf.mxu0
          %v4481 = vadd.f32 %v4462, %v4480
          %4482 = vmatmul.bf16.gmra.mxu0 %v4251
          %v4483 = vpop.f32.mrf.mxu0
          %v4484 = vadd.f32 %v4465, %v4483
          %v4485 = vpop.f32.mrf.mxu0
          %v4486 = vadd.f32 %v4467, %v4485
          %4487 = vdwg.mxu0
          %4488 = vmatpush.bf16.msra.mxu0 %v4401
          %4489 = vmatpush.bf16.msra.mxu0 %v4399
          %4490 = vmatpush.bf16.msra.mxu0 %v4397
          %4491 = vmatpush.bf16.msra.mxu0 %v4395
          %4492 = vmatpush.bf16.msra.mxu0 %v4393
          %4493 = vmatpush.bf16.msra.mxu0 %v4391
          %4494 = vmatpush.bf16.msra.mxu0 %v4389
          %4495 = vmatpush.bf16.msra.mxu0 %v4387
          %4496 = vmatmul.bf16.gmra.mxu0 %v4248
          %v4497 = vpop.f32.mrf.mxu0
          %v4498 = vadd.f32 %v4287, %v4497
          %v4499 = vpop.f32.mrf.mxu0
          %v4500 = vadd.f32 %v4287, %v4499
          %4501 = vmatmul.bf16.gmra.mxu0 %v4250
          %v4502 = vpop.f32.mrf.mxu0
          %v4503 = vadd.f32 %v4287, %v4502
          %v4504 = vpop.f32.mrf.mxu0
          %v4505 = vadd.f32 %v4287, %v4504
          %4506 = vdwg.mxu0
          %4507 = vmatpush.bf16.msra.mxu0 %v4417
          %4508 = vmatpush.bf16.msra.mxu0 %v4415
          %4509 = vmatpush.bf16.msra.mxu0 %v4413
          %4510 = vmatpush.bf16.msra.mxu0 %v4411
          %4511 = vmatpush.bf16.msra.mxu0 %v4409
          %4512 = vmatpush.bf16.msra.mxu0 %v4407
          %4513 = vmatpush.bf16.msra.mxu0 %v4405
          %4514 = vmatpush.bf16.msra.mxu0 %v4403
          %4515 = vmatmul.bf16.gmra.mxu0 %v4249
          %v4516 = vpop.f32.mrf.mxu0
          %v4517 = vadd.f32 %v4498, %v4516
          %v4518 = vpop.f32.mrf.mxu0
          %v4519 = vadd.f32 %v4500, %v4518
          %4520 = vmatmul.bf16.gmra.mxu0 %v4251
          %v4521 = vpop.f32.mrf.mxu0
          %v4522 = vadd.f32 %v4503, %v4521
          %v4523 = vpop.f32.mrf.mxu0
          %v4524 = vadd.f32 %v4505, %v4523
          %4525 = vdwg.mxu0
          %v4526 = vtanh.pop %v4479
          %v4527 = vtanh.pop %v4517
          %v4528 = vtanh.pop %v4481
          %v4529 = vtanh.pop %v4519
          %v4530 = vtanh.pop %v4484
          %v4531 = vtanh.pop %v4522
          %v4532 = vtanh.pop %v4486
          %v4533 = vtanh.pop %v4524
          %4534 = vst [vmem:[%s23] sm:$0xff] %v4526
          %4535 = vst [vmem:[%s23 + $0x8] sm:$0xff] %v4527
          %4536 = vst [vmem:[%s23 + $0x10] sm:$0xff] %v4528
          %4537 = vst [vmem:[%s23 + $0x18] sm:$0xff] %v4529
          %4538 = vst [vmem:[%s23 + $0x20] sm:$0xff] %v4530
          %4539 = vst [vmem:[%s23 + $0x28] sm:$0xff] %v4531
          %4540 = vst [vmem:[%s23 + $0x30] sm:$0xff] %v4532
          %4541 = vst [vmem:[%s23 + $0x38] sm:$0xff] %v4533
          %v4542 = vpack.c.bf16 %v4528, %v4526
          %v4543 = vpack.c.bf16 %v4529, %v4527
          %v4544 = vpack.c.bf16 %v4532, %v4530
          %v4545 = vpack.c.bf16 %v4533, %v4531
          %v4546 = vld [vmem:[%s8] sm:$0xf]
          %v4547 = vld [vmem:[%s8 + $0x4] sm:$0xf]
          %v4548 = vld [vmem:[%s8 + $0x8] sm:$0xf]
          %v4549 = vld [vmem:[%s8 + $0xc] sm:$0xf]
          %v4550 = vld [vmem:[%s8 + $0x10] sm:$0xf]
          %v4551 = vld [vmem:[%s8 + $0x14] sm:$0xf]
          %v4552 = vld [vmem:[%s8 + $0x18] sm:$0xf]
          %v4553 = vld [vmem:[%s8 + $0x1c] sm:$0xf]
          %v4554 = vld [vmem:[%s8 + $0x20] sm:$0xf]
          %v4555 = vld [vmem:[%s8 + $0x24] sm:$0xf]
          %v4556 = vld [vmem:[%s8 + $0x28] sm:$0xf]
          %v4557 = vld [vmem:[%s8 + $0x2c] sm:$0xf]
          %v4558 = vld [vmem:[%s8 + $0x30] sm:$0xf]
          %v4559 = vld [vmem:[%s8 + $0x34] sm:$0xf]
          %v4560 = vld [vmem:[%s8 + $0x38] sm:$0xf]
          %v4561 = vld [vmem:[%s8 + $0x3c] sm:$0xf]
          %v4562 = vld [vmem:[%s8 + $0x40] sm:$0xf]
          %v4563 = vld [vmem:[%s8 + $0x44] sm:$0xf]
          %v4564 = vld [vmem:[%s8 + $0x48] sm:$0xf]
          %v4565 = vld [vmem:[%s8 + $0x4c] sm:$0xf]
          %v4566 = vld [vmem:[%s8 + $0x50] sm:$0xf]
          %v4567 = vld [vmem:[%s8 + $0x54] sm:$0xf]
          %v4568 = vld [vmem:[%s8 + $0x58] sm:$0xf]
          %v4569 = vld [vmem:[%s8 + $0x5c] sm:$0xf]
          %v4570 = vld [vmem:[%s8 + $0x60] sm:$0xf]
          %v4571 = vld [vmem:[%s8 + $0x64] sm:$0xf]
          %v4572 = vld [vmem:[%s8 + $0x68] sm:$0xf]
          %v4573 = vld [vmem:[%s8 + $0x6c] sm:$0xf]
          %v4574 = vld [vmem:[%s8 + $0x70] sm:$0xf]
          %v4575 = vld [vmem:[%s8 + $0x74] sm:$0xf]
          %v4576 = vld [vmem:[%s8 + $0x78] sm:$0xf]
          %v4577 = vld [vmem:[%s8 + $0x7c] sm:$0xf]
          %v4578 = vld [vmem:[%s9] sm:$0x1]
          %v4580 = vperm.slane %v4578, 0
          %v4614 = vunpack.c.l.b16 %v4546
          %v4615 = vunpack.c.l.b16 %v4547
          %v4616 = vunpack.c.l.b16 %v4548
          %v4617 = vunpack.c.l.b16 %v4549
          %v4618 = vunpack.c.l.b16 %v4550
          %v4619 = vunpack.c.l.b16 %v4551
          %v4620 = vunpack.c.l.b16 %v4552
          %v4621 = vunpack.c.l.b16 %v4553
          %v4622 = vunpack.c.l.b16 %v4554
          %v4623 = vunpack.c.l.b16 %v4555
          %v4624 = vunpack.c.l.b16 %v4556
          %v4625 = vunpack.c.l.b16 %v4557
          %v4626 = vunpack.c.l.b16 %v4558
          %v4627 = vunpack.c.l.b16 %v4559
          %v4628 = vunpack.c.l.b16 %v4560
          %v4629 = vunpack.c.l.b16 %v4561
          %v4630 = vunpack.c.l.b16 %v4562
          %v4631 = vunpack.c.l.b16 %v4563
          %v4632 = vunpack.c.l.b16 %v4564
          %v4633 = vunpack.c.l.b16 %v4565
          %v4634 = vunpack.c.l.b16 %v4566
          %v4635 = vunpack.c.l.b16 %v4567
          %v4636 = vunpack.c.l.b16 %v4568
          %v4637 = vunpack.c.l.b16 %v4569
          %v4638 = vunpack.c.l.b16 %v4570
          %v4639 = vunpack.c.l.b16 %v4571
          %v4640 = vunpack.c.l.b16 %v4572
          %v4641 = vunpack.c.l.b16 %v4573
          %v4642 = vunpack.c.l.b16 %v4574
          %v4643 = vunpack.c.l.b16 %v4575
          %v4644 = vunpack.c.l.b16 %v4576
          %v4645 = vunpack.c.l.b16 %v4577
          %v4646 = vpack.c.b16 %v4615, %v4614
          %v4647 = vpack.c.b16 %v4617, %v4616
          %v4648 = vpack.c.b16 %v4619, %v4618
          %v4649 = vpack.c.b16 %v4621, %v4620
          %v4650 = vpack.c.b16 %v4623, %v4622
          %v4651 = vpack.c.b16 %v4625, %v4624
          %v4652 = vpack.c.b16 %v4627, %v4626
          %v4653 = vpack.c.b16 %v4629, %v4628
          %v4654 = vpack.c.b16 %v4631, %v4630
          %v4655 = vpack.c.b16 %v4633, %v4632
          %v4656 = vpack.c.b16 %v4635, %v4634
          %v4657 = vpack.c.b16 %v4637, %v4636
          %v4658 = vpack.c.b16 %v4639, %v4638
          %v4659 = vpack.c.b16 %v4641, %v4640
          %v4660 = vpack.c.b16 %v4643, %v4642
          %v4661 = vpack.c.b16 %v4645, %v4644
          %4678 = vmatpush.bf16.msra.mxu0 %v4653
          %4679 = vmatpush.bf16.msra.mxu0 %v4652
          %4680 = vmatpush.bf16.msra.mxu0 %v4651
          %4681 = vmatpush.bf16.msra.mxu0 %v4650
          %4682 = vmatpush.bf16.msra.mxu0 %v4649
          %4683 = vmatpush.bf16.msra.mxu0 %v4648
          %4684 = vmatpush.bf16.msra.mxu0 %v4647
          %4685 = vmatpush.bf16.msra.mxu0 %v4646
          %4686 = vmatmul.bf16.gmra.mxu0 %v4542
          %v4687 = vpop.f32.mrf.mxu0
          %v4688 = vadd.f32 %v4580, %v4687
          %v4689 = vpop.f32.mrf.mxu0
          %v4690 = vadd.f32 %v4580, %v4689
          %4691 = vmatmul.bf16.gmra.mxu0 %v4544
          %v4692 = vpop.f32.mrf.mxu0
          %v4693 = vadd.f32 %v4580, %v4692
          %v4694 = vpop.f32.mrf.mxu0
          %v4695 = vadd.f32 %v4580, %v4694
          %4696 = vdwg.mxu0
          %4697 = vmatpush.bf16.msra.mxu0 %v4661
          %4698 = vmatpush.bf16.msra.mxu0 %v4660
          %4699 = vmatpush.bf16.msra.mxu0 %v4659
          %4700 = vmatpush.bf16.msra.mxu0 %v4658
          %4701 = vmatpush.bf16.msra.mxu0 %v4657
          %4702 = vmatpush.bf16.msra.mxu0 %v4656
          %4703 = vmatpush.bf16.msra.mxu0 %v4655
          %4704 = vmatpush.bf16.msra.mxu0 %v4654
          %4705 = vmatmul.bf16.gmra.mxu0 %v4543
          %v4706 = vpop.f32.mrf.mxu0
          %v4707 = vadd.f32 %v4688, %v4706
          %v4708 = vpop.f32.mrf.mxu0
          %v4709 = vadd.f32 %v4690, %v4708
          %4710 = vmatmul.bf16.gmra.mxu0 %v4545
          %v4711 = vpop.f32.mrf.mxu0
          %v4712 = vadd.f32 %v4693, %v4711
          %v4713 = vpop.f32.mrf.mxu0
          %v4714 = vadd.f32 %v4695, %v4713
          %4715 = vdwg.mxu0
          %4716 = vst [vmem:[%s24] sm:$0xff] %v4707
          %4717 = vst [vmem:[%s24 + $0x8] sm:$0xff] %v4709
          %4718 = vst [vmem:[%s24 + $0x10] sm:$0xff] %v4712
          %4719 = vst [vmem:[%s24 + $0x18] sm:$0xff] %v4714
          %v4720 = vlaneseq
          %v4721 = vand.u32 %v4720, 127
          %vm4722 = vcmp.lt.s32.totalorder %v4721, 5
          %v4723 = vsel %vm4722, %v4707, -1e+30
          %v4724 = vsel %vm4722, %v4709, -1e+30
          %v4725 = vsel %vm4722, %v4712, -1e+30
          %v4726 = vsel %vm4722, %v4714, -1e+30
          %4727 = vmax.xlane.f32.xlu0 %v4723
          %v4728 = vpop.xlane.xlu0 %4727
          %4729 = vmax.xlane.f32.xlu0 %v4724
          %v4730 = vpop.xlane.xlu0 %4729
          %4731 = vmax.xlane.f32.xlu0 %v4725
          %v4732 = vpop.xlane.xlu0 %4731
          %4733 = vmax.xlane.f32.xlu0 %v4726
          %v4734 = vpop.xlane.xlu0 %4733
          %v4735 = vsub.f32 %v4723, %v4728
          %v4736 = vsub.f32 %v4724, %v4730
          %v4737 = vsub.f32 %v4725, %v4732
          %v4738 = vsub.f32 %v4726, %v4734
          %v4739 = vmul.f32 %v4735, 1.442695
          %v4740 = vpow.pop %v4739
          %v4741 = vmul.f32 %v4736, 1.442695
          %v4742 = vpow.pop %v4741
          %v4743 = vmul.f32 %v4737, 1.442695
          %v4744 = vpow.pop %v4743
          %v4745 = vmul.f32 %v4738, 1.442695
          %v4746 = vpow.pop %v4745
          %4747 = vadd.xlane.f32.xlu0 %v4740
          %v4748 = vpop.xlane.xlu0 %4747
          %4749 = vadd.xlane.f32.xlu0 %v4742
          %v4750 = vpop.xlane.xlu0 %4749
          %4751 = vadd.xlane.f32.xlu0 %v4744
          %v4752 = vpop.xlane.xlu0 %4751
          %4753 = vadd.xlane.f32.xlu0 %v4746
          %v4754 = vpop.xlane.xlu0 %4753
          %v4755 = vrcp.pop %v4748
          %v4756 = vrcp.pop %v4750
          %v4757 = vrcp.pop %v4752
          %v4758 = vrcp.pop %v4754
          %v4759 = vmul.f32 %v4740, %v4755
          %v4760 = vmul.f32 %v4742, %v4756
          %v4761 = vmul.f32 %v4744, %v4757
          %v4762 = vmul.f32 %v4746, %v4758
          %4763 = vst [vmem:[%s25] sm:$0xff] %v4759
          %4764 = vst [vmem:[%s25 + $0x8] sm:$0xff] %v4760
          %4765 = vst [vmem:[%s25 + $0x10] sm:$0xff] %v4761
          %4766 = vst [vmem:[%s25 + $0x18] sm:$0xff] %v4762
        $region156: #{multitask_bert_forward.1} parent=107 // pred_fallthru
          _
        // Predicated region
        $region157: #{multitask_bert_forward.1} parent=107 // pred_check
          %p4767 = pneg %p576
        $region158: #{multitask_bert_forward.1} parent=107 // pred_check_branch
          %4769 = sbr.rel (%p4767) target = $region160
        $region159: #{multitask_bert_forward.1} parent=107 // pred_region
          %4771 = vsyncadd [#allocation5], 0
          %s4772 = sshll.u32 [#allocation17], 4
          %s4773 = int_to_ptr.vmem [resolvable:$true] %s4772
          %s4774 = sshll.u32 %s22, 4
          %s4775 = int_to_ptr.hbm [resolvable:$true] %s4774
          %4780 = dma.vmem_to_hbm [thread:$0]  %s4773, 1024, %s4775, [#allocation5], 256, 256, 16
        $region160: #{multitask_bert_forward.1} parent=107 // pred_fallthru
          _
        // Predicated region
        $region161: #{multitask_bert_forward.1} parent=107 // pred_check
          %p4781 = pneg %p597
        $region162: #{multitask_bert_forward.1} parent=107 // pred_check_branch
          %4783 = sbr.rel (%p4781) target = $region164
        $region163: #{multitask_bert_forward.1} parent=107 // pred_region
          _
        $region164: #{multitask_bert_forward.1} parent=107 // pred_fallthru
          _
        // Predicated region
        $region165: #{multitask_bert_forward.1} parent=107 // pred_check
          %p4784 = pneg %p618
        $region166: #{multitask_bert_forward.1} parent=107 // pred_check_branch
          %4786 = sbr.rel (%p4784) target = $region168
        $region167: #{multitask_bert_forward.1} parent=107 // pred_region
          _
        $region168: #{multitask_bert_forward.1} parent=107 // pred_fallthru
          _
        // Predicated region
        $region169: #{multitask_bert_forward.1} parent=107 // pred_check
          %p4787 = pneg %p639
        $region170: #{multitask_bert_forward.1} parent=107 // pred_check_branch
          %4789 = sbr.rel (%p4787) target = $region172
        $region171: #{multitask_bert_forward.1} parent=107 // pred_region
          _
        $region172: #{multitask_bert_forward.1} parent=107 // pred_fallthru
          _
        // Predicated region
        $region173: #{multitask_bert_forward.1} parent=107 // pred_check
          %p4790 = pneg %p576
        $region174: #{multitask_bert_forward.1} parent=107 // pred_check_branch
          %4792 = sbr.rel (%p4790) target = $region176
        $region175: #{multitask_bert_forward.1} parent=107 // pred_region
          %4794 = dma.done [#allocation5], 1024
        $region176: #{multitask_bert_forward.1} parent=107 // pred_fallthru
          _
        // Predicated region
        $region177: #{multitask_bert_forward.1} parent=107 // pred_check
          %p4795 = pneg %p597
        $region178: #{multitask_bert_forward.1} parent=107 // pred_check_branch
          %4797 = sbr.rel (%p4795) target = $region180
        $region179: #{multitask_bert_forward.1} parent=107 // pred_region
          _
        $region180: #{multitask_bert_forward.1} parent=107 // pred_fallthru
          _
        // Predicated region
        $region181: #{multitask_bert_forward.1} parent=107 // pred_check
          %p4798 = pneg %p618
        $region182: #{multitask_bert_forward.1} parent=107 // pred_check_branch
          %4800 = sbr.rel (%p4798) target = $region184
        $region183: #{multitask_bert_forward.1} parent=107 // pred_region
          _
        $region184: #{multitask_bert_forward.1} parent=107 // pred_fallthru
          _
        // Predicated region
        $region185: #{multitask_bert_forward.1} parent=107 // pred_check
          %p4801 = pneg %p639
        $region186: #{multitask_bert_forward.1} parent=107 // pred_check_branch
          %4803 = sbr.rel (%p4801) target = $region188
        $region187: #{multitask_bert_forward.1} parent=107 // pred_region
          _
        $region188: #{multitask_bert_forward.1} parent=107 // pred_fallthru
          _
      $region108: #{multitask_bert_forward.1} parent=5 // pred_fallthru
        _
      %p4804 = scmp.le.s32.totalorder 2, %s36
      // Predicated region
      $region189: #{multitask_bert_forward.1} parent=5 // pred_check
        %p4805 = pneg %p4804
      $region190: #{multitask_bert_forward.1} parent=5 // pred_check_branch
        %4807 = sbr.rel (%p4805) target = $region192
      $region191: #{multitask_bert_forward.1} parent=5 // pred_region
        %s4808 = ssub.s32 %s36, 2
      $region192: #{multitask_bert_forward.1} parent=5 // pred_fallthru
        _
    $region6: #{multitask_bert_forward.1} parent=1 // loop_footer
      %s40 = sadd.s32 1, %s36
    $region7: #{multitask_bert_forward.1} parent=1 // loop_footer_branch
      %35 = sbr.rel target = $region3
    $region8: #{multitask_bert_forward.1} parent=1 // loop_exit
      _
    %4809 = vsyncpa [#allocation4], 1
    %s4810 = scalar_lea.sflag [#allocation4], 1
    %4811 = vsyncpa %s4810, 1
    %4812 = vsyncpa [#allocation7], 1
    %4813 = vsyncpa [#allocation10], 1
    %4814 = vsyncpa [#allocation5], 1
    %s4815 = scalar_lea.sflag [#allocation5], 1
    %4816 = vsyncpa %s4815, 1

</llo_original>
